<compile_context>
chip_gen: v6e
topology: v6e:2x2x1
jax: 0.10.0
libtpu: 0.0.40
codegen_flags: <defaults>
</compile_context>

<pallas_src>
import numpy as np
import jax
import jax.numpy as jnp
from jax import lax
from jax.experimental import pallas as pl
from jax.experimental.pallas import tpu as pltpu

_EPS = 1e-5
_TB = 8   # images per grid step (sublane tile). Raise to 32+ for large batches
          # (layout is lane-dense, so VMEM scales linearly and stays tiny).


# ---------------------------------------------------------------------------
# Per-layer geometry: (Cin, Cout, Wi_buf, Wo, Nout, out_lane(wo)).
#   Wi_buf : stored (possibly padded) input width, lanes = w_in*Cin + ci
#   Nout   : lane width of the layer's matmul output
#   out_lane(wo): starting lane of output column wo (channels contiguous)
# conv1 output carries a 1-column zero ring (for conv2's padding=1); conv2 and
# conv4 outputs use an even|odd column split (odd block starts at lane 128) so
# the following 2x2 maxpool is just max(rows) then max(lane halves).
# ---------------------------------------------------------------------------
def _l1(wo): return (wo + 1) * 4
def _l2(wo): return (wo % 2) * 128 + (wo // 2) * 8
def _l3(wo): return wo * 12
def _l4(wo): return (wo % 2) * 128 + (wo // 2) * 12
def _l5(wo): return wo * 16
def _l6(wo): return 0

_LAYERS = [
    (1,  4,  30, 28, 120, _l1),
    (4,  8,  30, 28, 240, _l2),
    (8,  12, 14, 12, 144, _l3),
    (12, 12, 12, 10, 188, _l4),
    (12, 16, 5,  3,  48,  _l5),
    (16, 16, 3,  1,  16,  _l6),
]
_PADS = [1, 1, 0, 0, 0, 0]


# ---------------------------------------------------------------------------
# The fused network kernel (one grid step == _TB images).
# ---------------------------------------------------------------------------
def _net_kernel(x_ref,
                wb1, pv1, wb2, pv2, wb3, pv3, wb4, pv4, wb5, pv5, wb6, pv6,
                w7, b7, out_ref):

    def conv(src, wb, pv, ho):
        """3x3 conv as 3 banded matmuls (+bias, ReLU, BN shift per lane)."""
        m = ho * _TB
        acc = jnp.dot(src[0:m, :], wb[0], preferred_element_type=jnp.float32)
        acc = acc + jnp.dot(src[_TB:_TB + m, :], wb[1],
                            preferred_element_type=jnp.float32)
        acc = acc + jnp.dot(src[2 * _TB:2 * _TB + m, :], wb[2],
                            preferred_element_type=jnp.float32)
        return jnp.maximum(acc + pv[0:1, :], 0.0) + pv[1:2, :]

    def pool(y, half):
        """2x2 maxpool: max over row pairs, then max of even|odd lane blocks."""
        n = y.shape[0] // (2 * _TB)
        rows = [jnp.maximum(y[(2 * i) * _TB:(2 * i + 1) * _TB, :],
                            y[(2 * i + 1) * _TB:(2 * i + 2) * _TB, :])
                for i in range(n)]
        v = jnp.concatenate(rows, axis=0)
        return jnp.maximum(v[:, :half], v[:, 128:128 + half])

    x = x_ref[...]                                     # (30*_TB, 30)  padded
    y1 = conv(x, wb1, pv1, 28)                         # (28*_TB, 120) ring cols
    zrow = jnp.zeros((_TB, 120), jnp.float32)
    x1 = jnp.concatenate([zrow, y1, zrow], axis=0)     # (30*_TB, 120) padded
    y2 = conv(x1, wb2, pv2, 28)                        # (28*_TB, 240) even|odd
    q1 = pool(y2, 112)                                 # (14*_TB, 112)
    y3 = conv(q1, wb3, pv3, 12)                        # (12*_TB, 144)
    y4 = conv(y3, wb4, pv4, 10)                        # (10*_TB, 188) even|odd
    q2 = pool(y4, 60)                                  # (5*_TB, 60)
    y5 = conv(q2, wb5, pv5, 3)                         # (3*_TB, 48)
    y6 = conv(y5, wb6, pv6, 1)                         # (_TB, 16)

    # Head: conv7 (1x1 on 1x1 spatial == dense) + log_softmax, fused.
    logits = jnp.dot(y6, w7[...], preferred_element_type=jnp.float32) + b7[...]
    z = logits - jnp.max(logits, axis=-1, keepdims=True)
    lse = jnp.log(jnp.sum(jnp.exp(z), axis=-1, keepdims=True))
    out_ref[...] = (z - lse).astype(out_ref.dtype)


# ---------------------------------------------------------------------------
# Forward wrapper: one tiny XLA prep op, then a single pallas_call.
# ---------------------------------------------------------------------------
def _forward(x_nchw, prep):
    B = x_nchw.shape[0]
    T = pl.cdiv(B, _TB)
    Bp = T * _TB

    # NCHW -> zero-pad batch to Bp and spatial by 1 ring (conv1 padding=1)
    # -> rows (tile, h, image-in-tile), lanes = w  (lane-dense input DMA).
    xs = x_nchw[:, 0, :, :].astype(jnp.float32)                 # (B, 28, 28)
    xs = jnp.pad(xs, ((0, Bp - B), (1, 1), (1, 1)))             # (Bp, 30, 30)
    xs = xs.reshape(T, _TB, 30, 30).transpose(0, 2, 1, 3)       # (T,30,_TB,30)
    xprep = xs.reshape(T * 30 * _TB, 30)

    def full_spec(a):
        return pl.BlockSpec(a.shape, lambda i, _n=a.ndim: (0,) * _n)

    out = pl.pallas_call(
        _net_kernel,
        out_shape=jax.ShapeDtypeStruct((Bp, 10), jnp.float32),
        grid=(T,),
        in_specs=[pl.BlockSpec((30 * _TB, 30), lambda i: (i, 0))]
                 + [full_spec(a) for a in prep],
        out_specs=pl.BlockSpec((_TB, 10), lambda i: (i, 0)),
        compiler_params=pltpu.CompilerParams(
            dimension_semantics=("parallel",),
            # Actual padded VMEM use: banded weights ~1.2 MB (x2 buffers),
            # largest live activation value ~0.25 MB -> ~4-6 MB total.
            # 32 MB is a safe ceiling that still leaves headroom on v7x (64 MB).
            vmem_limit_bytes=32 * 1024 * 1024,
        ),
    )(xprep, *prep)
    return out[:B]


forward = jax.jit(_forward)


# ---------------------------------------------------------------------------
# Deterministic parameters (shapes follow Model2.__init__).
# ---------------------------------------------------------------------------
_CONV_SPECS = [(3, 1, 4), (3, 4, 8), (3, 8, 12), (3, 12, 12), (3, 12, 16),
               (3, 16, 16)]


def init_params(key):
    convs = []
    keys = jax.random.split(key, len(_CONV_SPECS) + 1)
    for k_rng, (k, cin, cout) in zip(keys[:-1], _CONV_SPECS):
        fan_in = k * k * cin
        w = jax.random.normal(k_rng, (k, k, cin, cout), jnp.float32)
        w = w * (0.5 * (2.0 / fan_in) ** 0.5)
        b = 0.01 * jnp.arange(cout, dtype=jnp.float32)
        gamma = 1.0 + 0.05 * jnp.arange(cout, dtype=jnp.float32) / cout
        beta = 0.02 * jnp.arange(cout, dtype=jnp.float32)
        mean = 0.01 * jnp.arange(cout, dtype=jnp.float32)
        var = 1.0 + 0.1 * jnp.arange(cout, dtype=jnp.float32) / cout
        convs.append((w, b, gamma, beta, mean, var))
    w7 = jax.random.normal(keys[-1], (16, 10), jnp.float32) * (2.0 / 16.0) ** 0.5
    b7 = 0.01 * jnp.arange(10, dtype=jnp.float32)
    return convs, (w7, b7)


def prepare_params(raw):
    """Fold eval-mode BN into the conv weights/bias and pack each conv as
    three banded (per-kernel-row) matmul weights matching the kernel's
    lane-dense (h, img) x (w, channel) layout."""
    convs, (w7, b7) = raw
    prep = []
    for (w, b, gamma, beta, mean, var), (cin, cout, wi, wo_n, nout, lane) in \
            zip(convs, _LAYERS):
        s = np.asarray(gamma) / np.sqrt(np.asarray(var) + _EPS)
        assert np.all(s > 0.0), "BN fold through ReLU requires positive scale"
        wf = np.asarray(w, np.float32) * s              # (3,3,cin,cout) scaled
        band = np.zeros((3, wi * cin, nout), np.float32)
        bvec = np.zeros((nout,), np.float32)
        tvec = np.zeros((nout,), np.float32)
        bs = np.asarray(b, np.float32) * s              # folded conv bias
        ts = np.asarray(beta, np.float32) - np.asarray(mean, np.float32) * s
        for wo in range(wo_n):
            nb = lane(wo)
            bvec[nb:nb + cout] = bs
            tvec[nb:nb + cout] = ts
            for kh in range(3):
                for kw in range(3):
                    kb = (wo + kw) * cin
                    band[kh, kb:kb + cin, nb:nb + cout] += wf[kh, kw]
        prep.append(jnp.asarray(band))
        prep.append(jnp.asarray(np.stack([bvec, tvec], 0)))
    prep.append(jnp.asarray(w7, dtype=jnp.float32))
    prep.append(jnp.asarray(np.asarray(b7, np.float32).reshape(1, 10)))
    return tuple(prep)


# ---------------------------------------------------------------------------
# Pure-JAX reference (independent path) for a correctness cross-check.
# ---------------------------------------------------------------------------
def _reference(x_nchw, raw):
    convs, (w7, b7) = raw
    y = jnp.transpose(x_nchw, (0, 2, 3, 1)).astype(jnp.float32)
    for idx, ((w, b, gamma, beta, mean, var), pad) in enumerate(zip(convs, _PADS)):
        y = lax.conv_general_dilated(
            y, w, window_strides=(1, 1), padding=[(pad, pad), (pad, pad)],
            dimension_numbers=("NHWC", "HWIO", "NHWC"),
            precision=lax.Precision.HIGHEST)
        y = jnp.maximum(y + b, 0.0)
        s = gamma / jnp.sqrt(var + _EPS)
        y = y * s + (beta - mean * s)
        if idx in (1, 3):  # pool1 after conv2, pool2 after conv4
            y = jnp.maximum(
                jnp.maximum(y[:, 0::2, 0::2, :], y[:, 0::2, 1::2, :]),
                jnp.maximum(y[:, 1::2, 0::2, :], y[:, 1::2, 1::2, :]))
    feat = y.reshape(y.shape[0], 16)
    logits = jnp.dot(feat, w7, precision=lax.Precision.HIGHEST) + b7
    return jax.nn.log_softmax(logits, axis=-1)


# ---------------------------------------------------------------------------
if __name__ == "__main__":
    root = jax.random.PRNGKey(0)
    k_x, k_p = jax.random.split(root)
    # Input must be 28x28 so the net collapses to 1x1 spatial before view().
    x = jax.random.normal(k_x, (2, 1, 28, 28), jnp.float32)

    raw = init_params(k_p)
    prep = prepare_params(raw)

    out = jax.block_until_ready(forward(x, prep))

    assert out.shape == (2, 10), out.shape
    row_sums = jnp.exp(out).sum(axis=1)
    assert bool(jnp.all(jnp.abs(row_sums - 1.0) < 1e-4)), row_sums
    assert bool(jnp.all(jnp.isfinite(out)))

    # Cross-check against an independent XLA implementation (tolerance covers
    # MXU f32 matmul pass differences vs. HIGHEST-precision reference).
    ref = _reference(x, raw)
    err = float(jnp.max(jnp.abs(out - ref)))
    assert err < 3e-2, f"mismatch vs reference: max abs err = {err}"

    print("KERNEL_OK")
</pallas_src>

<mosaic_0001>
module attributes {stable_mosaic.version = 11 : i64} {
  func.func @_net_kernel(%arg0: i32, %arg1: memref<240x30xf32, #tpu.memory_space<vmem>>, %arg2: memref<3x30x120xf32, #tpu.memory_space<vmem>>, %arg3: memref<2x120xf32, #tpu.memory_space<vmem>>, %arg4: memref<3x120x240xf32, #tpu.memory_space<vmem>>, %arg5: memref<2x240xf32, #tpu.memory_space<vmem>>, %arg6: memref<3x112x144xf32, #tpu.memory_space<vmem>>, %arg7: memref<2x144xf32, #tpu.memory_space<vmem>>, %arg8: memref<3x144x188xf32, #tpu.memory_space<vmem>>, %arg9: memref<2x188xf32, #tpu.memory_space<vmem>>, %arg10: memref<3x60x48xf32, #tpu.memory_space<vmem>>, %arg11: memref<2x48xf32, #tpu.memory_space<vmem>>, %arg12: memref<3x48x16xf32, #tpu.memory_space<vmem>>, %arg13: memref<2x16xf32, #tpu.memory_space<vmem>>, %arg14: memref<16x10xf32, #tpu.memory_space<vmem>>, %arg15: memref<1x10xf32, #tpu.memory_space<vmem>>, %arg16: memref<8x10xf32, #tpu.memory_space<vmem>>) attributes {dimension_semantics = [#tpu.dimension_semantics<parallel>], iteration_bounds = array<i64: 1>, scalar_prefetch = 0 : i64, scratch_operands = 0 : i64, tpu.core_type = #tpu.core_type<tc>, window_params = [{transform_indices = @transform_0, window_bounds = array<i64: 240, 30>}, {pipeline_mode = #tpu.pipeline_mode<synchronous>, transform_indices = @transform_1, window_bounds = array<i64: 3, 30, 120>}, {pipeline_mode = #tpu.pipeline_mode<synchronous>, transform_indices = @transform_2, window_bounds = array<i64: 2, 120>}, {pipeline_mode = #tpu.pipeline_mode<synchronous>, transform_indices = @transform_3, window_bounds = array<i64: 3, 120, 240>}, {pipeline_mode = #tpu.pipeline_mode<synchronous>, transform_indices = @transform_4, window_bounds = array<i64: 2, 240>}, {pipeline_mode = #tpu.pipeline_mode<synchronous>, transform_indices = @transform_5, window_bounds = array<i64: 3, 112, 144>}, {pipeline_mode = #tpu.pipeline_mode<synchronous>, transform_indices = @transform_6, window_bounds = array<i64: 2, 144>}, {pipeline_mode = #tpu.pipeline_mode<synchronous>, transform_indices = @transform_7, window_bounds = array<i64: 3, 144, 188>}, {pipeline_mode = #tpu.pipeline_mode<synchronous>, transform_indices = @transform_8, window_bounds = array<i64: 2, 188>}, {pipeline_mode = #tpu.pipeline_mode<synchronous>, transform_indices = @transform_9, window_bounds = array<i64: 3, 60, 48>}, {pipeline_mode = #tpu.pipeline_mode<synchronous>, transform_indices = @transform_10, window_bounds = array<i64: 2, 48>}, {pipeline_mode = #tpu.pipeline_mode<synchronous>, transform_indices = @transform_11, window_bounds = array<i64: 3, 48, 16>}, {pipeline_mode = #tpu.pipeline_mode<synchronous>, transform_indices = @transform_12, window_bounds = array<i64: 2, 16>}, {pipeline_mode = #tpu.pipeline_mode<synchronous>, transform_indices = @transform_13, window_bounds = array<i64: 16, 10>}, {pipeline_mode = #tpu.pipeline_mode<synchronous>, transform_indices = @transform_14, window_bounds = array<i64: 1, 10>}, {transform_indices = @transform_15, window_bounds = array<i64: 8, 10>}]} {
    %c0 = arith.constant 0 : index
    %c0_0 = arith.constant 0 : index
    %0 = vector.load %arg1[%c0, %c0_0] : memref<240x30xf32, #tpu.memory_space<vmem>>, vector<240x30xf32>
    %1 = vector.extract_strided_slice %0 {offsets = [0, 0], sizes = [224, 30], strides = [1, 1]} : vector<240x30xf32> to vector<224x30xf32>
    %c0_1 = arith.constant 0 : index
    %c0_2 = arith.constant 0 : index
    %c0_3 = arith.constant 0 : index
    %2 = vector.load %arg2[%c0_1, %c0_2, %c0_3] : memref<3x30x120xf32, #tpu.memory_space<vmem>>, vector<1x30x120xf32>
    %3 = vector.shape_cast %2 : vector<1x30x120xf32> to vector<30x120xf32>
    %cst = arith.constant dense<0.000000e+00> : vector<224x120xf32>
    %4 = tpu.matmul %1, %3, %cst {dimension_numbers = #tpu.dot_dimension_numbers<[1], [0], [0], [1], [0, 0, 1, 1], [], []>} : vector<224x30xf32>, vector<30x120xf32>, vector<224x120xf32> -> vector<224x120xf32>
    %5 = vector.extract_strided_slice %0 {offsets = [8, 0], sizes = [224, 30], strides = [1, 1]} : vector<240x30xf32> to vector<224x30xf32>
    %c1 = arith.constant 1 : index
    %c0_4 = arith.constant 0 : index
    %c0_5 = arith.constant 0 : index
    %6 = vector.load %arg2[%c1, %c0_4, %c0_5] : memref<3x30x120xf32, #tpu.memory_space<vmem>>, vector<1x30x120xf32>
    %7 = vector.shape_cast %6 : vector<1x30x120xf32> to vector<30x120xf32>
    %cst_6 = arith.constant dense<0.000000e+00> : vector<224x120xf32>
    %8 = tpu.matmul %5, %7, %cst_6 {dimension_numbers = #tpu.dot_dimension_numbers<[1], [0], [0], [1], [0, 0, 1, 1], [], []>} : vector<224x30xf32>, vector<30x120xf32>, vector<224x120xf32> -> vector<224x120xf32>
    %9 = arith.addf %4, %8 : vector<224x120xf32>
    %10 = vector.extract_strided_slice %0 {offsets = [16, 0], sizes = [224, 30], strides = [1, 1]} : vector<240x30xf32> to vector<224x30xf32>
    %c2 = arith.constant 2 : index
    %c0_7 = arith.constant 0 : index
    %c0_8 = arith.constant 0 : index
    %11 = vector.load %arg2[%c2, %c0_7, %c0_8] : memref<3x30x120xf32, #tpu.memory_space<vmem>>, vector<1x30x120xf32>
    %12 = vector.shape_cast %11 : vector<1x30x120xf32> to vector<30x120xf32>
    %cst_9 = arith.constant dense<0.000000e+00> : vector<224x120xf32>
    %13 = tpu.matmul %10, %12, %cst_9 {dimension_numbers = #tpu.dot_dimension_numbers<[1], [0], [0], [1], [0, 0, 1, 1], [], []>} : vector<224x30xf32>, vector<30x120xf32>, vector<224x120xf32> -> vector<224x120xf32>
    %14 = arith.addf %9, %13 : vector<224x120xf32>
    %c0_10 = arith.constant 0 : index
    %c0_11 = arith.constant 0 : index
    %15 = vector.load %arg3[%c0_10, %c0_11] : memref<2x120xf32, #tpu.memory_space<vmem>>, vector<1x120xf32>
    %16 = vector.broadcast %15 : vector<1x120xf32> to vector<224x120xf32>
    %17 = arith.addf %14, %16 : vector<224x120xf32>
    %cst_12 = arith.constant 0.000000e+00 : f32
    %18 = vector.broadcast %cst_12 : f32 to vector<224x120xf32>
    %19 = arith.maximumf %17, %18 : vector<224x120xf32>
    %c1_13 = arith.constant 1 : index
    %c0_14 = arith.constant 0 : index
    %20 = vector.load %arg3[%c1_13, %c0_14] : memref<2x120xf32, #tpu.memory_space<vmem>>, vector<1x120xf32>
    %21 = vector.broadcast %20 : vector<1x120xf32> to vector<224x120xf32>
    %22 = arith.addf %19, %21 : vector<224x120xf32>
    %cst_15 = arith.constant 0.000000e+00 : f32
    %23 = vector.broadcast %cst_15 : f32 to vector<8x120xf32>
    %24 = tpu.concatenate %23, %22, %23 in 0 : vector<8x120xf32>, vector<224x120xf32>, vector<8x120xf32> -> vector<240x120xf32>
    %25 = vector.extract_strided_slice %24 {offsets = [0, 0], sizes = [224, 120], strides = [1, 1]} : vector<240x120xf32> to vector<224x120xf32>
    %c0_16 = arith.constant 0 : index
    %c0_17 = arith.constant 0 : index
    %c0_18 = arith.constant 0 : index
    %26 = vector.load %arg4[%c0_16, %c0_17, %c0_18] : memref<3x120x240xf32, #tpu.memory_space<vmem>>, vector<1x120x240xf32>
    %27 = vector.shape_cast %26 : vector<1x120x240xf32> to vector<120x240xf32>
    %cst_19 = arith.constant dense<0.000000e+00> : vector<224x240xf32>
    %28 = tpu.matmul %25, %27, %cst_19 {dimension_numbers = #tpu.dot_dimension_numbers<[1], [0], [0], [1], [0, 0, 1, 1], [], []>} : vector<224x120xf32>, vector<120x240xf32>, vector<224x240xf32> -> vector<224x240xf32>
    %29 = vector.extract_strided_slice %24 {offsets = [8, 0], sizes = [224, 120], strides = [1, 1]} : vector<240x120xf32> to vector<224x120xf32>
    %c1_20 = arith.constant 1 : index
    %c0_21 = arith.constant 0 : index
    %c0_22 = arith.constant 0 : index
    %30 = vector.load %arg4[%c1_20, %c0_21, %c0_22] : memref<3x120x240xf32, #tpu.memory_space<vmem>>, vector<1x120x240xf32>
    %31 = vector.shape_cast %30 : vector<1x120x240xf32> to vector<120x240xf32>
    %cst_23 = arith.constant dense<0.000000e+00> : vector<224x240xf32>
    %32 = tpu.matmul %29, %31, %cst_23 {dimension_numbers = #tpu.dot_dimension_numbers<[1], [0], [0], [1], [0, 0, 1, 1], [], []>} : vector<224x120xf32>, vector<120x240xf32>, vector<224x240xf32> -> vector<224x240xf32>
    %33 = arith.addf %28, %32 : vector<224x240xf32>
    %34 = vector.extract_strided_slice %24 {offsets = [16, 0], sizes = [224, 120], strides = [1, 1]} : vector<240x120xf32> to vector<224x120xf32>
    %c2_24 = arith.constant 2 : index
    %c0_25 = arith.constant 0 : index
    %c0_26 = arith.constant 0 : index
    %35 = vector.load %arg4[%c2_24, %c0_25, %c0_26] : memref<3x120x240xf32, #tpu.memory_space<vmem>>, vector<1x120x240xf32>
    %36 = vector.shape_cast %35 : vector<1x120x240xf32> to vector<120x240xf32>
    %cst_27 = arith.constant dense<0.000000e+00> : vector<224x240xf32>
    %37 = tpu.matmul %34, %36, %cst_27 {dimension_numbers = #tpu.dot_dimension_numbers<[1], [0], [0], [1], [0, 0, 1, 1], [], []>} : vector<224x120xf32>, vector<120x240xf32>, vector<224x240xf32> -> vector<224x240xf32>
    %38 = arith.addf %33, %37 : vector<224x240xf32>
    %c0_28 = arith.constant 0 : index
    %c0_29 = arith.constant 0 : index
    %39 = vector.load %arg5[%c0_28, %c0_29] : memref<2x240xf32, #tpu.memory_space<vmem>>, vector<1x240xf32>
    %40 = vector.broadcast %39 : vector<1x240xf32> to vector<224x240xf32>
    %41 = arith.addf %38, %40 : vector<224x240xf32>
    %cst_30 = arith.constant 0.000000e+00 : f32
    %42 = vector.broadcast %cst_30 : f32 to vector<224x240xf32>
    %43 = arith.maximumf %41, %42 : vector<224x240xf32>
    %c1_31 = arith.constant 1 : index
    %c0_32 = arith.constant 0 : index
    %44 = vector.load %arg5[%c1_31, %c0_32] : memref<2x240xf32, #tpu.memory_space<vmem>>, vector<1x240xf32>
    %45 = vector.broadcast %44 : vector<1x240xf32> to vector<224x240xf32>
    %46 = arith.addf %43, %45 : vector<224x240xf32>
    %47 = vector.extract_strided_slice %46 {offsets = [0, 0], sizes = [8, 240], strides = [1, 1]} : vector<224x240xf32> to vector<8x240xf32>
    %48 = vector.extract_strided_slice %46 {offsets = [8, 0], sizes = [8, 240], strides = [1, 1]} : vector<224x240xf32> to vector<8x240xf32>
    %49 = arith.maximumf %47, %48 : vector<8x240xf32>
    %50 = vector.extract_strided_slice %46 {offsets = [16, 0], sizes = [8, 240], strides = [1, 1]} : vector<224x240xf32> to vector<8x240xf32>
    %51 = vector.extract_strided_slice %46 {offsets = [24, 0], sizes = [8, 240], strides = [1, 1]} : vector<224x240xf32> to vector<8x240xf32>
    %52 = arith.maximumf %50, %51 : vector<8x240xf32>
    %53 = vector.extract_strided_slice %46 {offsets = [32, 0], sizes = [8, 240], strides = [1, 1]} : vector<224x240xf32> to vector<8x240xf32>
    %54 = vector.extract_strided_slice %46 {offsets = [40, 0], sizes = [8, 240], strides = [1, 1]} : vector<224x240xf32> to vector<8x240xf32>
    %55 = arith.maximumf %53, %54 : vector<8x240xf32>
    %56 = vector.extract_strided_slice %46 {offsets = [48, 0], sizes = [8, 240], strides = [1, 1]} : vector<224x240xf32> to vector<8x240xf32>
    %57 = vector.extract_strided_slice %46 {offsets = [56, 0], sizes = [8, 240], strides = [1, 1]} : vector<224x240xf32> to vector<8x240xf32>
    %58 = arith.maximumf %56, %57 : vector<8x240xf32>
    %59 = vector.extract_strided_slice %46 {offsets = [64, 0], sizes = [8, 240], strides = [1, 1]} : vector<224x240xf32> to vector<8x240xf32>
    %60 = vector.extract_strided_slice %46 {offsets = [72, 0], sizes = [8, 240], strides = [1, 1]} : vector<224x240xf32> to vector<8x240xf32>
    %61 = arith.maximumf %59, %60 : vector<8x240xf32>
    %62 = vector.extract_strided_slice %46 {offsets = [80, 0], sizes = [8, 240], strides = [1, 1]} : vector<224x240xf32> to vector<8x240xf32>
    %63 = vector.extract_strided_slice %46 {offsets = [88, 0], sizes = [8, 240], strides = [1, 1]} : vector<224x240xf32> to vector<8x240xf32>
    %64 = arith.maximumf %62, %63 : vector<8x240xf32>
    %65 = vector.extract_strided_slice %46 {offsets = [96, 0], sizes = [8, 240], strides = [1, 1]} : vector<224x240xf32> to vector<8x240xf32>
    %66 = vector.extract_strided_slice %46 {offsets = [104, 0], sizes = [8, 240], strides = [1, 1]} : vector<224x240xf32> to vector<8x240xf32>
    %67 = arith.maximumf %65, %66 : vector<8x240xf32>
    %68 = vector.extract_strided_slice %46 {offsets = [112, 0], sizes = [8, 240], strides = [1, 1]} : vector<224x240xf32> to vector<8x240xf32>
    %69 = vector.extract_strided_slice %46 {offsets = [120, 0], sizes = [8, 240], strides = [1, 1]} : vector<224x240xf32> to vector<8x240xf32>
    %70 = arith.maximumf %68, %69 : vector<8x240xf32>
    %71 = vector.extract_strided_slice %46 {offsets = [128, 0], sizes = [8, 240], strides = [1, 1]} : vector<224x240xf32> to vector<8x240xf32>
    %72 = vector.extract_strided_slice %46 {offsets = [136, 0], sizes = [8, 240], strides = [1, 1]} : vector<224x240xf32> to vector<8x240xf32>
    %73 = arith.maximumf %71, %72 : vector<8x240xf32>
    %74 = vector.extract_strided_slice %46 {offsets = [144, 0], sizes = [8, 240], strides = [1, 1]} : vector<224x240xf32> to vector<8x240xf32>
    %75 = vector.extract_strided_slice %46 {offsets = [152, 0], sizes = [8, 240], strides = [1, 1]} : vector<224x240xf32> to vector<8x240xf32>
    %76 = arith.maximumf %74, %75 : vector<8x240xf32>
    %77 = vector.extract_strided_slice %46 {offsets = [160, 0], sizes = [8, 240], strides = [1, 1]} : vector<224x240xf32> to vector<8x240xf32>
    %78 = vector.extract_strided_slice %46 {offsets = [168, 0], sizes = [8, 240], strides = [1, 1]} : vector<224x240xf32> to vector<8x240xf32>
    %79 = arith.maximumf %77, %78 : vector<8x240xf32>
    %80 = vector.extract_strided_slice %46 {offsets = [176, 0], sizes = [8, 240], strides = [1, 1]} : vector<224x240xf32> to vector<8x240xf32>
    %81 = vector.extract_strided_slice %46 {offsets = [184, 0], sizes = [8, 240], strides = [1, 1]} : vector<224x240xf32> to vector<8x240xf32>
    %82 = arith.maximumf %80, %81 : vector<8x240xf32>
    %83 = vector.extract_strided_slice %46 {offsets = [192, 0], sizes = [8, 240], strides = [1, 1]} : vector<224x240xf32> to vector<8x240xf32>
    %84 = vector.extract_strided_slice %46 {offsets = [200, 0], sizes = [8, 240], strides = [1, 1]} : vector<224x240xf32> to vector<8x240xf32>
    %85 = arith.maximumf %83, %84 : vector<8x240xf32>
    %86 = vector.extract_strided_slice %46 {offsets = [208, 0], sizes = [8, 240], strides = [1, 1]} : vector<224x240xf32> to vector<8x240xf32>
    %87 = vector.extract_strided_slice %46 {offsets = [216, 0], sizes = [8, 240], strides = [1, 1]} : vector<224x240xf32> to vector<8x240xf32>
    %88 = arith.maximumf %86, %87 : vector<8x240xf32>
    %89 = tpu.concatenate %49, %52, %55, %58, %61, %64, %67, %70, %73, %76, %79, %82, %85, %88 in 0 : vector<8x240xf32>, vector<8x240xf32>, vector<8x240xf32>, vector<8x240xf32>, vector<8x240xf32>, vector<8x240xf32>, vector<8x240xf32>, vector<8x240xf32>, vector<8x240xf32>, vector<8x240xf32>, vector<8x240xf32>, vector<8x240xf32>, vector<8x240xf32>, vector<8x240xf32> -> vector<112x240xf32>
    %90 = vector.extract_strided_slice %89 {offsets = [0, 0], sizes = [112, 112], strides = [1, 1]} : vector<112x240xf32> to vector<112x112xf32>
    %91 = vector.extract_strided_slice %89 {offsets = [0, 128], sizes = [112, 112], strides = [1, 1]} : vector<112x240xf32> to vector<112x112xf32>
    %92 = arith.maximumf %90, %91 : vector<112x112xf32>
    %93 = vector.extract_strided_slice %92 {offsets = [0, 0], sizes = [96, 112], strides = [1, 1]} : vector<112x112xf32> to vector<96x112xf32>
    %c0_33 = arith.constant 0 : index
    %c0_34 = arith.constant 0 : index
    %c0_35 = arith.constant 0 : index
    %94 = vector.load %arg6[%c0_33, %c0_34, %c0_35] : memref<3x112x144xf32, #tpu.memory_space<vmem>>, vector<1x112x144xf32>
    %95 = vector.shape_cast %94 : vector<1x112x144xf32> to vector<112x144xf32>
    %cst_36 = arith.constant dense<0.000000e+00> : vector<96x144xf32>
    %96 = tpu.matmul %93, %95, %cst_36 {dimension_numbers = #tpu.dot_dimension_numbers<[1], [0], [0], [1], [0, 0, 1, 1], [], []>} : vector<96x112xf32>, vector<112x144xf32>, vector<96x144xf32> -> vector<96x144xf32>
    %97 = vector.extract_strided_slice %92 {offsets = [8, 0], sizes = [96, 112], strides = [1, 1]} : vector<112x112xf32> to vector<96x112xf32>
    %c1_37 = arith.constant 1 : index
    %c0_38 = arith.constant 0 : index
    %c0_39 = arith.constant 0 : index
    %98 = vector.load %arg6[%c1_37, %c0_38, %c0_39] : memref<3x112x144xf32, #tpu.memory_space<vmem>>, vector<1x112x144xf32>
    %99 = vector.shape_cast %98 : vector<1x112x144xf32> to vector<112x144xf32>
    %cst_40 = arith.constant dense<0.000000e+00> : vector<96x144xf32>
    %100 = tpu.matmul %97, %99, %cst_40 {dimension_numbers = #tpu.dot_dimension_numbers<[1], [0], [0], [1], [0, 0, 1, 1], [], []>} : vector<96x112xf32>, vector<112x144xf32>, vector<96x144xf32> -> vector<96x144xf32>
    %101 = arith.addf %96, %100 : vector<96x144xf32>
    %102 = vector.extract_strided_slice %92 {offsets = [16, 0], sizes = [96, 112], strides = [1, 1]} : vector<112x112xf32> to vector<96x112xf32>
    %c2_41 = arith.constant 2 : index
    %c0_42 = arith.constant 0 : index
    %c0_43 = arith.constant 0 : index
    %103 = vector.load %arg6[%c2_41, %c0_42, %c0_43] : memref<3x112x144xf32, #tpu.memory_space<vmem>>, vector<1x112x144xf32>
    %104 = vector.shape_cast %103 : vector<1x112x144xf32> to vector<112x144xf32>
    %cst_44 = arith.constant dense<0.000000e+00> : vector<96x144xf32>
    %105 = tpu.matmul %102, %104, %cst_44 {dimension_numbers = #tpu.dot_dimension_numbers<[1], [0], [0], [1], [0, 0, 1, 1], [], []>} : vector<96x112xf32>, vector<112x144xf32>, vector<96x144xf32> -> vector<96x144xf32>
    %106 = arith.addf %101, %105 : vector<96x144xf32>
    %c0_45 = arith.constant 0 : index
    %c0_46 = arith.constant 0 : index
    %107 = vector.load %arg7[%c0_45, %c0_46] : memref<2x144xf32, #tpu.memory_space<vmem>>, vector<1x144xf32>
    %108 = vector.broadcast %107 : vector<1x144xf32> to vector<96x144xf32>
    %109 = arith.addf %106, %108 : vector<96x144xf32>
    %cst_47 = arith.constant 0.000000e+00 : f32
    %110 = vector.broadcast %cst_47 : f32 to vector<96x144xf32>
    %111 = arith.maximumf %109, %110 : vector<96x144xf32>
    %c1_48 = arith.constant 1 : index
    %c0_49 = arith.constant 0 : index
    %112 = vector.load %arg7[%c1_48, %c0_49] : memref<2x144xf32, #tpu.memory_space<vmem>>, vector<1x144xf32>
    %113 = vector.broadcast %112 : vector<1x144xf32> to vector<96x144xf32>
    %114 = arith.addf %111, %113 : vector<96x144xf32>
    %115 = vector.extract_strided_slice %114 {offsets = [0, 0], sizes = [80, 144], strides = [1, 1]} : vector<96x144xf32> to vector<80x144xf32>
    %c0_50 = arith.constant 0 : index
    %c0_51 = arith.constant 0 : index
    %c0_52 = arith.constant 0 : index
    %116 = vector.load %arg8[%c0_50, %c0_51, %c0_52] : memref<3x144x188xf32, #tpu.memory_space<vmem>>, vector<1x144x188xf32>
    %117 = vector.shape_cast %116 : vector<1x144x188xf32> to vector<144x188xf32>
    %cst_53 = arith.constant dense<0.000000e+00> : vector<80x188xf32>
    %118 = tpu.matmul %115, %117, %cst_53 {dimension_numbers = #tpu.dot_dimension_numbers<[1], [0], [0], [1], [0, 0, 1, 1], [], []>} : vector<80x144xf32>, vector<144x188xf32>, vector<80x188xf32> -> vector<80x188xf32>
    %119 = vector.extract_strided_slice %114 {offsets = [8, 0], sizes = [80, 144], strides = [1, 1]} : vector<96x144xf32> to vector<80x144xf32>
    %c1_54 = arith.constant 1 : index
    %c0_55 = arith.constant 0 : index
    %c0_56 = arith.constant 0 : index
    %120 = vector.load %arg8[%c1_54, %c0_55, %c0_56] : memref<3x144x188xf32, #tpu.memory_space<vmem>>, vector<1x144x188xf32>
    %121 = vector.shape_cast %120 : vector<1x144x188xf32> to vector<144x188xf32>
    %cst_57 = arith.constant dense<0.000000e+00> : vector<80x188xf32>
    %122 = tpu.matmul %119, %121, %cst_57 {dimension_numbers = #tpu.dot_dimension_numbers<[1], [0], [0], [1], [0, 0, 1, 1], [], []>} : vector<80x144xf32>, vector<144x188xf32>, vector<80x188xf32> -> vector<80x188xf32>
    %123 = arith.addf %118, %122 : vector<80x188xf32>
    %124 = vector.extract_strided_slice %114 {offsets = [16, 0], sizes = [80, 144], strides = [1, 1]} : vector<96x144xf32> to vector<80x144xf32>
    %c2_58 = arith.constant 2 : index
    %c0_59 = arith.constant 0 : index
    %c0_60 = arith.constant 0 : index
    %125 = vector.load %arg8[%c2_58, %c0_59, %c0_60] : memref<3x144x188xf32, #tpu.memory_space<vmem>>, vector<1x144x188xf32>
    %126 = vector.shape_cast %125 : vector<1x144x188xf32> to vector<144x188xf32>
    %cst_61 = arith.constant dense<0.000000e+00> : vector<80x188xf32>
    %127 = tpu.matmul %124, %126, %cst_61 {dimension_numbers = #tpu.dot_dimension_numbers<[1], [0], [0], [1], [0, 0, 1, 1], [], []>} : vector<80x144xf32>, vector<144x188xf32>, vector<80x188xf32> -> vector<80x188xf32>
    %128 = arith.addf %123, %127 : vector<80x188xf32>
    %c0_62 = arith.constant 0 : index
    %c0_63 = arith.constant 0 : index
    %129 = vector.load %arg9[%c0_62, %c0_63] : memref<2x188xf32, #tpu.memory_space<vmem>>, vector<1x188xf32>
    %130 = vector.broadcast %129 : vector<1x188xf32> to vector<80x188xf32>
    %131 = arith.addf %128, %130 : vector<80x188xf32>
    %cst_64 = arith.constant 0.000000e+00 : f32
    %132 = vector.broadcast %cst_64 : f32 to vector<80x188xf32>
    %133 = arith.maximumf %131, %132 : vector<80x188xf32>
    %c1_65 = arith.constant 1 : index
    %c0_66 = arith.constant 0 : index
    %134 = vector.load %arg9[%c1_65, %c0_66] : memref<2x188xf32, #tpu.memory_space<vmem>>, vector<1x188xf32>
    %135 = vector.broadcast %134 : vector<1x188xf32> to vector<80x188xf32>
    %136 = arith.addf %133, %135 : vector<80x188xf32>
    %137 = vector.extract_strided_slice %136 {offsets = [0, 0], sizes = [8, 188], strides = [1, 1]} : vector<80x188xf32> to vector<8x188xf32>
    %138 = vector.extract_strided_slice %136 {offsets = [8, 0], sizes = [8, 188], strides = [1, 1]} : vector<80x188xf32> to vector<8x188xf32>
    %139 = arith.maximumf %137, %138 : vector<8x188xf32>
    %140 = vector.extract_strided_slice %136 {offsets = [16, 0], sizes = [8, 188], strides = [1, 1]} : vector<80x188xf32> to vector<8x188xf32>
    %141 = vector.extract_strided_slice %136 {offsets = [24, 0], sizes = [8, 188], strides = [1, 1]} : vector<80x188xf32> to vector<8x188xf32>
    %142 = arith.maximumf %140, %141 : vector<8x188xf32>
    %143 = vector.extract_strided_slice %136 {offsets = [32, 0], sizes = [8, 188], strides = [1, 1]} : vector<80x188xf32> to vector<8x188xf32>
    %144 = vector.extract_strided_slice %136 {offsets = [40, 0], sizes = [8, 188], strides = [1, 1]} : vector<80x188xf32> to vector<8x188xf32>
    %145 = arith.maximumf %143, %144 : vector<8x188xf32>
    %146 = vector.extract_strided_slice %136 {offsets = [48, 0], sizes = [8, 188], strides = [1, 1]} : vector<80x188xf32> to vector<8x188xf32>
    %147 = vector.extract_strided_slice %136 {offsets = [56, 0], sizes = [8, 188], strides = [1, 1]} : vector<80x188xf32> to vector<8x188xf32>
    %148 = arith.maximumf %146, %147 : vector<8x188xf32>
    %149 = vector.extract_strided_slice %136 {offsets = [64, 0], sizes = [8, 188], strides = [1, 1]} : vector<80x188xf32> to vector<8x188xf32>
    %150 = vector.extract_strided_slice %136 {offsets = [72, 0], sizes = [8, 188], strides = [1, 1]} : vector<80x188xf32> to vector<8x188xf32>
    %151 = arith.maximumf %149, %150 : vector<8x188xf32>
    %152 = tpu.concatenate %139, %142, %145, %148, %151 in 0 : vector<8x188xf32>, vector<8x188xf32>, vector<8x188xf32>, vector<8x188xf32>, vector<8x188xf32> -> vector<40x188xf32>
    %153 = vector.extract_strided_slice %152 {offsets = [0, 0], sizes = [40, 60], strides = [1, 1]} : vector<40x188xf32> to vector<40x60xf32>
    %154 = vector.extract_strided_slice %152 {offsets = [0, 128], sizes = [40, 60], strides = [1, 1]} : vector<40x188xf32> to vector<40x60xf32>
    %155 = arith.maximumf %153, %154 : vector<40x60xf32>
    %156 = vector.extract_strided_slice %155 {offsets = [0, 0], sizes = [24, 60], strides = [1, 1]} : vector<40x60xf32> to vector<24x60xf32>
    %c0_67 = arith.constant 0 : index
    %c0_68 = arith.constant 0 : index
    %c0_69 = arith.constant 0 : index
    %157 = vector.load %arg10[%c0_67, %c0_68, %c0_69] : memref<3x60x48xf32, #tpu.memory_space<vmem>>, vector<1x60x48xf32>
    %158 = vector.shape_cast %157 : vector<1x60x48xf32> to vector<60x48xf32>
    %cst_70 = arith.constant dense<0.000000e+00> : vector<24x48xf32>
    %159 = tpu.matmul %156, %158, %cst_70 {dimension_numbers = #tpu.dot_dimension_numbers<[1], [0], [0], [1], [0, 0, 1, 1], [], []>} : vector<24x60xf32>, vector<60x48xf32>, vector<24x48xf32> -> vector<24x48xf32>
    %160 = vector.extract_strided_slice %155 {offsets = [8, 0], sizes = [24, 60], strides = [1, 1]} : vector<40x60xf32> to vector<24x60xf32>
    %c1_71 = arith.constant 1 : index
    %c0_72 = arith.constant 0 : index
    %c0_73 = arith.constant 0 : index
    %161 = vector.load %arg10[%c1_71, %c0_72, %c0_73] : memref<3x60x48xf32, #tpu.memory_space<vmem>>, vector<1x60x48xf32>
    %162 = vector.shape_cast %161 : vector<1x60x48xf32> to vector<60x48xf32>
    %cst_74 = arith.constant dense<0.000000e+00> : vector<24x48xf32>
    %163 = tpu.matmul %160, %162, %cst_74 {dimension_numbers = #tpu.dot_dimension_numbers<[1], [0], [0], [1], [0, 0, 1, 1], [], []>} : vector<24x60xf32>, vector<60x48xf32>, vector<24x48xf32> -> vector<24x48xf32>
    %164 = arith.addf %159, %163 : vector<24x48xf32>
    %165 = vector.extract_strided_slice %155 {offsets = [16, 0], sizes = [24, 60], strides = [1, 1]} : vector<40x60xf32> to vector<24x60xf32>
    %c2_75 = arith.constant 2 : index
    %c0_76 = arith.constant 0 : index
    %c0_77 = arith.constant 0 : index
    %166 = vector.load %arg10[%c2_75, %c0_76, %c0_77] : memref<3x60x48xf32, #tpu.memory_space<vmem>>, vector<1x60x48xf32>
    %167 = vector.shape_cast %166 : vector<1x60x48xf32> to vector<60x48xf32>
    %cst_78 = arith.constant dense<0.000000e+00> : vector<24x48xf32>
    %168 = tpu.matmul %165, %167, %cst_78 {dimension_numbers = #tpu.dot_dimension_numbers<[1], [0], [0], [1], [0, 0, 1, 1], [], []>} : vector<24x60xf32>, vector<60x48xf32>, vector<24x48xf32> -> vector<24x48xf32>
    %169 = arith.addf %164, %168 : vector<24x48xf32>
    %c0_79 = arith.constant 0 : index
    %c0_80 = arith.constant 0 : index
    %170 = vector.load %arg11[%c0_79, %c0_80] : memref<2x48xf32, #tpu.memory_space<vmem>>, vector<1x48xf32>
    %171 = vector.broadcast %170 : vector<1x48xf32> to vector<24x48xf32>
    %172 = arith.addf %169, %171 : vector<24x48xf32>
    %cst_81 = arith.constant 0.000000e+00 : f32
    %173 = vector.broadcast %cst_81 : f32 to vector<24x48xf32>
    %174 = arith.maximumf %172, %173 : vector<24x48xf32>
    %c1_82 = arith.constant 1 : index
    %c0_83 = arith.constant 0 : index
    %175 = vector.load %arg11[%c1_82, %c0_83] : memref<2x48xf32, #tpu.memory_space<vmem>>, vector<1x48xf32>
    %176 = vector.broadcast %175 : vector<1x48xf32> to vector<24x48xf32>
    %177 = arith.addf %174, %176 : vector<24x48xf32>
    %178 = vector.extract_strided_slice %177 {offsets = [0, 0], sizes = [8, 48], strides = [1, 1]} : vector<24x48xf32> to vector<8x48xf32>
    %c0_84 = arith.constant 0 : index
    %c0_85 = arith.constant 0 : index
    %c0_86 = arith.constant 0 : index
    %179 = vector.load %arg12[%c0_84, %c0_85, %c0_86] : memref<3x48x16xf32, #tpu.memory_space<vmem>>, vector<1x48x16xf32>
    %180 = vector.shape_cast %179 : vector<1x48x16xf32> to vector<48x16xf32>
    %cst_87 = arith.constant dense<0.000000e+00> : vector<8x16xf32>
    %181 = tpu.matmul %178, %180, %cst_87 {dimension_numbers = #tpu.dot_dimension_numbers<[1], [0], [0], [1], [0, 0, 1, 1], [], []>} : vector<8x48xf32>, vector<48x16xf32>, vector<8x16xf32> -> vector<8x16xf32>
    %182 = vector.extract_strided_slice %177 {offsets = [8, 0], sizes = [8, 48], strides = [1, 1]} : vector<24x48xf32> to vector<8x48xf32>
    %c1_88 = arith.constant 1 : index
    %c0_89 = arith.constant 0 : index
    %c0_90 = arith.constant 0 : index
    %183 = vector.load %arg12[%c1_88, %c0_89, %c0_90] : memref<3x48x16xf32, #tpu.memory_space<vmem>>, vector<1x48x16xf32>
    %184 = vector.shape_cast %183 : vector<1x48x16xf32> to vector<48x16xf32>
    %cst_91 = arith.constant dense<0.000000e+00> : vector<8x16xf32>
    %185 = tpu.matmul %182, %184, %cst_91 {dimension_numbers = #tpu.dot_dimension_numbers<[1], [0], [0], [1], [0, 0, 1, 1], [], []>} : vector<8x48xf32>, vector<48x16xf32>, vector<8x16xf32> -> vector<8x16xf32>
    %186 = arith.addf %181, %185 : vector<8x16xf32>
    %187 = vector.extract_strided_slice %177 {offsets = [16, 0], sizes = [8, 48], strides = [1, 1]} : vector<24x48xf32> to vector<8x48xf32>
    %c2_92 = arith.constant 2 : index
    %c0_93 = arith.constant 0 : index
    %c0_94 = arith.constant 0 : index
    %188 = vector.load %arg12[%c2_92, %c0_93, %c0_94] : memref<3x48x16xf32, #tpu.memory_space<vmem>>, vector<1x48x16xf32>
    %189 = vector.shape_cast %188 : vector<1x48x16xf32> to vector<48x16xf32>
    %cst_95 = arith.constant dense<0.000000e+00> : vector<8x16xf32>
    %190 = tpu.matmul %187, %189, %cst_95 {dimension_numbers = #tpu.dot_dimension_numbers<[1], [0], [0], [1], [0, 0, 1, 1], [], []>} : vector<8x48xf32>, vector<48x16xf32>, vector<8x16xf32> -> vector<8x16xf32>
    %191 = arith.addf %186, %190 : vector<8x16xf32>
    %c0_96 = arith.constant 0 : index
    %c0_97 = arith.constant 0 : index
    %192 = vector.load %arg13[%c0_96, %c0_97] : memref<2x16xf32, #tpu.memory_space<vmem>>, vector<1x16xf32>
    %193 = vector.broadcast %192 : vector<1x16xf32> to vector<8x16xf32>
    %194 = arith.addf %191, %193 : vector<8x16xf32>
    %cst_98 = arith.constant 0.000000e+00 : f32
    %195 = vector.broadcast %cst_98 : f32 to vector<8x16xf32>
    %196 = arith.maximumf %194, %195 : vector<8x16xf32>
    %c1_99 = arith.constant 1 : index
    %c0_100 = arith.constant 0 : index
    %197 = vector.load %arg13[%c1_99, %c0_100] : memref<2x16xf32, #tpu.memory_space<vmem>>, vector<1x16xf32>
    %198 = vector.broadcast %197 : vector<1x16xf32> to vector<8x16xf32>
    %199 = arith.addf %196, %198 : vector<8x16xf32>
    %c0_101 = arith.constant 0 : index
    %c0_102 = arith.constant 0 : index
    %200 = vector.load %arg14[%c0_101, %c0_102] : memref<16x10xf32, #tpu.memory_space<vmem>>, vector<16x10xf32>
    %cst_103 = arith.constant dense<0.000000e+00> : vector<8x10xf32>
    %201 = tpu.matmul %199, %200, %cst_103 {dimension_numbers = #tpu.dot_dimension_numbers<[1], [0], [0], [1], [0, 0, 1, 1], [], []>} : vector<8x16xf32>, vector<16x10xf32>, vector<8x10xf32> -> vector<8x10xf32>
    %c0_104 = arith.constant 0 : index
    %c0_105 = arith.constant 0 : index
    %202 = vector.load %arg15[%c0_104, %c0_105] : memref<1x10xf32, #tpu.memory_space<vmem>>, vector<1x10xf32>
    %203 = vector.broadcast %202 : vector<1x10xf32> to vector<8x10xf32>
    %204 = arith.addf %201, %203 : vector<8x10xf32>
    %cst_106 = arith.constant dense<0xFF800000> : vector<8xf32>
    %205 = vector.multi_reduction <maximumf>, %204, %cst_106 [1] : vector<8x10xf32> to vector<8xf32>
    %206 = vector.shape_cast %205 : vector<8xf32> to vector<8x1xf32>
    %207 = vector.broadcast %206 : vector<8x1xf32> to vector<8x10xf32>
    %208 = arith.subf %204, %207 : vector<8x10xf32>
    %209 = math.exp %208 : vector<8x10xf32>
    %cst_107 = arith.constant dense<0.000000e+00> : vector<8xf32>
    %210 = vector.multi_reduction <add>, %209, %cst_107 [1] : vector<8x10xf32> to vector<8xf32>
    %211 = vector.shape_cast %210 : vector<8xf32> to vector<8x1xf32>
    %212 = math.log %211 : vector<8x1xf32>
    %213 = vector.broadcast %212 : vector<8x1xf32> to vector<8x10xf32>
    %214 = arith.subf %208, %213 : vector<8x10xf32>
    %c0_108 = arith.constant 0 : index
    %c0_109 = arith.constant 0 : index
    %215 = vector.load %arg16[%c0_108, %c0_109] : memref<8x10xf32, #tpu.memory_space<vmem>>, vector<8x10xf32>
    tpu.vector_store %arg16[%c0_108, %c0_109], %214 {strides = array<i32>} : memref<8x10xf32, #tpu.memory_space<vmem>>, vector<8x10xf32>,
    return
  }
  func.func @transform_0(%arg0: i32) -> (i32, i32) {
    %c0_i32 = arith.constant 0 : i32
    %c0_i32_0 = arith.constant 0 : i32
    return %arg0, %c0_i32 : i32, i32
  }
  func.func @transform_1(%arg0: i32) -> (i32, i32, i32) {
    %c0_i32 = arith.constant 0 : i32
    %c0_i32_0 = arith.constant 0 : i32
    %c0_i32_1 = arith.constant 0 : i32
    %c0_i32_2 = arith.constant 0 : i32
    return %c0_i32, %c0_i32_0, %c0_i32_1 : i32, i32, i32
  }
  func.func @transform_2(%arg0: i32) -> (i32, i32) {
    %c0_i32 = arith.constant 0 : i32
    %c0_i32_0 = arith.constant 0 : i32
    %c0_i32_1 = arith.constant 0 : i32
    return %c0_i32, %c0_i32_0 : i32, i32
  }
  func.func @transform_3(%arg0: i32) -> (i32, i32, i32) {
    %c0_i32 = arith.constant 0 : i32
    %c0_i32_0 = arith.constant 0 : i32
    %c0_i32_1 = arith.constant 0 : i32
    %c0_i32_2 = arith.constant 0 : i32
    return %c0_i32, %c0_i32_0, %c0_i32_1 : i32, i32, i32
  }
  func.func @transform_4(%arg0: i32) -> (i32, i32) {
    %c0_i32 = arith.constant 0 : i32
    %c0_i32_0 = arith.constant 0 : i32
    %c0_i32_1 = arith.constant 0 : i32
    return %c0_i32, %c0_i32_0 : i32, i32
  }
  func.func @transform_5(%arg0: i32) -> (i32, i32, i32) {
    %c0_i32 = arith.constant 0 : i32
    %c0_i32_0 = arith.constant 0 : i32
    %c0_i32_1 = arith.constant 0 : i32
    %c0_i32_2 = arith.constant 0 : i32
    return %c0_i32, %c0_i32_0, %c0_i32_1 : i32, i32, i32
  }
  func.func @transform_6(%arg0: i32) -> (i32, i32) {
    %c0_i32 = arith.constant 0 : i32
    %c0_i32_0 = arith.constant 0 : i32
    %c0_i32_1 = arith.constant 0 : i32
    return %c0_i32, %c0_i32_0 : i32, i32
  }
  func.func @transform_7(%arg0: i32) -> (i32, i32, i32) {
    %c0_i32 = arith.constant 0 : i32
    %c0_i32_0 = arith.constant 0 : i32
    %c0_i32_1 = arith.constant 0 : i32
    %c0_i32_2 = arith.constant 0 : i32
    return %c0_i32, %c0_i32_0, %c0_i32_1 : i32, i32, i32
  }
  func.func @transform_8(%arg0: i32) -> (i32, i32) {
    %c0_i32 = arith.constant 0 : i32
    %c0_i32_0 = arith.constant 0 : i32
    %c0_i32_1 = arith.constant 0 : i32
    return %c0_i32, %c0_i32_0 : i32, i32
  }
  func.func @transform_9(%arg0: i32) -> (i32, i32, i32) {
    %c0_i32 = arith.constant 0 : i32
    %c0_i32_0 = arith.constant 0 : i32
    %c0_i32_1 = arith.constant 0 : i32
    %c0_i32_2 = arith.constant 0 : i32
    return %c0_i32, %c0_i32_0, %c0_i32_1 : i32, i32, i32
  }
  func.func @transform_10(%arg0: i32) -> (i32, i32) {
    %c0_i32 = arith.constant 0 : i32
    %c0_i32_0 = arith.constant 0 : i32
    %c0_i32_1 = arith.constant 0 : i32
    return %c0_i32, %c0_i32_0 : i32, i32
  }
  func.func @transform_11(%arg0: i32) -> (i32, i32, i32) {
    %c0_i32 = arith.constant 0 : i32
    %c0_i32_0 = arith.constant 0 : i32
    %c0_i32_1 = arith.constant 0 : i32
    %c0_i32_2 = arith.constant 0 : i32
    return %c0_i32, %c0_i32_0, %c0_i32_1 : i32, i32, i32
  }
  func.func @transform_12(%arg0: i32) -> (i32, i32) {
    %c0_i32 = arith.constant 0 : i32
    %c0_i32_0 = arith.constant 0 : i32
    %c0_i32_1 = arith.constant 0 : i32
    return %c0_i32, %c0_i32_0 : i32, i32
  }
  func.func @transform_13(%arg0: i32) -> (i32, i32) {
    %c0_i32 = arith.constant 0 : i32
    %c0_i32_0 = arith.constant 0 : i32
    %c0_i32_1 = arith.constant 0 : i32
    return %c0_i32, %c0_i32_0 : i32, i32
  }
  func.func @transform_14(%arg0: i32) -> (i32, i32) {
    %c0_i32 = arith.constant 0 : i32
    %c0_i32_0 = arith.constant 0 : i32
    %c0_i32_1 = arith.constant 0 : i32
    return %c0_i32, %c0_i32_0 : i32, i32
  }
  func.func @transform_15(%arg0: i32) -> (i32, i32) {
    %c0_i32 = arith.constant 0 : i32
    %c0_i32_0 = arith.constant 0 : i32
    return %arg0, %c0_i32 : i32, i32
  }
}

</mosaic_0001>

<llo_original>
// kernel: _forward.1
$region0: #{_forward.1}
  #allocation0 [shape = 'u32[]', space=smem, size = 0x4, offset = 0x4, fixed_abs, tag = 'smem constant byte address 0x4 - core index']
  #allocation1 [shape = 'u32[144,128]{1,0:T(1,128)}', space=vmem, size = 0x12000, scoped, tag = 'internal scratch']
  %s0 = inlined_call_operand.vmem [shape: f32[240,30], index: 0, kind: input, shape index: {}]
  %s1 = inlined_call_operand.hbm [shape: f32[3,30,120], index: 1, kind: input, shape index: {}]
  %s2 = inlined_call_operand.hbm [shape: f32[2,120], index: 2, kind: input, shape index: {}]
  %s3 = inlined_call_operand.vmem [shape: f32[3,120,240], index: 3, kind: input, shape index: {}]
  %s4 = inlined_call_operand.vmem [shape: f32[2,240], index: 4, kind: input, shape index: {}]
  %s5 = inlined_call_operand.vmem [shape: f32[3,112,144], index: 5, kind: input, shape index: {}]
  %s6 = inlined_call_operand.vmem [shape: f32[2,144], index: 6, kind: input, shape index: {}]
  %s7 = inlined_call_operand.vmem [shape: f32[3,144,188], index: 7, kind: input, shape index: {}]
  %s8 = inlined_call_operand.hbm [shape: f32[2,188], index: 8, kind: input, shape index: {}]
  %s9 = inlined_call_operand.vmem [shape: f32[3,60,48], index: 9, kind: input, shape index: {}]
  %s10 = inlined_call_operand.hbm [shape: f32[2,48], index: 10, kind: input, shape index: {}]
  %s11 = inlined_call_operand.vmem [shape: f32[3,48,16], index: 11, kind: input, shape index: {}]
  %s12 = inlined_call_operand.vmem [shape: f32[2,16], index: 12, kind: input, shape index: {}]
  %s13 = inlined_call_operand.vmem [shape: f32[16,10], index: 13, kind: input, shape index: {}]
  %s14 = inlined_call_operand.vmem [shape: f32[1,10], index: 14, kind: input, shape index: {}]
  %s15 = inlined_call_operand.vmem [shape: f32[8,10], index: 15, kind: output, shape index: {}]
  %s16 = sld [smem:[#allocation0]]
  $region86: #{_forward.1} parent=0
    _
  %s18 = ssub.s32 1, %s16
  %s19 = scalar_select 0, %s18, %s16
  $region1: #{_forward.1} parent=0
    #allocation2 [shape = 'u8[49152]{0}', space=vmem, size = 0xc000, scoped, tag = 'input window, operand 1, single buffered']
    #allocation3 [shape = 's32[1]{0}', space=sflag, size = 0x4, scoped, tag = 'scoped memory for _forward.1']
    #allocation4 [shape = 'u8[1024]{0}', space=vmem, size = 0x400, scoped, tag = 'input window, operand 2, single buffered']
    #allocation5 [shape = 's32[1]{0}', space=sflag, size = 0x4, scoped, tag = 'scoped memory for _forward.1']
    #allocation6 [shape = 'u8[2048]{0}', space=vmem, size = 0x800, scoped, tag = 'input window, operand 8, single buffered']
    #allocation7 [shape = 'u8[1024]{0}', space=vmem, size = 0x400, scoped, tag = 'input window, operand 10, single buffered']
    #allocation8 [shape = 's32[1]{0}', space=sflag, size = 0x4, scoped, tag = 'scoped memory for _forward.1']
    %20 = vsyncpa [#allocation3], 0
    %21 = vsyncpa [#allocation5], 0
    %22 = vsyncpa [#allocation8], 0
    // Predicated region
    $region2: #{_forward.1} parent=1 // pred_check
      _
    $region3: #{_forward.1} parent=1 // pred_check_branch
      %24 = sbr.rel (0) target = $region5
    $region4: #{_forward.1} parent=1 // pred_region
      _
    $region5: #{_forward.1} parent=1 // pred_fallthru
      _
    // Predicated region
    $region6: #{_forward.1} parent=1 // pred_check
      _
    $region7: #{_forward.1} parent=1 // pred_check_branch
      %26 = sbr.rel (0) target = $region9
    $region8: #{_forward.1} parent=1 // pred_region
      %s28 = ssub.s32 1536, 1536
      %29 = vsyncadd [#allocation3], %s28
      %s30 = sshll.u32 [#allocation2], 4
      %s31 = int_to_ptr.vmem [resolvable:$true] %s30
      %36 = dma.hbm_to_vmem [thread:$0]  %s1, 1536, %s31, [#allocation3], 128, 128, 8
    $region9: #{_forward.1} parent=1 // pred_fallthru
      _
    // Predicated region
    $region10: #{_forward.1} parent=1 // pred_check
      _
    $region11: #{_forward.1} parent=1 // pred_check_branch
      %38 = sbr.rel (0) target = $region13
    $region12: #{_forward.1} parent=1 // pred_region
      %s40 = ssub.s32 32, 32
      %41 = vsyncadd [#allocation5], %s40
      %s43 = sshll.u32 [#allocation4], 4
      %s44 = int_to_ptr.vmem [resolvable:$true] %s43
      %46 = dma.hbm_to_vmem [thread:$0]  %s2, 32, %s44, [#allocation5]
    $region13: #{_forward.1} parent=1 // pred_fallthru
      _
    // Predicated region
    $region14: #{_forward.1} parent=1 // pred_check
      _
    $region15: #{_forward.1} parent=1 // pred_check_branch
      %48 = sbr.rel (0) target = $region17
    $region16: #{_forward.1} parent=1 // pred_region
      _
    $region17: #{_forward.1} parent=1 // pred_fallthru
      _
    // Predicated region
    $region18: #{_forward.1} parent=1 // pred_check
      _
    $region19: #{_forward.1} parent=1 // pred_check_branch
      %50 = sbr.rel (0) target = $region21
    $region20: #{_forward.1} parent=1 // pred_region
      _
    $region21: #{_forward.1} parent=1 // pred_fallthru
      _
    // Predicated region
    $region22: #{_forward.1} parent=1 // pred_check
      _
    $region23: #{_forward.1} parent=1 // pred_check_branch
      %52 = sbr.rel (0) target = $region25
    $region24: #{_forward.1} parent=1 // pred_region
      _
    $region25: #{_forward.1} parent=1 // pred_fallthru
      _
    // Predicated region
    $region26: #{_forward.1} parent=1 // pred_check
      _
    $region27: #{_forward.1} parent=1 // pred_check_branch
      %54 = sbr.rel (0) target = $region29
    $region28: #{_forward.1} parent=1 // pred_region
      _
    $region29: #{_forward.1} parent=1 // pred_fallthru
      _
    // Predicated region
    $region30: #{_forward.1} parent=1 // pred_check
      _
    $region31: #{_forward.1} parent=1 // pred_check_branch
      %56 = sbr.rel (0) target = $region33
    $region32: #{_forward.1} parent=1 // pred_region
      _
    $region33: #{_forward.1} parent=1 // pred_fallthru
      _
    // Predicated region
    $region34: #{_forward.1} parent=1 // pred_check
      _
    $region35: #{_forward.1} parent=1 // pred_check_branch
      %58 = sbr.rel (0) target = $region37
    $region36: #{_forward.1} parent=1 // pred_region
      %s60 = ssub.s32 64, 64
      %61 = vsyncadd [#allocation5], %s60
      %s63 = sshll.u32 [#allocation6], 4
      %s64 = int_to_ptr.vmem [resolvable:$true] %s63
      %66 = dma.hbm_to_vmem [thread:$0]  %s8, 64, %s64, [#allocation5]
    $region37: #{_forward.1} parent=1 // pred_fallthru
      _
    // Predicated region
    $region38: #{_forward.1} parent=1 // pred_check
      _
    $region39: #{_forward.1} parent=1 // pred_check_branch
      %68 = sbr.rel (0) target = $region41
    $region40: #{_forward.1} parent=1 // pred_region
      _
    $region41: #{_forward.1} parent=1 // pred_fallthru
      _
    // Predicated region
    $region42: #{_forward.1} parent=1 // pred_check
      _
    $region43: #{_forward.1} parent=1 // pred_check_branch
      %70 = sbr.rel (0) target = $region45
    $region44: #{_forward.1} parent=1 // pred_region
      %s72 = ssub.s32 32, 32
      %73 = vsyncadd [#allocation8], %s72
      %s75 = sshll.u32 [#allocation7], 4
      %s76 = int_to_ptr.vmem [resolvable:$true] %s75
      %78 = dma.hbm_to_vmem [thread:$0]  %s10, 32, %s76, [#allocation8]
    $region45: #{_forward.1} parent=1 // pred_fallthru
      _
    // Predicated region
    $region46: #{_forward.1} parent=1 // pred_check
      _
    $region47: #{_forward.1} parent=1 // pred_check_branch
      %80 = sbr.rel (0) target = $region49
    $region48: #{_forward.1} parent=1 // pred_region
      _
    $region49: #{_forward.1} parent=1 // pred_fallthru
      _
    // Predicated region
    $region50: #{_forward.1} parent=1 // pred_check
      _
    $region51: #{_forward.1} parent=1 // pred_check_branch
      %82 = sbr.rel (0) target = $region53
    $region52: #{_forward.1} parent=1 // pred_region
      _
    $region53: #{_forward.1} parent=1 // pred_fallthru
      _
    // Predicated region
    $region54: #{_forward.1} parent=1 // pred_check
      _
    $region55: #{_forward.1} parent=1 // pred_check_branch
      %84 = sbr.rel (0) target = $region57
    $region56: #{_forward.1} parent=1 // pred_region
      _
    $region57: #{_forward.1} parent=1 // pred_fallthru
      _
    // Predicated region
    $region58: #{_forward.1} parent=1 // pred_check
      _
    $region59: #{_forward.1} parent=1 // pred_check_branch
      %86 = sbr.rel (0) target = $region61
    $region60: #{_forward.1} parent=1 // pred_region
      _
    $region61: #{_forward.1} parent=1 // pred_fallthru
      _
    // Predicated region
    $region62: #{_forward.1} parent=1 // pred_check
      _
    $region63: #{_forward.1} parent=1 // pred_check_branch
      %88 = sbr.rel (0) target = $region65
    $region64: #{_forward.1} parent=1 // pred_region
      %89 = dma.done [#allocation3], 1536
    $region65: #{_forward.1} parent=1 // pred_fallthru
      _
    // Predicated region
    $region66: #{_forward.1} parent=1 // pred_check
      _
    $region67: #{_forward.1} parent=1 // pred_check_branch
      %91 = sbr.rel (0) target = $region69
    $region68: #{_forward.1} parent=1 // pred_region
      %92 = dma.done [#allocation5], 32
    $region69: #{_forward.1} parent=1 // pred_fallthru
      _
    // Predicated region
    $region70: #{_forward.1} parent=1 // pred_check
      _
    $region71: #{_forward.1} parent=1 // pred_check_branch
      %94 = sbr.rel (0) target = $region73
    $region72: #{_forward.1} parent=1 // pred_region
      %95 = dma.done [#allocation5], 64
    $region73: #{_forward.1} parent=1 // pred_fallthru
      _
    // Predicated region
    $region74: #{_forward.1} parent=1 // pred_check
      _
    $region75: #{_forward.1} parent=1 // pred_check_branch
      %97 = sbr.rel (0) target = $region77
    $region76: #{_forward.1} parent=1 // pred_region
      %98 = dma.done [#allocation8], 32
    $region77: #{_forward.1} parent=1 // pred_fallthru
      _
    %v99 = vld [vmem:[%s0] sm:$0xff]
    %v100 = vld [vmem:[%s0 + $0x8] sm:$0xff]
    %v101 = vld [vmem:[%s0 + $0x10] sm:$0xff]
    %v102 = vld [vmem:[%s0 + $0x18] sm:$0xff]
    %v103 = vld [vmem:[%s0 + $0x20] sm:$0xff]
    %v104 = vld [vmem:[%s0 + $0x28] sm:$0xff]
    %v105 = vld [vmem:[%s0 + $0x30] sm:$0xff]
    %v106 = vld [vmem:[%s0 + $0x38] sm:$0xff]
    %v107 = vld [vmem:[%s0 + $0x40] sm:$0xff]
    %v108 = vld [vmem:[%s0 + $0x48] sm:$0xff]
    %v109 = vld [vmem:[%s0 + $0x50] sm:$0xff]
    %v110 = vld [vmem:[%s0 + $0x58] sm:$0xff]
    %v111 = vld [vmem:[%s0 + $0x60] sm:$0xff]
    %v112 = vld [vmem:[%s0 + $0x68] sm:$0xff]
    %v113 = vld [vmem:[%s0 + $0x70] sm:$0xff]
    %v114 = vld [vmem:[%s0 + $0x78] sm:$0xff]
    %v115 = vld [vmem:[%s0 + $0x80] sm:$0xff]
    %v116 = vld [vmem:[%s0 + $0x88] sm:$0xff]
    %v117 = vld [vmem:[%s0 + $0x90] sm:$0xff]
    %v118 = vld [vmem:[%s0 + $0x98] sm:$0xff]
    %v119 = vld [vmem:[%s0 + $0xa0] sm:$0xff]
    %v120 = vld [vmem:[%s0 + $0xa8] sm:$0xff]
    %v121 = vld [vmem:[%s0 + $0xb0] sm:$0xff]
    %v122 = vld [vmem:[%s0 + $0xb8] sm:$0xff]
    %v123 = vld [vmem:[%s0 + $0xc0] sm:$0xff]
    %v124 = vld [vmem:[%s0 + $0xc8] sm:$0xff]
    %v125 = vld [vmem:[%s0 + $0xd0] sm:$0xff]
    %v126 = vld [vmem:[%s0 + $0xd8] sm:$0xff]
    %v127 = vld [vmem:[%s0 + $0xe0] sm:$0xff]
    %v128 = vld [vmem:[%s0 + $0xe8] sm:$0xff]
    %v129 = vld [vmem:[#allocation2] sm:$0xff]
    %v130 = vld [vmem:[#allocation2 + $0x8] sm:$0xff]
    %v131 = vld [vmem:[#allocation2 + $0x10] sm:$0xff]
    %v132 = vld [vmem:[#allocation2 + $0x18] sm:$0x3f]
    %s133 = scalar_lea.vmem [#allocation2], 32
    %v134 = vld [vmem:[%s133] sm:$0xff]
    %v135 = vld [vmem:[%s133 + $0x8] sm:$0xff]
    %v136 = vld [vmem:[%s133 + $0x10] sm:$0xff]
    %v137 = vld [vmem:[%s133 + $0x18] sm:$0x3f]
    %vm138 = vcmask 244736
    %v140 = vsel %vm138, %v100, 0
    %v143 = vsel %vm138, %v101, 0
    %v146 = vsel %vm138, %v102, 0
    %v149 = vsel %vm138, %v103, 0
    %v152 = vsel %vm138, %v104, 0
    %v155 = vsel %vm138, %v105, 0
    %v158 = vsel %vm138, %v106, 0
    %v161 = vsel %vm138, %v107, 0
    %v164 = vsel %vm138, %v108, 0
    %v167 = vsel %vm138, %v109, 0
    %v170 = vsel %vm138, %v110, 0
    %v173 = vsel %vm138, %v111, 0
    %v176 = vsel %vm138, %v112, 0
    %v179 = vsel %vm138, %v113, 0
    %v182 = vsel %vm138, %v114, 0
    %v185 = vsel %vm138, %v115, 0
    %v188 = vsel %vm138, %v116, 0
    %v191 = vsel %vm138, %v117, 0
    %v194 = vsel %vm138, %v118, 0
    %v197 = vsel %vm138, %v119, 0
    %v200 = vsel %vm138, %v120, 0
    %v203 = vsel %vm138, %v121, 0
    %v206 = vsel %vm138, %v122, 0
    %v209 = vsel %vm138, %v123, 0
    %v212 = vsel %vm138, %v124, 0
    %v215 = vsel %vm138, %v125, 0
    %v218 = vsel %vm138, %v126, 0
    %v221 = vsel %vm138, %v127, 0
    %vm223 = vcmask 1045504
    %v225 = vsel %vm223, %v137, 0
    %227 = vmatprep.subr.mxu0 0.0
    %228 = vmatpush1.msra.mxu0 0.0
    %229 = vmatprep.subr.mxu0 0.0
    %230 = vmatpush1.msra.mxu0 0.0
    %231 = vmatprep.subr.mxu0 0.0
    %232 = vmatpush1.msra.mxu0 0.0
    %233 = vmatprep.subr.mxu0 0.0
    %234 = vmatpush1.msra.mxu0 0.0
    %235 = vmatprep.subr.mxu0 0.0
    %236 = vmatpush1.msra.mxu0 0.0
    %237 = vmatprep.subr.mxu0 0.0
    %238 = vmatpush1.msra.mxu0 0.0
    %239 = vmatprep.subr.mxu0 0.0
    %240 = vmatpush1.msra.mxu0 0.0
    %241 = vmatprep.subr.mxu0 0.0
    %242 = vmatpush1.msra.mxu0 0.0
    %243 = vmatprep.subr.mxu0 0.0
    %244 = vmatpush1.msra.mxu0 0.0
    %245 = vmatprep.subr.mxu0 0.0
    %246 = vmatpush1.msra.mxu0 0.0
    %247 = vmatprep.subr.mxu0 0.0
    %248 = vmatpush1.msra.mxu0 0.0
    %249 = vmatprep.subr.mxu0 0.0
    %250 = vmatpush1.msra.mxu0 0.0
    %251 = vmatprep.subr.mxu0 0.0
    %252 = vmatpush1.msra.mxu0 %v225
    %253 = vmatprep.subr.mxu0 0.0
    %254 = vmatpush1.msra.mxu0 %v136
    %255 = vmatprep.subr.mxu0 0.0
    %256 = vmatpush1.msra.mxu0 %v135
    %257 = vmatprep.subr.mxu0 0.0
    %258 = vmatpush1.msra.mxu0 %v134
    %259 = vmatprep.subr.mxu0 0.0
    %260 = vmatpush2.msra.mxu0 0.0
    %261 = vmatprep.subr.mxu0 0.0
    %262 = vmatpush2.msra.mxu0 0.0
    %263 = vmatprep.subr.mxu0 0.0
    %264 = vmatpush2.msra.mxu0 0.0
    %265 = vmatprep.subr.mxu0 0.0
    %266 = vmatpush2.msra.mxu0 0.0
    %267 = vmatprep.subr.mxu0 0.0
    %268 = vmatpush2.msra.mxu0 0.0
    %269 = vmatprep.subr.mxu0 0.0
    %270 = vmatpush2.msra.mxu0 0.0
    %271 = vmatprep.subr.mxu0 0.0
    %272 = vmatpush2.msra.mxu0 0.0
    %273 = vmatprep.subr.mxu0 0.0
    %274 = vmatpush2.msra.mxu0 0.0
    %275 = vmatprep.subr.mxu0 0.0
    %276 = vmatpush2.msra.mxu0 0.0
    %277 = vmatprep.subr.mxu0 0.0
    %278 = vmatpush2.msra.mxu0 0.0
    %279 = vmatprep.subr.mxu0 0.0
    %280 = vmatpush2.msra.mxu0 0.0
    %281 = vmatprep.subr.mxu0 0.0
    %282 = vmatpush2.msra.mxu0 0.0
    %283 = vmatprep.subr.mxu0 0.0
    %284 = vmatpush2.msra.mxu0 0.0
    %285 = vmatprep.subr.mxu0 0.0
    %286 = vmatpush2.msra.mxu0 0.0
    %287 = vmatprep.subr.mxu0 0.0
    %288 = vmatpush2.msra.mxu0 0.0
    %289 = vmatprep.subr.mxu0 0.0
    %290 = vmatpush2.msra.mxu0 0.0
    %291 = vmatprep.mubr.f32.mxu0 0.0
    %292 = vmatmul.mubr.f32.gmra.mxu0 %v140
    %v293 = vpop.f32.mrf.mxu0
    %v294 = vadd.f32 0.0, %v293
    %v295 = vpop.f32.mrf.mxu0
    %296 = vmatprep.mubr.f32.mxu0 0.0
    %297 = vmatmul.mubr.f32.gmra.mxu0 %v143
    %v298 = vpop.f32.mrf.mxu0
    %v299 = vadd.f32 0.0, %v298
    %v300 = vpop.f32.mrf.mxu0
    %301 = vmatprep.mubr.f32.mxu0 0.0
    %302 = vmatmul.mubr.f32.gmra.mxu0 %v146
    %v303 = vpop.f32.mrf.mxu0
    %v304 = vadd.f32 0.0, %v303
    %v305 = vpop.f32.mrf.mxu0
    %306 = vmatprep.mubr.f32.mxu0 0.0
    %307 = vmatmul.mubr.f32.gmra.mxu0 %v149
    %v308 = vpop.f32.mrf.mxu0
    %v309 = vadd.f32 0.0, %v308
    %v310 = vpop.f32.mrf.mxu0
    %311 = vmatprep.mubr.f32.mxu0 0.0
    %312 = vmatmul.mubr.f32.gmra.mxu0 %v152
    %v313 = vpop.f32.mrf.mxu0
    %v314 = vadd.f32 0.0, %v313
    %v315 = vpop.f32.mrf.mxu0
    %316 = vmatprep.mubr.f32.mxu0 0.0
    %317 = vmatmul.mubr.f32.gmra.mxu0 %v155
    %v318 = vpop.f32.mrf.mxu0
    %v319 = vadd.f32 0.0, %v318
    %v320 = vpop.f32.mrf.mxu0
    %321 = vmatprep.mubr.f32.mxu0 0.0
    %322 = vmatmul.mubr.f32.gmra.mxu0 %v158
    %v323 = vpop.f32.mrf.mxu0
    %v324 = vadd.f32 0.0, %v323
    %v325 = vpop.f32.mrf.mxu0
    %326 = vmatprep.mubr.f32.mxu0 0.0
    %327 = vmatmul.mubr.f32.gmra.mxu0 %v161
    %v328 = vpop.f32.mrf.mxu0
    %v329 = vadd.f32 0.0, %v328
    %v330 = vpop.f32.mrf.mxu0
    %331 = vmatprep.mubr.f32.mxu0 0.0
    %332 = vmatmul.mubr.f32.gmra.mxu0 %v164
    %v333 = vpop.f32.mrf.mxu0
    %v334 = vadd.f32 0.0, %v333
    %v335 = vpop.f32.mrf.mxu0
    %336 = vmatprep.mubr.f32.mxu0 0.0
    %337 = vmatmul.mubr.f32.gmra.mxu0 %v167
    %v338 = vpop.f32.mrf.mxu0
    %v339 = vadd.f32 0.0, %v338
    %v340 = vpop.f32.mrf.mxu0
    %341 = vmatprep.mubr.f32.mxu0 0.0
    %342 = vmatmul.mubr.f32.gmra.mxu0 %v170
    %v343 = vpop.f32.mrf.mxu0
    %v344 = vadd.f32 0.0, %v343
    %v345 = vpop.f32.mrf.mxu0
    %346 = vmatprep.mubr.f32.mxu0 0.0
    %347 = vmatmul.mubr.f32.gmra.mxu0 %v173
    %v348 = vpop.f32.mrf.mxu0
    %v349 = vadd.f32 0.0, %v348
    %v350 = vpop.f32.mrf.mxu0
    %351 = vmatprep.mubr.f32.mxu0 0.0
    %352 = vmatmul.mubr.f32.gmra.mxu0 %v176
    %v353 = vpop.f32.mrf.mxu0
    %v354 = vadd.f32 0.0, %v353
    %v355 = vpop.f32.mrf.mxu0
    %356 = vmatprep.mubr.f32.mxu0 0.0
    %357 = vmatmul.mubr.f32.gmra.mxu0 %v179
    %v358 = vpop.f32.mrf.mxu0
    %v359 = vadd.f32 0.0, %v358
    %v360 = vpop.f32.mrf.mxu0
    %361 = vmatprep.mubr.f32.mxu0 0.0
    %362 = vmatmul.mubr.f32.gmra.mxu0 %v182
    %v363 = vpop.f32.mrf.mxu0
    %v364 = vadd.f32 0.0, %v363
    %v365 = vpop.f32.mrf.mxu0
    %366 = vmatprep.mubr.f32.mxu0 0.0
    %367 = vmatmul.mubr.f32.gmra.mxu0 %v185
    %v368 = vpop.f32.mrf.mxu0
    %v369 = vadd.f32 0.0, %v368
    %v370 = vpop.f32.mrf.mxu0
    %371 = vmatprep.mubr.f32.mxu0 0.0
    %372 = vmatmul.mubr.f32.gmra.mxu0 %v188
    %v373 = vpop.f32.mrf.mxu0
    %v374 = vadd.f32 0.0, %v373
    %v375 = vpop.f32.mrf.mxu0
    %376 = vmatprep.mubr.f32.mxu0 0.0
    %377 = vmatmul.mubr.f32.gmra.mxu0 %v191
    %v378 = vpop.f32.mrf.mxu0
    %v379 = vadd.f32 0.0, %v378
    %v380 = vpop.f32.mrf.mxu0
    %381 = vmatprep.mubr.f32.mxu0 0.0
    %382 = vmatmul.mubr.f32.gmra.mxu0 %v194
    %v383 = vpop.f32.mrf.mxu0
    %v384 = vadd.f32 0.0, %v383
    %v385 = vpop.f32.mrf.mxu0
    %386 = vmatprep.mubr.f32.mxu0 0.0
    %387 = vmatmul.mubr.f32.gmra.mxu0 %v197
    %v388 = vpop.f32.mrf.mxu0
    %v389 = vadd.f32 0.0, %v388
    %v390 = vpop.f32.mrf.mxu0
    %391 = vmatprep.mubr.f32.mxu0 0.0
    %392 = vmatmul.mubr.f32.gmra.mxu0 %v200
    %v393 = vpop.f32.mrf.mxu0
    %v394 = vadd.f32 0.0, %v393
    %v395 = vpop.f32.mrf.mxu0
    %396 = vmatprep.mubr.f32.mxu0 0.0
    %397 = vmatmul.mubr.f32.gmra.mxu0 %v203
    %v398 = vpop.f32.mrf.mxu0
    %v399 = vadd.f32 0.0, %v398
    %v400 = vpop.f32.mrf.mxu0
    %401 = vmatprep.mubr.f32.mxu0 0.0
    %402 = vmatmul.mubr.f32.gmra.mxu0 %v206
    %v403 = vpop.f32.mrf.mxu0
    %v404 = vadd.f32 0.0, %v403
    %v405 = vpop.f32.mrf.mxu0
    %406 = vmatprep.mubr.f32.mxu0 0.0
    %407 = vmatmul.mubr.f32.gmra.mxu0 %v209
    %v408 = vpop.f32.mrf.mxu0
    %v409 = vadd.f32 0.0, %v408
    %v410 = vpop.f32.mrf.mxu0
    %411 = vmatprep.mubr.f32.mxu0 0.0
    %412 = vmatmul.mubr.f32.gmra.mxu0 %v212
    %v413 = vpop.f32.mrf.mxu0
    %v414 = vadd.f32 0.0, %v413
    %v415 = vpop.f32.mrf.mxu0
    %416 = vmatprep.mubr.f32.mxu0 0.0
    %417 = vmatmul.mubr.f32.gmra.mxu0 %v215
    %v418 = vpop.f32.mrf.mxu0
    %v419 = vadd.f32 0.0, %v418
    %v420 = vpop.f32.mrf.mxu0
    %421 = vmatprep.mubr.f32.mxu0 0.0
    %422 = vmatmul.mubr.f32.gmra.mxu0 %v218
    %v423 = vpop.f32.mrf.mxu0
    %v424 = vadd.f32 0.0, %v423
    %v425 = vpop.f32.mrf.mxu0
    %426 = vmatprep.mubr.f32.mxu0 0.0
    %427 = vmatmul.mubr.f32.gmra.mxu0 %v221
    %v428 = vpop.f32.mrf.mxu0
    %v429 = vadd.f32 0.0, %v428
    %v430 = vpop.f32.mrf.mxu0
    %431 = vdwg.mxu0
    %v433 = vsel %vm138, %v99, 0
    %v436 = vsel %vm223, %v132, 0
    %438 = vmatprep.subr.mxu0 0.0
    %439 = vmatpush1.msra.mxu0 0.0
    %440 = vmatprep.subr.mxu0 0.0
    %441 = vmatpush1.msra.mxu0 0.0
    %442 = vmatprep.subr.mxu0 0.0
    %443 = vmatpush1.msra.mxu0 0.0
    %444 = vmatprep.subr.mxu0 0.0
    %445 = vmatpush1.msra.mxu0 0.0
    %446 = vmatprep.subr.mxu0 0.0
    %447 = vmatpush1.msra.mxu0 0.0
    %448 = vmatprep.subr.mxu0 0.0
    %449 = vmatpush1.msra.mxu0 0.0
    %450 = vmatprep.subr.mxu0 0.0
    %451 = vmatpush1.msra.mxu0 0.0
    %452 = vmatprep.subr.mxu0 0.0
    %453 = vmatpush1.msra.mxu0 0.0
    %454 = vmatprep.subr.mxu0 0.0
    %455 = vmatpush1.msra.mxu0 0.0
    %456 = vmatprep.subr.mxu0 0.0
    %457 = vmatpush1.msra.mxu0 0.0
    %458 = vmatprep.subr.mxu0 0.0
    %459 = vmatpush1.msra.mxu0 0.0
    %460 = vmatprep.subr.mxu0 0.0
    %461 = vmatpush1.msra.mxu0 0.0
    %462 = vmatprep.subr.mxu0 0.0
    %463 = vmatpush1.msra.mxu0 %v436
    %464 = vmatprep.subr.mxu0 0.0
    %465 = vmatpush1.msra.mxu0 %v131
    %466 = vmatprep.subr.mxu0 0.0
    %467 = vmatpush1.msra.mxu0 %v130
    %468 = vmatprep.subr.mxu0 0.0
    %469 = vmatpush1.msra.mxu0 %v129
    %470 = vmatprep.subr.mxu0 0.0
    %471 = vmatpush2.msra.mxu0 0.0
    %472 = vmatprep.subr.mxu0 0.0
    %473 = vmatpush2.msra.mxu0 0.0
    %474 = vmatprep.subr.mxu0 0.0
    %475 = vmatpush2.msra.mxu0 0.0
    %476 = vmatprep.subr.mxu0 0.0
    %477 = vmatpush2.msra.mxu0 0.0
    %478 = vmatprep.subr.mxu0 0.0
    %479 = vmatpush2.msra.mxu0 0.0
    %480 = vmatprep.subr.mxu0 0.0
    %481 = vmatpush2.msra.mxu0 0.0
    %482 = vmatprep.subr.mxu0 0.0
    %483 = vmatpush2.msra.mxu0 0.0
    %484 = vmatprep.subr.mxu0 0.0
    %485 = vmatpush2.msra.mxu0 0.0
    %486 = vmatprep.subr.mxu0 0.0
    %487 = vmatpush2.msra.mxu0 0.0
    %488 = vmatprep.subr.mxu0 0.0
    %489 = vmatpush2.msra.mxu0 0.0
    %490 = vmatprep.subr.mxu0 0.0
    %491 = vmatpush2.msra.mxu0 0.0
    %492 = vmatprep.subr.mxu0 0.0
    %493 = vmatpush2.msra.mxu0 0.0
    %494 = vmatprep.subr.mxu0 0.0
    %495 = vmatpush2.msra.mxu0 0.0
    %496 = vmatprep.subr.mxu0 0.0
    %497 = vmatpush2.msra.mxu0 0.0
    %498 = vmatprep.subr.mxu0 0.0
    %499 = vmatpush2.msra.mxu0 0.0
    %500 = vmatprep.subr.mxu0 0.0
    %501 = vmatpush2.msra.mxu0 0.0
    %502 = vmatprep.mubr.f32.mxu0 0.0
    %503 = vmatmul.mubr.f32.gmra.mxu0 %v433
    %v504 = vpop.f32.mrf.mxu0
    %v505 = vadd.f32 %v294, %v504
    %v506 = vpop.f32.mrf.mxu0
    %507 = vmatprep.mubr.f32.mxu0 0.0
    %508 = vmatmul.mubr.f32.gmra.mxu0 %v140
    %v509 = vpop.f32.mrf.mxu0
    %v510 = vadd.f32 %v299, %v509
    %v511 = vpop.f32.mrf.mxu0
    %512 = vmatprep.mubr.f32.mxu0 0.0
    %513 = vmatmul.mubr.f32.gmra.mxu0 %v143
    %v514 = vpop.f32.mrf.mxu0
    %v515 = vadd.f32 %v304, %v514
    %v516 = vpop.f32.mrf.mxu0
    %517 = vmatprep.mubr.f32.mxu0 0.0
    %518 = vmatmul.mubr.f32.gmra.mxu0 %v146
    %v519 = vpop.f32.mrf.mxu0
    %v520 = vadd.f32 %v309, %v519
    %v521 = vpop.f32.mrf.mxu0
    %522 = vmatprep.mubr.f32.mxu0 0.0
    %523 = vmatmul.mubr.f32.gmra.mxu0 %v149
    %v524 = vpop.f32.mrf.mxu0
    %v525 = vadd.f32 %v314, %v524
    %v526 = vpop.f32.mrf.mxu0
    %527 = vmatprep.mubr.f32.mxu0 0.0
    %528 = vmatmul.mubr.f32.gmra.mxu0 %v152
    %v529 = vpop.f32.mrf.mxu0
    %v530 = vadd.f32 %v319, %v529
    %v531 = vpop.f32.mrf.mxu0
    %532 = vmatprep.mubr.f32.mxu0 0.0
    %533 = vmatmul.mubr.f32.gmra.mxu0 %v155
    %v534 = vpop.f32.mrf.mxu0
    %v535 = vadd.f32 %v324, %v534
    %v536 = vpop.f32.mrf.mxu0
    %537 = vmatprep.mubr.f32.mxu0 0.0
    %538 = vmatmul.mubr.f32.gmra.mxu0 %v158
    %v539 = vpop.f32.mrf.mxu0
    %v540 = vadd.f32 %v329, %v539
    %v541 = vpop.f32.mrf.mxu0
    %542 = vmatprep.mubr.f32.mxu0 0.0
    %543 = vmatmul.mubr.f32.gmra.mxu0 %v161
    %v544 = vpop.f32.mrf.mxu0
    %v545 = vadd.f32 %v334, %v544
    %v546 = vpop.f32.mrf.mxu0
    %547 = vmatprep.mubr.f32.mxu0 0.0
    %548 = vmatmul.mubr.f32.gmra.mxu0 %v164
    %v549 = vpop.f32.mrf.mxu0
    %v550 = vadd.f32 %v339, %v549
    %v551 = vpop.f32.mrf.mxu0
    %552 = vmatprep.mubr.f32.mxu0 0.0
    %553 = vmatmul.mubr.f32.gmra.mxu0 %v167
    %v554 = vpop.f32.mrf.mxu0
    %v555 = vadd.f32 %v344, %v554
    %v556 = vpop.f32.mrf.mxu0
    %557 = vmatprep.mubr.f32.mxu0 0.0
    %558 = vmatmul.mubr.f32.gmra.mxu0 %v170
    %v559 = vpop.f32.mrf.mxu0
    %v560 = vadd.f32 %v349, %v559
    %v561 = vpop.f32.mrf.mxu0
    %562 = vmatprep.mubr.f32.mxu0 0.0
    %563 = vmatmul.mubr.f32.gmra.mxu0 %v173
    %v564 = vpop.f32.mrf.mxu0
    %v565 = vadd.f32 %v354, %v564
    %v566 = vpop.f32.mrf.mxu0
    %567 = vmatprep.mubr.f32.mxu0 0.0
    %568 = vmatmul.mubr.f32.gmra.mxu0 %v176
    %v569 = vpop.f32.mrf.mxu0
    %v570 = vadd.f32 %v359, %v569
    %v571 = vpop.f32.mrf.mxu0
    %572 = vmatprep.mubr.f32.mxu0 0.0
    %573 = vmatmul.mubr.f32.gmra.mxu0 %v179
    %v574 = vpop.f32.mrf.mxu0
    %v575 = vadd.f32 %v364, %v574
    %v576 = vpop.f32.mrf.mxu0
    %577 = vmatprep.mubr.f32.mxu0 0.0
    %578 = vmatmul.mubr.f32.gmra.mxu0 %v182
    %v579 = vpop.f32.mrf.mxu0
    %v580 = vadd.f32 %v369, %v579
    %v581 = vpop.f32.mrf.mxu0
    %582 = vmatprep.mubr.f32.mxu0 0.0
    %583 = vmatmul.mubr.f32.gmra.mxu0 %v185
    %v584 = vpop.f32.mrf.mxu0
    %v585 = vadd.f32 %v374, %v584
    %v586 = vpop.f32.mrf.mxu0
    %587 = vmatprep.mubr.f32.mxu0 0.0
    %588 = vmatmul.mubr.f32.gmra.mxu0 %v188
    %v589 = vpop.f32.mrf.mxu0
    %v590 = vadd.f32 %v379, %v589
    %v591 = vpop.f32.mrf.mxu0
    %592 = vmatprep.mubr.f32.mxu0 0.0
    %593 = vmatmul.mubr.f32.gmra.mxu0 %v191
    %v594 = vpop.f32.mrf.mxu0
    %v595 = vadd.f32 %v384, %v594
    %v596 = vpop.f32.mrf.mxu0
    %597 = vmatprep.mubr.f32.mxu0 0.0
    %598 = vmatmul.mubr.f32.gmra.mxu0 %v194
    %v599 = vpop.f32.mrf.mxu0
    %v600 = vadd.f32 %v389, %v599
    %v601 = vpop.f32.mrf.mxu0
    %602 = vmatprep.mubr.f32.mxu0 0.0
    %603 = vmatmul.mubr.f32.gmra.mxu0 %v197
    %v604 = vpop.f32.mrf.mxu0
    %v605 = vadd.f32 %v394, %v604
    %v606 = vpop.f32.mrf.mxu0
    %607 = vmatprep.mubr.f32.mxu0 0.0
    %608 = vmatmul.mubr.f32.gmra.mxu0 %v200
    %v609 = vpop.f32.mrf.mxu0
    %v610 = vadd.f32 %v399, %v609
    %v611 = vpop.f32.mrf.mxu0
    %612 = vmatprep.mubr.f32.mxu0 0.0
    %613 = vmatmul.mubr.f32.gmra.mxu0 %v203
    %v614 = vpop.f32.mrf.mxu0
    %v615 = vadd.f32 %v404, %v614
    %v616 = vpop.f32.mrf.mxu0
    %617 = vmatprep.mubr.f32.mxu0 0.0
    %618 = vmatmul.mubr.f32.gmra.mxu0 %v206
    %v619 = vpop.f32.mrf.mxu0
    %v620 = vadd.f32 %v409, %v619
    %v621 = vpop.f32.mrf.mxu0
    %622 = vmatprep.mubr.f32.mxu0 0.0
    %623 = vmatmul.mubr.f32.gmra.mxu0 %v209
    %v624 = vpop.f32.mrf.mxu0
    %v625 = vadd.f32 %v414, %v624
    %v626 = vpop.f32.mrf.mxu0
    %627 = vmatprep.mubr.f32.mxu0 0.0
    %628 = vmatmul.mubr.f32.gmra.mxu0 %v212
    %v629 = vpop.f32.mrf.mxu0
    %v630 = vadd.f32 %v419, %v629
    %v631 = vpop.f32.mrf.mxu0
    %632 = vmatprep.mubr.f32.mxu0 0.0
    %633 = vmatmul.mubr.f32.gmra.mxu0 %v215
    %v634 = vpop.f32.mrf.mxu0
    %v635 = vadd.f32 %v424, %v634
    %v636 = vpop.f32.mrf.mxu0
    %637 = vmatprep.mubr.f32.mxu0 0.0
    %638 = vmatmul.mubr.f32.gmra.mxu0 %v218
    %v639 = vpop.f32.mrf.mxu0
    %v640 = vadd.f32 %v429, %v639
    %v641 = vpop.f32.mrf.mxu0
    %642 = vdwg.mxu0
    %s643 = scalar_lea.vmem [#allocation2], 64
    %v644 = vld [vmem:[%s643] sm:$0xff]
    %v645 = vld [vmem:[%s643 + $0x8] sm:$0xff]
    %v646 = vld [vmem:[%s643 + $0x10] sm:$0xff]
    %v647 = vld [vmem:[%s643 + $0x18] sm:$0x3f]
    %v649 = vsel %vm138, %v128, 0
    %v652 = vsel %vm223, %v647, 0
    %654 = vmatprep.subr.mxu0 0.0
    %655 = vmatpush1.msra.mxu0 0.0
    %656 = vmatprep.subr.mxu0 0.0
    %657 = vmatpush1.msra.mxu0 0.0
    %658 = vmatprep.subr.mxu0 0.0
    %659 = vmatpush1.msra.mxu0 0.0
    %660 = vmatprep.subr.mxu0 0.0
    %661 = vmatpush1.msra.mxu0 0.0
    %662 = vmatprep.subr.mxu0 0.0
    %663 = vmatpush1.msra.mxu0 0.0
    %664 = vmatprep.subr.mxu0 0.0
    %665 = vmatpush1.msra.mxu0 0.0
    %666 = vmatprep.subr.mxu0 0.0
    %667 = vmatpush1.msra.mxu0 0.0
    %668 = vmatprep.subr.mxu0 0.0
    %669 = vmatpush1.msra.mxu0 0.0
    %670 = vmatprep.subr.mxu0 0.0
    %671 = vmatpush1.msra.mxu0 0.0
    %672 = vmatprep.subr.mxu0 0.0
    %673 = vmatpush1.msra.mxu0 0.0
    %674 = vmatprep.subr.mxu0 0.0
    %675 = vmatpush1.msra.mxu0 0.0
    %676 = vmatprep.subr.mxu0 0.0
    %677 = vmatpush1.msra.mxu0 0.0
    %678 = vmatprep.subr.mxu0 0.0
    %679 = vmatpush1.msra.mxu0 %v652
    %680 = vmatprep.subr.mxu0 0.0
    %681 = vmatpush1.msra.mxu0 %v646
    %682 = vmatprep.subr.mxu0 0.0
    %683 = vmatpush1.msra.mxu0 %v645
    %684 = vmatprep.subr.mxu0 0.0
    %685 = vmatpush1.msra.mxu0 %v644
    %686 = vmatprep.subr.mxu0 0.0
    %687 = vmatpush2.msra.mxu0 0.0
    %688 = vmatprep.subr.mxu0 0.0
    %689 = vmatpush2.msra.mxu0 0.0
    %690 = vmatprep.subr.mxu0 0.0
    %691 = vmatpush2.msra.mxu0 0.0
    %692 = vmatprep.subr.mxu0 0.0
    %693 = vmatpush2.msra.mxu0 0.0
    %694 = vmatprep.subr.mxu0 0.0
    %695 = vmatpush2.msra.mxu0 0.0
    %696 = vmatprep.subr.mxu0 0.0
    %697 = vmatpush2.msra.mxu0 0.0
    %698 = vmatprep.subr.mxu0 0.0
    %699 = vmatpush2.msra.mxu0 0.0
    %700 = vmatprep.subr.mxu0 0.0
    %701 = vmatpush2.msra.mxu0 0.0
    %702 = vmatprep.subr.mxu0 0.0
    %703 = vmatpush2.msra.mxu0 0.0
    %704 = vmatprep.subr.mxu0 0.0
    %705 = vmatpush2.msra.mxu0 0.0
    %706 = vmatprep.subr.mxu0 0.0
    %707 = vmatpush2.msra.mxu0 0.0
    %708 = vmatprep.subr.mxu0 0.0
    %709 = vmatpush2.msra.mxu0 0.0
    %710 = vmatprep.subr.mxu0 0.0
    %711 = vmatpush2.msra.mxu0 0.0
    %712 = vmatprep.subr.mxu0 0.0
    %713 = vmatpush2.msra.mxu0 0.0
    %714 = vmatprep.subr.mxu0 0.0
    %715 = vmatpush2.msra.mxu0 0.0
    %716 = vmatprep.subr.mxu0 0.0
    %717 = vmatpush2.msra.mxu0 0.0
    %718 = vmatprep.mubr.f32.mxu0 0.0
    %719 = vmatmul.mubr.f32.gmra.mxu0 %v143
    %v720 = vpop.f32.mrf.mxu0
    %v721 = vadd.f32 0.0, %v720
    %v722 = vpop.f32.mrf.mxu0
    %723 = vmatprep.mubr.f32.mxu0 0.0
    %724 = vmatmul.mubr.f32.gmra.mxu0 %v146
    %v725 = vpop.f32.mrf.mxu0
    %v726 = vadd.f32 0.0, %v725
    %v727 = vpop.f32.mrf.mxu0
    %728 = vmatprep.mubr.f32.mxu0 0.0
    %729 = vmatmul.mubr.f32.gmra.mxu0 %v149
    %v730 = vpop.f32.mrf.mxu0
    %v731 = vadd.f32 0.0, %v730
    %v732 = vpop.f32.mrf.mxu0
    %733 = vmatprep.mubr.f32.mxu0 0.0
    %734 = vmatmul.mubr.f32.gmra.mxu0 %v152
    %v735 = vpop.f32.mrf.mxu0
    %v736 = vadd.f32 0.0, %v735
    %v737 = vpop.f32.mrf.mxu0
    %738 = vmatprep.mubr.f32.mxu0 0.0
    %739 = vmatmul.mubr.f32.gmra.mxu0 %v155
    %v740 = vpop.f32.mrf.mxu0
    %v741 = vadd.f32 0.0, %v740
    %v742 = vpop.f32.mrf.mxu0
    %743 = vmatprep.mubr.f32.mxu0 0.0
    %744 = vmatmul.mubr.f32.gmra.mxu0 %v158
    %v745 = vpop.f32.mrf.mxu0
    %v746 = vadd.f32 0.0, %v745
    %v747 = vpop.f32.mrf.mxu0
    %748 = vmatprep.mubr.f32.mxu0 0.0
    %749 = vmatmul.mubr.f32.gmra.mxu0 %v161
    %v750 = vpop.f32.mrf.mxu0
    %v751 = vadd.f32 0.0, %v750
    %v752 = vpop.f32.mrf.mxu0
    %753 = vmatprep.mubr.f32.mxu0 0.0
    %754 = vmatmul.mubr.f32.gmra.mxu0 %v164
    %v755 = vpop.f32.mrf.mxu0
    %v756 = vadd.f32 0.0, %v755
    %v757 = vpop.f32.mrf.mxu0
    %758 = vmatprep.mubr.f32.mxu0 0.0
    %759 = vmatmul.mubr.f32.gmra.mxu0 %v167
    %v760 = vpop.f32.mrf.mxu0
    %v761 = vadd.f32 0.0, %v760
    %v762 = vpop.f32.mrf.mxu0
    %763 = vmatprep.mubr.f32.mxu0 0.0
    %764 = vmatmul.mubr.f32.gmra.mxu0 %v170
    %v765 = vpop.f32.mrf.mxu0
    %v766 = vadd.f32 0.0, %v765
    %v767 = vpop.f32.mrf.mxu0
    %768 = vmatprep.mubr.f32.mxu0 0.0
    %769 = vmatmul.mubr.f32.gmra.mxu0 %v173
    %v770 = vpop.f32.mrf.mxu0
    %v771 = vadd.f32 0.0, %v770
    %v772 = vpop.f32.mrf.mxu0
    %773 = vmatprep.mubr.f32.mxu0 0.0
    %774 = vmatmul.mubr.f32.gmra.mxu0 %v176
    %v775 = vpop.f32.mrf.mxu0
    %v776 = vadd.f32 0.0, %v775
    %v777 = vpop.f32.mrf.mxu0
    %778 = vmatprep.mubr.f32.mxu0 0.0
    %779 = vmatmul.mubr.f32.gmra.mxu0 %v179
    %v780 = vpop.f32.mrf.mxu0
    %v781 = vadd.f32 0.0, %v780
    %v782 = vpop.f32.mrf.mxu0
    %783 = vmatprep.mubr.f32.mxu0 0.0
    %784 = vmatmul.mubr.f32.gmra.mxu0 %v182
    %v785 = vpop.f32.mrf.mxu0
    %v786 = vadd.f32 0.0, %v785
    %v787 = vpop.f32.mrf.mxu0
    %788 = vmatprep.mubr.f32.mxu0 0.0
    %789 = vmatmul.mubr.f32.gmra.mxu0 %v185
    %v790 = vpop.f32.mrf.mxu0
    %v791 = vadd.f32 0.0, %v790
    %v792 = vpop.f32.mrf.mxu0
    %793 = vmatprep.mubr.f32.mxu0 0.0
    %794 = vmatmul.mubr.f32.gmra.mxu0 %v188
    %v795 = vpop.f32.mrf.mxu0
    %v796 = vadd.f32 0.0, %v795
    %v797 = vpop.f32.mrf.mxu0
    %798 = vmatprep.mubr.f32.mxu0 0.0
    %799 = vmatmul.mubr.f32.gmra.mxu0 %v191
    %v800 = vpop.f32.mrf.mxu0
    %v801 = vadd.f32 0.0, %v800
    %v802 = vpop.f32.mrf.mxu0
    %803 = vmatprep.mubr.f32.mxu0 0.0
    %804 = vmatmul.mubr.f32.gmra.mxu0 %v194
    %v805 = vpop.f32.mrf.mxu0
    %v806 = vadd.f32 0.0, %v805
    %v807 = vpop.f32.mrf.mxu0
    %808 = vmatprep.mubr.f32.mxu0 0.0
    %809 = vmatmul.mubr.f32.gmra.mxu0 %v197
    %v810 = vpop.f32.mrf.mxu0
    %v811 = vadd.f32 0.0, %v810
    %v812 = vpop.f32.mrf.mxu0
    %813 = vmatprep.mubr.f32.mxu0 0.0
    %814 = vmatmul.mubr.f32.gmra.mxu0 %v200
    %v815 = vpop.f32.mrf.mxu0
    %v816 = vadd.f32 0.0, %v815
    %v817 = vpop.f32.mrf.mxu0
    %818 = vmatprep.mubr.f32.mxu0 0.0
    %819 = vmatmul.mubr.f32.gmra.mxu0 %v203
    %v820 = vpop.f32.mrf.mxu0
    %v821 = vadd.f32 0.0, %v820
    %v822 = vpop.f32.mrf.mxu0
    %823 = vmatprep.mubr.f32.mxu0 0.0
    %824 = vmatmul.mubr.f32.gmra.mxu0 %v206
    %v825 = vpop.f32.mrf.mxu0
    %v826 = vadd.f32 0.0, %v825
    %v827 = vpop.f32.mrf.mxu0
    %828 = vmatprep.mubr.f32.mxu0 0.0
    %829 = vmatmul.mubr.f32.gmra.mxu0 %v209
    %v830 = vpop.f32.mrf.mxu0
    %v831 = vadd.f32 0.0, %v830
    %v832 = vpop.f32.mrf.mxu0
    %833 = vmatprep.mubr.f32.mxu0 0.0
    %834 = vmatmul.mubr.f32.gmra.mxu0 %v212
    %v835 = vpop.f32.mrf.mxu0
    %v836 = vadd.f32 0.0, %v835
    %v837 = vpop.f32.mrf.mxu0
    %838 = vmatprep.mubr.f32.mxu0 0.0
    %839 = vmatmul.mubr.f32.gmra.mxu0 %v215
    %v840 = vpop.f32.mrf.mxu0
    %v841 = vadd.f32 0.0, %v840
    %v842 = vpop.f32.mrf.mxu0
    %843 = vmatprep.mubr.f32.mxu0 0.0
    %844 = vmatmul.mubr.f32.gmra.mxu0 %v218
    %v845 = vpop.f32.mrf.mxu0
    %v846 = vadd.f32 0.0, %v845
    %v847 = vpop.f32.mrf.mxu0
    %848 = vmatprep.mubr.f32.mxu0 0.0
    %849 = vmatmul.mubr.f32.gmra.mxu0 %v221
    %v850 = vpop.f32.mrf.mxu0
    %v851 = vadd.f32 0.0, %v850
    %v852 = vpop.f32.mrf.mxu0
    %853 = vmatprep.mubr.f32.mxu0 0.0
    %854 = vmatmul.mubr.f32.gmra.mxu0 %v649
    %v855 = vpop.f32.mrf.mxu0
    %v856 = vadd.f32 0.0, %v855
    %v857 = vpop.f32.mrf.mxu0
    %858 = vdwg.mxu0
    %v859 = vadd.f32 %v505, %v721
    %v860 = vadd.f32 %v510, %v726
    %v861 = vadd.f32 %v515, %v731
    %v862 = vadd.f32 %v520, %v736
    %v863 = vadd.f32 %v525, %v741
    %v864 = vadd.f32 %v530, %v746
    %v865 = vadd.f32 %v535, %v751
    %v866 = vadd.f32 %v540, %v756
    %v867 = vadd.f32 %v545, %v761
    %v868 = vadd.f32 %v550, %v766
    %v869 = vadd.f32 %v555, %v771
    %v870 = vadd.f32 %v560, %v776
    %v871 = vadd.f32 %v565, %v781
    %v872 = vadd.f32 %v570, %v786
    %v873 = vadd.f32 %v575, %v791
    %v874 = vadd.f32 %v580, %v796
    %v875 = vadd.f32 %v585, %v801
    %v876 = vadd.f32 %v590, %v806
    %v877 = vadd.f32 %v595, %v811
    %v878 = vadd.f32 %v600, %v816
    %v879 = vadd.f32 %v605, %v821
    %v880 = vadd.f32 %v610, %v826
    %v881 = vadd.f32 %v615, %v831
    %v882 = vadd.f32 %v620, %v836
    %v883 = vadd.f32 %v625, %v841
    %v884 = vadd.f32 %v630, %v846
    %v885 = vadd.f32 %v635, %v851
    %v886 = vadd.f32 %v640, %v856
    %v887 = vld [vmem:[#allocation4] sm:$0x1]
    %v888 = vlaneseq
    %v889 = vshrl.u32 %v888, 7
    %v890 = vsub.s32 0, %v889
    %v891 = vrot.slane %v887, %v890
    %v892 = vadd.f32 %v859, %v891
    %v893 = vadd.f32 %v860, %v891
    %v894 = vadd.f32 %v861, %v891
    %v895 = vadd.f32 %v862, %v891
    %v896 = vadd.f32 %v863, %v891
    %v897 = vadd.f32 %v864, %v891
    %v898 = vadd.f32 %v865, %v891
    %v899 = vadd.f32 %v866, %v891
    %v900 = vadd.f32 %v867, %v891
    %v901 = vadd.f32 %v868, %v891
    %v902 = vadd.f32 %v869, %v891
    %v903 = vadd.f32 %v870, %v891
    %v904 = vadd.f32 %v871, %v891
    %v905 = vadd.f32 %v872, %v891
    %v906 = vadd.f32 %v873, %v891
    %v907 = vadd.f32 %v874, %v891
    %v908 = vadd.f32 %v875, %v891
    %v909 = vadd.f32 %v876, %v891
    %v910 = vadd.f32 %v877, %v891
    %v911 = vadd.f32 %v878, %v891
    %v912 = vadd.f32 %v879, %v891
    %v913 = vadd.f32 %v880, %v891
    %v914 = vadd.f32 %v881, %v891
    %v915 = vadd.f32 %v882, %v891
    %v916 = vadd.f32 %v883, %v891
    %v917 = vadd.f32 %v884, %v891
    %v918 = vadd.f32 %v885, %v891
    %v919 = vadd.f32 %v886, %v891
    %v920 = vmax.f32 %v892, 0.0
    %v921 = vmax.f32 %v893, 0.0
    %v922 = vmax.f32 %v894, 0.0
    %v923 = vmax.f32 %v895, 0.0
    %v924 = vmax.f32 %v896, 0.0
    %v925 = vmax.f32 %v897, 0.0
    %v926 = vmax.f32 %v898, 0.0
    %v927 = vmax.f32 %v899, 0.0
    %v928 = vmax.f32 %v900, 0.0
    %v929 = vmax.f32 %v901, 0.0
    %v930 = vmax.f32 %v902, 0.0
    %v931 = vmax.f32 %v903, 0.0
    %v932 = vmax.f32 %v904, 0.0
    %v933 = vmax.f32 %v905, 0.0
    %v934 = vmax.f32 %v906, 0.0
    %v935 = vmax.f32 %v907, 0.0
    %v936 = vmax.f32 %v908, 0.0
    %v937 = vmax.f32 %v909, 0.0
    %v938 = vmax.f32 %v910, 0.0
    %v939 = vmax.f32 %v911, 0.0
    %v940 = vmax.f32 %v912, 0.0
    %v941 = vmax.f32 %v913, 0.0
    %v942 = vmax.f32 %v914, 0.0
    %v943 = vmax.f32 %v915, 0.0
    %v944 = vmax.f32 %v916, 0.0
    %v945 = vmax.f32 %v917, 0.0
    %v946 = vmax.f32 %v918, 0.0
    %v947 = vmax.f32 %v919, 0.0
    %v948 = vld [vmem:[#allocation4 + $0x1] sm:$0x1]
    %v949 = vlaneseq
    %v950 = vshrl.u32 %v949, 7
    %v951 = vsub.s32 0, %v950
    %v952 = vrot.slane %v948, %v951
    %v953 = vadd.f32 %v920, %v952
    %v954 = vadd.f32 %v921, %v952
    %v955 = vadd.f32 %v922, %v952
    %v956 = vadd.f32 %v923, %v952
    %v957 = vadd.f32 %v924, %v952
    %v958 = vadd.f32 %v925, %v952
    %v959 = vadd.f32 %v926, %v952
    %v960 = vadd.f32 %v927, %v952
    %v961 = vadd.f32 %v928, %v952
    %v962 = vadd.f32 %v929, %v952
    %v963 = vadd.f32 %v930, %v952
    %v964 = vadd.f32 %v931, %v952
    %v965 = vadd.f32 %v932, %v952
    %v966 = vadd.f32 %v933, %v952
    %v967 = vadd.f32 %v934, %v952
    %v968 = vadd.f32 %v935, %v952
    %v969 = vadd.f32 %v936, %v952
    %v970 = vadd.f32 %v937, %v952
    %v971 = vadd.f32 %v938, %v952
    %v972 = vadd.f32 %v939, %v952
    %v973 = vadd.f32 %v940, %v952
    %v974 = vadd.f32 %v941, %v952
    %v975 = vadd.f32 %v942, %v952
    %v976 = vadd.f32 %v943, %v952
    %v977 = vadd.f32 %v944, %v952
    %v978 = vadd.f32 %v945, %v952
    %v979 = vadd.f32 %v946, %v952
    %v980 = vadd.f32 %v947, %v952
    %v981 = vld [vmem:[%s3] sm:$0xff]
    %v982 = vld [vmem:[%s3 + $0x8] sm:$0xff]
    %v983 = vld [vmem:[%s3 + $0x10] sm:$0xff]
    %v984 = vld [vmem:[%s3 + $0x18] sm:$0xff]
    %v985 = vld [vmem:[%s3 + $0x20] sm:$0xff]
    %v986 = vld [vmem:[%s3 + $0x28] sm:$0xff]
    %v987 = vld [vmem:[%s3 + $0x30] sm:$0xff]
    %v988 = vld [vmem:[%s3 + $0x38] sm:$0xff]
    %v989 = vld [vmem:[%s3 + $0x40] sm:$0xff]
    %v990 = vld [vmem:[%s3 + $0x48] sm:$0xff]
    %v991 = vld [vmem:[%s3 + $0x50] sm:$0xff]
    %v992 = vld [vmem:[%s3 + $0x58] sm:$0xff]
    %v993 = vld [vmem:[%s3 + $0x60] sm:$0xff]
    %v994 = vld [vmem:[%s3 + $0x68] sm:$0xff]
    %v995 = vld [vmem:[%s3 + $0x70] sm:$0xff]
    %v996 = vld [vmem:[%s3 + $0x78] sm:$0xff]
    %v997 = vld [vmem:[%s3 + $0x80] sm:$0xff]
    %v998 = vld [vmem:[%s3 + $0x88] sm:$0xff]
    %v999 = vld [vmem:[%s3 + $0x90] sm:$0xff]
    %v1000 = vld [vmem:[%s3 + $0x98] sm:$0xff]
    %v1001 = vld [vmem:[%s3 + $0xa0] sm:$0xff]
    %v1002 = vld [vmem:[%s3 + $0xa8] sm:$0xff]
    %v1003 = vld [vmem:[%s3 + $0xb0] sm:$0xff]
    %v1004 = vld [vmem:[%s3 + $0xb8] sm:$0xff]
    %v1005 = vld [vmem:[%s3 + $0xc0] sm:$0xff]
    %v1006 = vld [vmem:[%s3 + $0xc8] sm:$0xff]
    %v1007 = vld [vmem:[%s3 + $0xd0] sm:$0xff]
    %v1008 = vld [vmem:[%s3 + $0xd8] sm:$0xff]
    %v1009 = vld [vmem:[%s3 + $0xe0] sm:$0xff]
    %v1010 = vld [vmem:[%s3 + $0xe8] sm:$0xff]
    %s1011 = scalar_lea.vmem %s3, 240
    %v1012 = vld [vmem:[%s1011] sm:$0xff]
    %v1013 = vld [vmem:[%s1011 + $0x8] sm:$0xff]
    %v1014 = vld [vmem:[%s1011 + $0x10] sm:$0xff]
    %v1015 = vld [vmem:[%s1011 + $0x18] sm:$0xff]
    %v1016 = vld [vmem:[%s1011 + $0x20] sm:$0xff]
    %v1017 = vld [vmem:[%s1011 + $0x28] sm:$0xff]
    %v1018 = vld [vmem:[%s1011 + $0x30] sm:$0xff]
    %v1019 = vld [vmem:[%s1011 + $0x38] sm:$0xff]
    %v1020 = vld [vmem:[%s1011 + $0x40] sm:$0xff]
    %v1021 = vld [vmem:[%s1011 + $0x48] sm:$0xff]
    %v1022 = vld [vmem:[%s1011 + $0x50] sm:$0xff]
    %v1023 = vld [vmem:[%s1011 + $0x58] sm:$0xff]
    %v1024 = vld [vmem:[%s1011 + $0x60] sm:$0xff]
    %v1025 = vld [vmem:[%s1011 + $0x68] sm:$0xff]
    %v1026 = vld [vmem:[%s1011 + $0x70] sm:$0xff]
    %v1027 = vld [vmem:[%s1011 + $0x78] sm:$0xff]
    %v1028 = vld [vmem:[%s1011 + $0x80] sm:$0xff]
    %v1029 = vld [vmem:[%s1011 + $0x88] sm:$0xff]
    %v1030 = vld [vmem:[%s1011 + $0x90] sm:$0xff]
    %v1031 = vld [vmem:[%s1011 + $0x98] sm:$0xff]
    %v1032 = vld [vmem:[%s1011 + $0xa0] sm:$0xff]
    %v1033 = vld [vmem:[%s1011 + $0xa8] sm:$0xff]
    %v1034 = vld [vmem:[%s1011 + $0xb0] sm:$0xff]
    %v1035 = vld [vmem:[%s1011 + $0xb8] sm:$0xff]
    %v1036 = vld [vmem:[%s1011 + $0xc0] sm:$0xff]
    %v1037 = vld [vmem:[%s1011 + $0xc8] sm:$0xff]
    %v1038 = vld [vmem:[%s1011 + $0xd0] sm:$0xff]
    %v1039 = vld [vmem:[%s1011 + $0xd8] sm:$0xff]
    %v1040 = vld [vmem:[%s1011 + $0xe0] sm:$0xff]
    %v1041 = vld [vmem:[%s1011 + $0xe8] sm:$0xff]
    %vm1042 = vcmask 982016
    %v1044 = vsel %vm1042, %v953, 0
    %v1047 = vsel %vm1042, %v954, 0
    %v1050 = vsel %vm1042, %v955, 0
    %v1053 = vsel %vm1042, %v956, 0
    %v1056 = vsel %vm1042, %v957, 0
    %v1059 = vsel %vm1042, %v958, 0
    %v1062 = vsel %vm1042, %v959, 0
    %v1065 = vsel %vm1042, %v960, 0
    %v1068 = vsel %vm1042, %v961, 0
    %v1071 = vsel %vm1042, %v962, 0
    %v1074 = vsel %vm1042, %v963, 0
    %v1077 = vsel %vm1042, %v964, 0
    %v1080 = vsel %vm1042, %v965, 0
    %v1083 = vsel %vm1042, %v966, 0
    %v1086 = vsel %vm1042, %v967, 0
    %v1089 = vsel %vm1042, %v968, 0
    %v1092 = vsel %vm1042, %v969, 0
    %v1095 = vsel %vm1042, %v970, 0
    %v1098 = vsel %vm1042, %v971, 0
    %v1101 = vsel %vm1042, %v972, 0
    %v1104 = vsel %vm1042, %v973, 0
    %v1107 = vsel %vm1042, %v974, 0
    %v1110 = vsel %vm1042, %v975, 0
    %v1113 = vsel %vm1042, %v976, 0
    %v1116 = vsel %vm1042, %v977, 0
    %v1119 = vsel %vm1042, %v978, 0
    %v1122 = vsel %vm1042, %v979, 0
    %v1125 = vsel %vm1042, %v980, 0
    %1127 = vmatprep.subr.mxu0 0.0
    %1128 = vmatpush1.msra.mxu0 0.0
    %1129 = vmatprep.subr.mxu0 %v1041
    %1130 = vmatpush1.msra.mxu0 %v1040
    %1131 = vmatprep.subr.mxu0 %v1039
    %1132 = vmatpush1.msra.mxu0 %v1038
    %1133 = vmatprep.subr.mxu0 %v1037
    %1134 = vmatpush1.msra.mxu0 %v1036
    %1135 = vmatprep.subr.mxu0 %v1035
    %1136 = vmatpush1.msra.mxu0 %v1034
    %1137 = vmatprep.subr.mxu0 %v1033
    %1138 = vmatpush1.msra.mxu0 %v1032
    %1139 = vmatprep.subr.mxu0 %v1031
    %1140 = vmatpush1.msra.mxu0 %v1030
    %1141 = vmatprep.subr.mxu0 %v1029
    %1142 = vmatpush1.msra.mxu0 %v1028
    %1143 = vmatprep.subr.mxu0 %v1027
    %1144 = vmatpush1.msra.mxu0 %v1026
    %1145 = vmatprep.subr.mxu0 %v1025
    %1146 = vmatpush1.msra.mxu0 %v1024
    %1147 = vmatprep.subr.mxu0 %v1023
    %1148 = vmatpush1.msra.mxu0 %v1022
    %1149 = vmatprep.subr.mxu0 %v1021
    %1150 = vmatpush1.msra.mxu0 %v1020
    %1151 = vmatprep.subr.mxu0 %v1019
    %1152 = vmatpush1.msra.mxu0 %v1018
    %1153 = vmatprep.subr.mxu0 %v1017
    %1154 = vmatpush1.msra.mxu0 %v1016
    %1155 = vmatprep.subr.mxu0 %v1015
    %1156 = vmatpush1.msra.mxu0 %v1014
    %1157 = vmatprep.subr.mxu0 %v1013
    %1158 = vmatpush1.msra.mxu0 %v1012
    %1159 = vmatprep.subr.mxu0 0.0
    %1160 = vmatpush2.msra.mxu0 0.0
    %1161 = vmatprep.subr.mxu0 0.0
    %1162 = vmatpush2.msra.mxu0 0.0
    %1163 = vmatprep.subr.mxu0 0.0
    %1164 = vmatpush2.msra.mxu0 0.0
    %1165 = vmatprep.subr.mxu0 0.0
    %1166 = vmatpush2.msra.mxu0 0.0
    %1167 = vmatprep.subr.mxu0 0.0
    %1168 = vmatpush2.msra.mxu0 0.0
    %1169 = vmatprep.subr.mxu0 0.0
    %1170 = vmatpush2.msra.mxu0 0.0
    %1171 = vmatprep.subr.mxu0 0.0
    %1172 = vmatpush2.msra.mxu0 0.0
    %1173 = vmatprep.subr.mxu0 0.0
    %1174 = vmatpush2.msra.mxu0 0.0
    %1175 = vmatprep.subr.mxu0 0.0
    %1176 = vmatpush2.msra.mxu0 0.0
    %1177 = vmatprep.subr.mxu0 0.0
    %1178 = vmatpush2.msra.mxu0 0.0
    %1179 = vmatprep.subr.mxu0 0.0
    %1180 = vmatpush2.msra.mxu0 0.0
    %1181 = vmatprep.subr.mxu0 0.0
    %1182 = vmatpush2.msra.mxu0 0.0
    %1183 = vmatprep.subr.mxu0 0.0
    %1184 = vmatpush2.msra.mxu0 0.0
    %1185 = vmatprep.subr.mxu0 0.0
    %1186 = vmatpush2.msra.mxu0 0.0
    %1187 = vmatprep.subr.mxu0 0.0
    %1188 = vmatpush2.msra.mxu0 0.0
    %1189 = vmatprep.subr.mxu0 0.0
    %1190 = vmatpush2.msra.mxu0 0.0
    %1191 = vmatprep.mubr.f32.mxu0 0.0
    %1192 = vmatmul.mubr.f32.gmra.mxu0 %v1044
    %v1193 = vpop.f32.mrf.mxu0
    %v1194 = vadd.f32 0.0, %v1193
    %v1195 = vpop.f32.mrf.mxu0
    %v1196 = vadd.f32 0.0, %v1195
    %1197 = vmatprep.mubr.f32.mxu0 0.0
    %1198 = vmatmul.mubr.f32.gmra.mxu0 %v1047
    %v1199 = vpop.f32.mrf.mxu0
    %v1200 = vadd.f32 0.0, %v1199
    %v1201 = vpop.f32.mrf.mxu0
    %v1202 = vadd.f32 0.0, %v1201
    %1203 = vmatprep.mubr.f32.mxu0 0.0
    %1204 = vmatmul.mubr.f32.gmra.mxu0 %v1050
    %v1205 = vpop.f32.mrf.mxu0
    %v1206 = vadd.f32 0.0, %v1205
    %v1207 = vpop.f32.mrf.mxu0
    %v1208 = vadd.f32 0.0, %v1207
    %1209 = vmatprep.mubr.f32.mxu0 0.0
    %1210 = vmatmul.mubr.f32.gmra.mxu0 %v1053
    %v1211 = vpop.f32.mrf.mxu0
    %v1212 = vadd.f32 0.0, %v1211
    %v1213 = vpop.f32.mrf.mxu0
    %v1214 = vadd.f32 0.0, %v1213
    %1215 = vmatprep.mubr.f32.mxu0 0.0
    %1216 = vmatmul.mubr.f32.gmra.mxu0 %v1056
    %v1217 = vpop.f32.mrf.mxu0
    %v1218 = vadd.f32 0.0, %v1217
    %v1219 = vpop.f32.mrf.mxu0
    %v1220 = vadd.f32 0.0, %v1219
    %1221 = vmatprep.mubr.f32.mxu0 0.0
    %1222 = vmatmul.mubr.f32.gmra.mxu0 %v1059
    %v1223 = vpop.f32.mrf.mxu0
    %v1224 = vadd.f32 0.0, %v1223
    %v1225 = vpop.f32.mrf.mxu0
    %v1226 = vadd.f32 0.0, %v1225
    %1227 = vmatprep.mubr.f32.mxu0 0.0
    %1228 = vmatmul.mubr.f32.gmra.mxu0 %v1062
    %v1229 = vpop.f32.mrf.mxu0
    %v1230 = vadd.f32 0.0, %v1229
    %v1231 = vpop.f32.mrf.mxu0
    %v1232 = vadd.f32 0.0, %v1231
    %1233 = vmatprep.mubr.f32.mxu0 0.0
    %1234 = vmatmul.mubr.f32.gmra.mxu0 %v1065
    %v1235 = vpop.f32.mrf.mxu0
    %v1236 = vadd.f32 0.0, %v1235
    %v1237 = vpop.f32.mrf.mxu0
    %v1238 = vadd.f32 0.0, %v1237
    %1239 = vmatprep.mubr.f32.mxu0 0.0
    %1240 = vmatmul.mubr.f32.gmra.mxu0 %v1068
    %v1241 = vpop.f32.mrf.mxu0
    %v1242 = vadd.f32 0.0, %v1241
    %v1243 = vpop.f32.mrf.mxu0
    %v1244 = vadd.f32 0.0, %v1243
    %1245 = vmatprep.mubr.f32.mxu0 0.0
    %1246 = vmatmul.mubr.f32.gmra.mxu0 %v1071
    %v1247 = vpop.f32.mrf.mxu0
    %v1248 = vadd.f32 0.0, %v1247
    %v1249 = vpop.f32.mrf.mxu0
    %v1250 = vadd.f32 0.0, %v1249
    %1251 = vmatprep.mubr.f32.mxu0 0.0
    %1252 = vmatmul.mubr.f32.gmra.mxu0 %v1074
    %v1253 = vpop.f32.mrf.mxu0
    %v1254 = vadd.f32 0.0, %v1253
    %v1255 = vpop.f32.mrf.mxu0
    %v1256 = vadd.f32 0.0, %v1255
    %1257 = vmatprep.mubr.f32.mxu0 0.0
    %1258 = vmatmul.mubr.f32.gmra.mxu0 %v1077
    %v1259 = vpop.f32.mrf.mxu0
    %v1260 = vadd.f32 0.0, %v1259
    %v1261 = vpop.f32.mrf.mxu0
    %v1262 = vadd.f32 0.0, %v1261
    %1263 = vmatprep.mubr.f32.mxu0 0.0
    %1264 = vmatmul.mubr.f32.gmra.mxu0 %v1080
    %v1265 = vpop.f32.mrf.mxu0
    %v1266 = vadd.f32 0.0, %v1265
    %v1267 = vpop.f32.mrf.mxu0
    %v1268 = vadd.f32 0.0, %v1267
    %1269 = vmatprep.mubr.f32.mxu0 0.0
    %1270 = vmatmul.mubr.f32.gmra.mxu0 %v1083
    %v1271 = vpop.f32.mrf.mxu0
    %v1272 = vadd.f32 0.0, %v1271
    %v1273 = vpop.f32.mrf.mxu0
    %v1274 = vadd.f32 0.0, %v1273
    %1275 = vmatprep.mubr.f32.mxu0 0.0
    %1276 = vmatmul.mubr.f32.gmra.mxu0 %v1086
    %v1277 = vpop.f32.mrf.mxu0
    %v1278 = vadd.f32 0.0, %v1277
    %v1279 = vpop.f32.mrf.mxu0
    %v1280 = vadd.f32 0.0, %v1279
    %1281 = vmatprep.mubr.f32.mxu0 0.0
    %1282 = vmatmul.mubr.f32.gmra.mxu0 %v1089
    %v1283 = vpop.f32.mrf.mxu0
    %v1284 = vadd.f32 0.0, %v1283
    %v1285 = vpop.f32.mrf.mxu0
    %v1286 = vadd.f32 0.0, %v1285
    %1287 = vmatprep.mubr.f32.mxu0 0.0
    %1288 = vmatmul.mubr.f32.gmra.mxu0 %v1092
    %v1289 = vpop.f32.mrf.mxu0
    %v1290 = vadd.f32 0.0, %v1289
    %v1291 = vpop.f32.mrf.mxu0
    %v1292 = vadd.f32 0.0, %v1291
    %1293 = vmatprep.mubr.f32.mxu0 0.0
    %1294 = vmatmul.mubr.f32.gmra.mxu0 %v1095
    %v1295 = vpop.f32.mrf.mxu0
    %v1296 = vadd.f32 0.0, %v1295
    %v1297 = vpop.f32.mrf.mxu0
    %v1298 = vadd.f32 0.0, %v1297
    %1299 = vmatprep.mubr.f32.mxu0 0.0
    %1300 = vmatmul.mubr.f32.gmra.mxu0 %v1098
    %v1301 = vpop.f32.mrf.mxu0
    %v1302 = vadd.f32 0.0, %v1301
    %v1303 = vpop.f32.mrf.mxu0
    %v1304 = vadd.f32 0.0, %v1303
    %1305 = vmatprep.mubr.f32.mxu0 0.0
    %1306 = vmatmul.mubr.f32.gmra.mxu0 %v1101
    %v1307 = vpop.f32.mrf.mxu0
    %v1308 = vadd.f32 0.0, %v1307
    %v1309 = vpop.f32.mrf.mxu0
    %v1310 = vadd.f32 0.0, %v1309
    %1311 = vmatprep.mubr.f32.mxu0 0.0
    %1312 = vmatmul.mubr.f32.gmra.mxu0 %v1104
    %v1313 = vpop.f32.mrf.mxu0
    %v1314 = vadd.f32 0.0, %v1313
    %v1315 = vpop.f32.mrf.mxu0
    %v1316 = vadd.f32 0.0, %v1315
    %1317 = vmatprep.mubr.f32.mxu0 0.0
    %1318 = vmatmul.mubr.f32.gmra.mxu0 %v1107
    %v1319 = vpop.f32.mrf.mxu0
    %v1320 = vadd.f32 0.0, %v1319
    %v1321 = vpop.f32.mrf.mxu0
    %v1322 = vadd.f32 0.0, %v1321
    %1323 = vmatprep.mubr.f32.mxu0 0.0
    %1324 = vmatmul.mubr.f32.gmra.mxu0 %v1110
    %v1325 = vpop.f32.mrf.mxu0
    %v1326 = vadd.f32 0.0, %v1325
    %v1327 = vpop.f32.mrf.mxu0
    %v1328 = vadd.f32 0.0, %v1327
    %1329 = vmatprep.mubr.f32.mxu0 0.0
    %1330 = vmatmul.mubr.f32.gmra.mxu0 %v1113
    %v1331 = vpop.f32.mrf.mxu0
    %v1332 = vadd.f32 0.0, %v1331
    %v1333 = vpop.f32.mrf.mxu0
    %v1334 = vadd.f32 0.0, %v1333
    %1335 = vmatprep.mubr.f32.mxu0 0.0
    %1336 = vmatmul.mubr.f32.gmra.mxu0 %v1116
    %v1337 = vpop.f32.mrf.mxu0
    %v1338 = vadd.f32 0.0, %v1337
    %v1339 = vpop.f32.mrf.mxu0
    %v1340 = vadd.f32 0.0, %v1339
    %1341 = vmatprep.mubr.f32.mxu0 0.0
    %1342 = vmatmul.mubr.f32.gmra.mxu0 %v1119
    %v1343 = vpop.f32.mrf.mxu0
    %v1344 = vadd.f32 0.0, %v1343
    %v1345 = vpop.f32.mrf.mxu0
    %v1346 = vadd.f32 0.0, %v1345
    %1347 = vmatprep.mubr.f32.mxu0 0.0
    %1348 = vmatmul.mubr.f32.gmra.mxu0 %v1122
    %v1349 = vpop.f32.mrf.mxu0
    %v1350 = vadd.f32 0.0, %v1349
    %v1351 = vpop.f32.mrf.mxu0
    %v1352 = vadd.f32 0.0, %v1351
    %1353 = vmatprep.mubr.f32.mxu0 0.0
    %1354 = vmatmul.mubr.f32.gmra.mxu0 %v1125
    %v1355 = vpop.f32.mrf.mxu0
    %v1356 = vadd.f32 0.0, %v1355
    %v1357 = vpop.f32.mrf.mxu0
    %v1358 = vadd.f32 0.0, %v1357
    %1359 = vdwg.mxu0
    %v1361 = vsel %vm1042, 0.0, 0
    %1363 = vmatprep.subr.mxu0 0.0
    %1364 = vmatpush1.msra.mxu0 0.0
    %1365 = vmatprep.subr.mxu0 %v1010
    %1366 = vmatpush1.msra.mxu0 %v1009
    %1367 = vmatprep.subr.mxu0 %v1008
    %1368 = vmatpush1.msra.mxu0 %v1007
    %1369 = vmatprep.subr.mxu0 %v1006
    %1370 = vmatpush1.msra.mxu0 %v1005
    %1371 = vmatprep.subr.mxu0 %v1004
    %1372 = vmatpush1.msra.mxu0 %v1003
    %1373 = vmatprep.subr.mxu0 %v1002
    %1374 = vmatpush1.msra.mxu0 %v1001
    %1375 = vmatprep.subr.mxu0 %v1000
    %1376 = vmatpush1.msra.mxu0 %v999
    %1377 = vmatprep.subr.mxu0 %v998
    %1378 = vmatpush1.msra.mxu0 %v997
    %1379 = vmatprep.subr.mxu0 %v996
    %1380 = vmatpush1.msra.mxu0 %v995
    %1381 = vmatprep.subr.mxu0 %v994
    %1382 = vmatpush1.msra.mxu0 %v993
    %1383 = vmatprep.subr.mxu0 %v992
    %1384 = vmatpush1.msra.mxu0 %v991
    %1385 = vmatprep.subr.mxu0 %v990
    %1386 = vmatpush1.msra.mxu0 %v989
    %1387 = vmatprep.subr.mxu0 %v988
    %1388 = vmatpush1.msra.mxu0 %v987
    %1389 = vmatprep.subr.mxu0 %v986
    %1390 = vmatpush1.msra.mxu0 %v985
    %1391 = vmatprep.subr.mxu0 %v984
    %1392 = vmatpush1.msra.mxu0 %v983
    %1393 = vmatprep.subr.mxu0 %v982
    %1394 = vmatpush1.msra.mxu0 %v981
    %1395 = vmatprep.subr.mxu0 0.0
    %1396 = vmatpush2.msra.mxu0 0.0
    %1397 = vmatprep.subr.mxu0 0.0
    %1398 = vmatpush2.msra.mxu0 0.0
    %1399 = vmatprep.subr.mxu0 0.0
    %1400 = vmatpush2.msra.mxu0 0.0
    %1401 = vmatprep.subr.mxu0 0.0
    %1402 = vmatpush2.msra.mxu0 0.0
    %1403 = vmatprep.subr.mxu0 0.0
    %1404 = vmatpush2.msra.mxu0 0.0
    %1405 = vmatprep.subr.mxu0 0.0
    %1406 = vmatpush2.msra.mxu0 0.0
    %1407 = vmatprep.subr.mxu0 0.0
    %1408 = vmatpush2.msra.mxu0 0.0
    %1409 = vmatprep.subr.mxu0 0.0
    %1410 = vmatpush2.msra.mxu0 0.0
    %1411 = vmatprep.subr.mxu0 0.0
    %1412 = vmatpush2.msra.mxu0 0.0
    %1413 = vmatprep.subr.mxu0 0.0
    %1414 = vmatpush2.msra.mxu0 0.0
    %1415 = vmatprep.subr.mxu0 0.0
    %1416 = vmatpush2.msra.mxu0 0.0
    %1417 = vmatprep.subr.mxu0 0.0
    %1418 = vmatpush2.msra.mxu0 0.0
    %1419 = vmatprep.subr.mxu0 0.0
    %1420 = vmatpush2.msra.mxu0 0.0
    %1421 = vmatprep.subr.mxu0 0.0
    %1422 = vmatpush2.msra.mxu0 0.0
    %1423 = vmatprep.subr.mxu0 0.0
    %1424 = vmatpush2.msra.mxu0 0.0
    %1425 = vmatprep.subr.mxu0 0.0
    %1426 = vmatpush2.msra.mxu0 0.0
    %1427 = vmatprep.mubr.f32.mxu0 0.0
    %1428 = vmatmul.mubr.f32.gmra.mxu0 %v1361
    %v1429 = vpop.f32.mrf.mxu0
    %v1430 = vadd.f32 %v1194, %v1429
    %v1431 = vpop.f32.mrf.mxu0
    %v1432 = vadd.f32 %v1196, %v1431
    %1433 = vmatprep.mubr.f32.mxu0 0.0
    %1434 = vmatmul.mubr.f32.gmra.mxu0 %v1044
    %v1435 = vpop.f32.mrf.mxu0
    %v1436 = vadd.f32 %v1200, %v1435
    %v1437 = vpop.f32.mrf.mxu0
    %v1438 = vadd.f32 %v1202, %v1437
    %1439 = vmatprep.mubr.f32.mxu0 0.0
    %1440 = vmatmul.mubr.f32.gmra.mxu0 %v1047
    %v1441 = vpop.f32.mrf.mxu0
    %v1442 = vadd.f32 %v1206, %v1441
    %v1443 = vpop.f32.mrf.mxu0
    %v1444 = vadd.f32 %v1208, %v1443
    %1445 = vmatprep.mubr.f32.mxu0 0.0
    %1446 = vmatmul.mubr.f32.gmra.mxu0 %v1050
    %v1447 = vpop.f32.mrf.mxu0
    %v1448 = vadd.f32 %v1212, %v1447
    %v1449 = vpop.f32.mrf.mxu0
    %v1450 = vadd.f32 %v1214, %v1449
    %1451 = vmatprep.mubr.f32.mxu0 0.0
    %1452 = vmatmul.mubr.f32.gmra.mxu0 %v1053
    %v1453 = vpop.f32.mrf.mxu0
    %v1454 = vadd.f32 %v1218, %v1453
    %v1455 = vpop.f32.mrf.mxu0
    %v1456 = vadd.f32 %v1220, %v1455
    %1457 = vmatprep.mubr.f32.mxu0 0.0
    %1458 = vmatmul.mubr.f32.gmra.mxu0 %v1056
    %v1459 = vpop.f32.mrf.mxu0
    %v1460 = vadd.f32 %v1224, %v1459
    %v1461 = vpop.f32.mrf.mxu0
    %v1462 = vadd.f32 %v1226, %v1461
    %1463 = vmatprep.mubr.f32.mxu0 0.0
    %1464 = vmatmul.mubr.f32.gmra.mxu0 %v1059
    %v1465 = vpop.f32.mrf.mxu0
    %v1466 = vadd.f32 %v1230, %v1465
    %v1467 = vpop.f32.mrf.mxu0
    %v1468 = vadd.f32 %v1232, %v1467
    %1469 = vmatprep.mubr.f32.mxu0 0.0
    %1470 = vmatmul.mubr.f32.gmra.mxu0 %v1062
    %v1471 = vpop.f32.mrf.mxu0
    %v1472 = vadd.f32 %v1236, %v1471
    %v1473 = vpop.f32.mrf.mxu0
    %v1474 = vadd.f32 %v1238, %v1473
    %1475 = vmatprep.mubr.f32.mxu0 0.0
    %1476 = vmatmul.mubr.f32.gmra.mxu0 %v1065
    %v1477 = vpop.f32.mrf.mxu0
    %v1478 = vadd.f32 %v1242, %v1477
    %v1479 = vpop.f32.mrf.mxu0
    %v1480 = vadd.f32 %v1244, %v1479
    %1481 = vmatprep.mubr.f32.mxu0 0.0
    %1482 = vmatmul.mubr.f32.gmra.mxu0 %v1068
    %v1483 = vpop.f32.mrf.mxu0
    %v1484 = vadd.f32 %v1248, %v1483
    %v1485 = vpop.f32.mrf.mxu0
    %v1486 = vadd.f32 %v1250, %v1485
    %1487 = vmatprep.mubr.f32.mxu0 0.0
    %1488 = vmatmul.mubr.f32.gmra.mxu0 %v1071
    %v1489 = vpop.f32.mrf.mxu0
    %v1490 = vadd.f32 %v1254, %v1489
    %v1491 = vpop.f32.mrf.mxu0
    %v1492 = vadd.f32 %v1256, %v1491
    %1493 = vmatprep.mubr.f32.mxu0 0.0
    %1494 = vmatmul.mubr.f32.gmra.mxu0 %v1074
    %v1495 = vpop.f32.mrf.mxu0
    %v1496 = vadd.f32 %v1260, %v1495
    %v1497 = vpop.f32.mrf.mxu0
    %v1498 = vadd.f32 %v1262, %v1497
    %1499 = vmatprep.mubr.f32.mxu0 0.0
    %1500 = vmatmul.mubr.f32.gmra.mxu0 %v1077
    %v1501 = vpop.f32.mrf.mxu0
    %v1502 = vadd.f32 %v1266, %v1501
    %v1503 = vpop.f32.mrf.mxu0
    %v1504 = vadd.f32 %v1268, %v1503
    %1505 = vmatprep.mubr.f32.mxu0 0.0
    %1506 = vmatmul.mubr.f32.gmra.mxu0 %v1080
    %v1507 = vpop.f32.mrf.mxu0
    %v1508 = vadd.f32 %v1272, %v1507
    %v1509 = vpop.f32.mrf.mxu0
    %v1510 = vadd.f32 %v1274, %v1509
    %1511 = vmatprep.mubr.f32.mxu0 0.0
    %1512 = vmatmul.mubr.f32.gmra.mxu0 %v1083
    %v1513 = vpop.f32.mrf.mxu0
    %v1514 = vadd.f32 %v1278, %v1513
    %v1515 = vpop.f32.mrf.mxu0
    %v1516 = vadd.f32 %v1280, %v1515
    %1517 = vmatprep.mubr.f32.mxu0 0.0
    %1518 = vmatmul.mubr.f32.gmra.mxu0 %v1086
    %v1519 = vpop.f32.mrf.mxu0
    %v1520 = vadd.f32 %v1284, %v1519
    %v1521 = vpop.f32.mrf.mxu0
    %v1522 = vadd.f32 %v1286, %v1521
    %1523 = vmatprep.mubr.f32.mxu0 0.0
    %1524 = vmatmul.mubr.f32.gmra.mxu0 %v1089
    %v1525 = vpop.f32.mrf.mxu0
    %v1526 = vadd.f32 %v1290, %v1525
    %v1527 = vpop.f32.mrf.mxu0
    %v1528 = vadd.f32 %v1292, %v1527
    %1529 = vmatprep.mubr.f32.mxu0 0.0
    %1530 = vmatmul.mubr.f32.gmra.mxu0 %v1092
    %v1531 = vpop.f32.mrf.mxu0
    %v1532 = vadd.f32 %v1296, %v1531
    %v1533 = vpop.f32.mrf.mxu0
    %v1534 = vadd.f32 %v1298, %v1533
    %1535 = vmatprep.mubr.f32.mxu0 0.0
    %1536 = vmatmul.mubr.f32.gmra.mxu0 %v1095
    %v1537 = vpop.f32.mrf.mxu0
    %v1538 = vadd.f32 %v1302, %v1537
    %v1539 = vpop.f32.mrf.mxu0
    %v1540 = vadd.f32 %v1304, %v1539
    %1541 = vmatprep.mubr.f32.mxu0 0.0
    %1542 = vmatmul.mubr.f32.gmra.mxu0 %v1098
    %v1543 = vpop.f32.mrf.mxu0
    %v1544 = vadd.f32 %v1308, %v1543
    %v1545 = vpop.f32.mrf.mxu0
    %v1546 = vadd.f32 %v1310, %v1545
    %1547 = vmatprep.mubr.f32.mxu0 0.0
    %1548 = vmatmul.mubr.f32.gmra.mxu0 %v1101
    %v1549 = vpop.f32.mrf.mxu0
    %v1550 = vadd.f32 %v1314, %v1549
    %v1551 = vpop.f32.mrf.mxu0
    %v1552 = vadd.f32 %v1316, %v1551
    %1553 = vmatprep.mubr.f32.mxu0 0.0
    %1554 = vmatmul.mubr.f32.gmra.mxu0 %v1104
    %v1555 = vpop.f32.mrf.mxu0
    %v1556 = vadd.f32 %v1320, %v1555
    %v1557 = vpop.f32.mrf.mxu0
    %v1558 = vadd.f32 %v1322, %v1557
    %1559 = vmatprep.mubr.f32.mxu0 0.0
    %1560 = vmatmul.mubr.f32.gmra.mxu0 %v1107
    %v1561 = vpop.f32.mrf.mxu0
    %v1562 = vadd.f32 %v1326, %v1561
    %v1563 = vpop.f32.mrf.mxu0
    %v1564 = vadd.f32 %v1328, %v1563
    %1565 = vmatprep.mubr.f32.mxu0 0.0
    %1566 = vmatmul.mubr.f32.gmra.mxu0 %v1110
    %v1567 = vpop.f32.mrf.mxu0
    %v1568 = vadd.f32 %v1332, %v1567
    %v1569 = vpop.f32.mrf.mxu0
    %v1570 = vadd.f32 %v1334, %v1569
    %1571 = vmatprep.mubr.f32.mxu0 0.0
    %1572 = vmatmul.mubr.f32.gmra.mxu0 %v1113
    %v1573 = vpop.f32.mrf.mxu0
    %v1574 = vadd.f32 %v1338, %v1573
    %v1575 = vpop.f32.mrf.mxu0
    %v1576 = vadd.f32 %v1340, %v1575
    %1577 = vmatprep.mubr.f32.mxu0 0.0
    %1578 = vmatmul.mubr.f32.gmra.mxu0 %v1116
    %v1579 = vpop.f32.mrf.mxu0
    %v1580 = vadd.f32 %v1344, %v1579
    %v1581 = vpop.f32.mrf.mxu0
    %v1582 = vadd.f32 %v1346, %v1581
    %1583 = vmatprep.mubr.f32.mxu0 0.0
    %1584 = vmatmul.mubr.f32.gmra.mxu0 %v1119
    %v1585 = vpop.f32.mrf.mxu0
    %v1586 = vadd.f32 %v1350, %v1585
    %v1587 = vpop.f32.mrf.mxu0
    %v1588 = vadd.f32 %v1352, %v1587
    %1589 = vmatprep.mubr.f32.mxu0 0.0
    %1590 = vmatmul.mubr.f32.gmra.mxu0 %v1122
    %v1591 = vpop.f32.mrf.mxu0
    %v1592 = vadd.f32 %v1356, %v1591
    %v1593 = vpop.f32.mrf.mxu0
    %v1594 = vadd.f32 %v1358, %v1593
    %1595 = vdwg.mxu0
    %s1596 = scalar_lea.vmem %s3, 480
    %v1597 = vld [vmem:[%s1596] sm:$0xff]
    %v1598 = vld [vmem:[%s1596 + $0x8] sm:$0xff]
    %v1599 = vld [vmem:[%s1596 + $0x10] sm:$0xff]
    %v1600 = vld [vmem:[%s1596 + $0x18] sm:$0xff]
    %v1601 = vld [vmem:[%s1596 + $0x20] sm:$0xff]
    %v1602 = vld [vmem:[%s1596 + $0x28] sm:$0xff]
    %v1603 = vld [vmem:[%s1596 + $0x30] sm:$0xff]
    %v1604 = vld [vmem:[%s1596 + $0x38] sm:$0xff]
    %v1605 = vld [vmem:[%s1596 + $0x40] sm:$0xff]
    %v1606 = vld [vmem:[%s1596 + $0x48] sm:$0xff]
    %v1607 = vld [vmem:[%s1596 + $0x50] sm:$0xff]
    %v1608 = vld [vmem:[%s1596 + $0x58] sm:$0xff]
    %v1609 = vld [vmem:[%s1596 + $0x60] sm:$0xff]
    %v1610 = vld [vmem:[%s1596 + $0x68] sm:$0xff]
    %v1611 = vld [vmem:[%s1596 + $0x70] sm:$0xff]
    %v1612 = vld [vmem:[%s1596 + $0x78] sm:$0xff]
    %v1613 = vld [vmem:[%s1596 + $0x80] sm:$0xff]
    %v1614 = vld [vmem:[%s1596 + $0x88] sm:$0xff]
    %v1615 = vld [vmem:[%s1596 + $0x90] sm:$0xff]
    %v1616 = vld [vmem:[%s1596 + $0x98] sm:$0xff]
    %v1617 = vld [vmem:[%s1596 + $0xa0] sm:$0xff]
    %v1618 = vld [vmem:[%s1596 + $0xa8] sm:$0xff]
    %v1619 = vld [vmem:[%s1596 + $0xb0] sm:$0xff]
    %v1620 = vld [vmem:[%s1596 + $0xb8] sm:$0xff]
    %v1621 = vld [vmem:[%s1596 + $0xc0] sm:$0xff]
    %v1622 = vld [vmem:[%s1596 + $0xc8] sm:$0xff]
    %v1623 = vld [vmem:[%s1596 + $0xd0] sm:$0xff]
    %v1624 = vld [vmem:[%s1596 + $0xd8] sm:$0xff]
    %v1625 = vld [vmem:[%s1596 + $0xe0] sm:$0xff]
    %v1626 = vld [vmem:[%s1596 + $0xe8] sm:$0xff]
    %1627 = vmatprep.subr.mxu0 0.0
    %1628 = vmatpush1.msra.mxu0 0.0
    %1629 = vmatprep.subr.mxu0 %v1626
    %1630 = vmatpush1.msra.mxu0 %v1625
    %1631 = vmatprep.subr.mxu0 %v1624
    %1632 = vmatpush1.msra.mxu0 %v1623
    %1633 = vmatprep.subr.mxu0 %v1622
    %1634 = vmatpush1.msra.mxu0 %v1621
    %1635 = vmatprep.subr.mxu0 %v1620
    %1636 = vmatpush1.msra.mxu0 %v1619
    %1637 = vmatprep.subr.mxu0 %v1618
    %1638 = vmatpush1.msra.mxu0 %v1617
    %1639 = vmatprep.subr.mxu0 %v1616
    %1640 = vmatpush1.msra.mxu0 %v1615
    %1641 = vmatprep.subr.mxu0 %v1614
    %1642 = vmatpush1.msra.mxu0 %v1613
    %1643 = vmatprep.subr.mxu0 %v1612
    %1644 = vmatpush1.msra.mxu0 %v1611
    %1645 = vmatprep.subr.mxu0 %v1610
    %1646 = vmatpush1.msra.mxu0 %v1609
    %1647 = vmatprep.subr.mxu0 %v1608
    %1648 = vmatpush1.msra.mxu0 %v1607
    %1649 = vmatprep.subr.mxu0 %v1606
    %1650 = vmatpush1.msra.mxu0 %v1605
    %1651 = vmatprep.subr.mxu0 %v1604
    %1652 = vmatpush1.msra.mxu0 %v1603
    %1653 = vmatprep.subr.mxu0 %v1602
    %1654 = vmatpush1.msra.mxu0 %v1601
    %1655 = vmatprep.subr.mxu0 %v1600
    %1656 = vmatpush1.msra.mxu0 %v1599
    %1657 = vmatprep.subr.mxu0 %v1598
    %1658 = vmatpush1.msra.mxu0 %v1597
    %1659 = vmatprep.subr.mxu0 0.0
    %1660 = vmatpush2.msra.mxu0 0.0
    %1661 = vmatprep.subr.mxu0 0.0
    %1662 = vmatpush2.msra.mxu0 0.0
    %1663 = vmatprep.subr.mxu0 0.0
    %1664 = vmatpush2.msra.mxu0 0.0
    %1665 = vmatprep.subr.mxu0 0.0
    %1666 = vmatpush2.msra.mxu0 0.0
    %1667 = vmatprep.subr.mxu0 0.0
    %1668 = vmatpush2.msra.mxu0 0.0
    %1669 = vmatprep.subr.mxu0 0.0
    %1670 = vmatpush2.msra.mxu0 0.0
    %1671 = vmatprep.subr.mxu0 0.0
    %1672 = vmatpush2.msra.mxu0 0.0
    %1673 = vmatprep.subr.mxu0 0.0
    %1674 = vmatpush2.msra.mxu0 0.0
    %1675 = vmatprep.subr.mxu0 0.0
    %1676 = vmatpush2.msra.mxu0 0.0
    %1677 = vmatprep.subr.mxu0 0.0
    %1678 = vmatpush2.msra.mxu0 0.0
    %1679 = vmatprep.subr.mxu0 0.0
    %1680 = vmatpush2.msra.mxu0 0.0
    %1681 = vmatprep.subr.mxu0 0.0
    %1682 = vmatpush2.msra.mxu0 0.0
    %1683 = vmatprep.subr.mxu0 0.0
    %1684 = vmatpush2.msra.mxu0 0.0
    %1685 = vmatprep.subr.mxu0 0.0
    %1686 = vmatpush2.msra.mxu0 0.0
    %1687 = vmatprep.subr.mxu0 0.0
    %1688 = vmatpush2.msra.mxu0 0.0
    %1689 = vmatprep.subr.mxu0 0.0
    %1690 = vmatpush2.msra.mxu0 0.0
    %1691 = vmatprep.mubr.f32.mxu0 0.0
    %1692 = vmatmul.mubr.f32.gmra.mxu0 %v1047
    %v1693 = vpop.f32.mrf.mxu0
    %v1694 = vadd.f32 0.0, %v1693
    %v1695 = vpop.f32.mrf.mxu0
    %v1696 = vadd.f32 0.0, %v1695
    %1697 = vmatprep.mubr.f32.mxu0 0.0
    %1698 = vmatmul.mubr.f32.gmra.mxu0 %v1050
    %v1699 = vpop.f32.mrf.mxu0
    %v1700 = vadd.f32 0.0, %v1699
    %v1701 = vpop.f32.mrf.mxu0
    %v1702 = vadd.f32 0.0, %v1701
    %1703 = vmatprep.mubr.f32.mxu0 0.0
    %1704 = vmatmul.mubr.f32.gmra.mxu0 %v1053
    %v1705 = vpop.f32.mrf.mxu0
    %v1706 = vadd.f32 0.0, %v1705
    %v1707 = vpop.f32.mrf.mxu0
    %v1708 = vadd.f32 0.0, %v1707
    %1709 = vmatprep.mubr.f32.mxu0 0.0
    %1710 = vmatmul.mubr.f32.gmra.mxu0 %v1056
    %v1711 = vpop.f32.mrf.mxu0
    %v1712 = vadd.f32 0.0, %v1711
    %v1713 = vpop.f32.mrf.mxu0
    %v1714 = vadd.f32 0.0, %v1713
    %1715 = vmatprep.mubr.f32.mxu0 0.0
    %1716 = vmatmul.mubr.f32.gmra.mxu0 %v1059
    %v1717 = vpop.f32.mrf.mxu0
    %v1718 = vadd.f32 0.0, %v1717
    %v1719 = vpop.f32.mrf.mxu0
    %v1720 = vadd.f32 0.0, %v1719
    %1721 = vmatprep.mubr.f32.mxu0 0.0
    %1722 = vmatmul.mubr.f32.gmra.mxu0 %v1062
    %v1723 = vpop.f32.mrf.mxu0
    %v1724 = vadd.f32 0.0, %v1723
    %v1725 = vpop.f32.mrf.mxu0
    %v1726 = vadd.f32 0.0, %v1725
    %1727 = vmatprep.mubr.f32.mxu0 0.0
    %1728 = vmatmul.mubr.f32.gmra.mxu0 %v1065
    %v1729 = vpop.f32.mrf.mxu0
    %v1730 = vadd.f32 0.0, %v1729
    %v1731 = vpop.f32.mrf.mxu0
    %v1732 = vadd.f32 0.0, %v1731
    %1733 = vmatprep.mubr.f32.mxu0 0.0
    %1734 = vmatmul.mubr.f32.gmra.mxu0 %v1068
    %v1735 = vpop.f32.mrf.mxu0
    %v1736 = vadd.f32 0.0, %v1735
    %v1737 = vpop.f32.mrf.mxu0
    %v1738 = vadd.f32 0.0, %v1737
    %1739 = vmatprep.mubr.f32.mxu0 0.0
    %1740 = vmatmul.mubr.f32.gmra.mxu0 %v1071
    %v1741 = vpop.f32.mrf.mxu0
    %v1742 = vadd.f32 0.0, %v1741
    %v1743 = vpop.f32.mrf.mxu0
    %v1744 = vadd.f32 0.0, %v1743
    %1745 = vmatprep.mubr.f32.mxu0 0.0
    %1746 = vmatmul.mubr.f32.gmra.mxu0 %v1074
    %v1747 = vpop.f32.mrf.mxu0
    %v1748 = vadd.f32 0.0, %v1747
    %v1749 = vpop.f32.mrf.mxu0
    %v1750 = vadd.f32 0.0, %v1749
    %1751 = vmatprep.mubr.f32.mxu0 0.0
    %1752 = vmatmul.mubr.f32.gmra.mxu0 %v1077
    %v1753 = vpop.f32.mrf.mxu0
    %v1754 = vadd.f32 0.0, %v1753
    %v1755 = vpop.f32.mrf.mxu0
    %v1756 = vadd.f32 0.0, %v1755
    %1757 = vmatprep.mubr.f32.mxu0 0.0
    %1758 = vmatmul.mubr.f32.gmra.mxu0 %v1080
    %v1759 = vpop.f32.mrf.mxu0
    %v1760 = vadd.f32 0.0, %v1759
    %v1761 = vpop.f32.mrf.mxu0
    %v1762 = vadd.f32 0.0, %v1761
    %1763 = vmatprep.mubr.f32.mxu0 0.0
    %1764 = vmatmul.mubr.f32.gmra.mxu0 %v1083
    %v1765 = vpop.f32.mrf.mxu0
    %v1766 = vadd.f32 0.0, %v1765
    %v1767 = vpop.f32.mrf.mxu0
    %v1768 = vadd.f32 0.0, %v1767
    %1769 = vmatprep.mubr.f32.mxu0 0.0
    %1770 = vmatmul.mubr.f32.gmra.mxu0 %v1086
    %v1771 = vpop.f32.mrf.mxu0
    %v1772 = vadd.f32 0.0, %v1771
    %v1773 = vpop.f32.mrf.mxu0
    %v1774 = vadd.f32 0.0, %v1773
    %1775 = vmatprep.mubr.f32.mxu0 0.0
    %1776 = vmatmul.mubr.f32.gmra.mxu0 %v1089
    %v1777 = vpop.f32.mrf.mxu0
    %v1778 = vadd.f32 0.0, %v1777
    %v1779 = vpop.f32.mrf.mxu0
    %v1780 = vadd.f32 0.0, %v1779
    %1781 = vmatprep.mubr.f32.mxu0 0.0
    %1782 = vmatmul.mubr.f32.gmra.mxu0 %v1092
    %v1783 = vpop.f32.mrf.mxu0
    %v1784 = vadd.f32 0.0, %v1783
    %v1785 = vpop.f32.mrf.mxu0
    %v1786 = vadd.f32 0.0, %v1785
    %1787 = vmatprep.mubr.f32.mxu0 0.0
    %1788 = vmatmul.mubr.f32.gmra.mxu0 %v1095
    %v1789 = vpop.f32.mrf.mxu0
    %v1790 = vadd.f32 0.0, %v1789
    %v1791 = vpop.f32.mrf.mxu0
    %v1792 = vadd.f32 0.0, %v1791
    %1793 = vmatprep.mubr.f32.mxu0 0.0
    %1794 = vmatmul.mubr.f32.gmra.mxu0 %v1098
    %v1795 = vpop.f32.mrf.mxu0
    %v1796 = vadd.f32 0.0, %v1795
    %v1797 = vpop.f32.mrf.mxu0
    %v1798 = vadd.f32 0.0, %v1797
    %1799 = vmatprep.mubr.f32.mxu0 0.0
    %1800 = vmatmul.mubr.f32.gmra.mxu0 %v1101
    %v1801 = vpop.f32.mrf.mxu0
    %v1802 = vadd.f32 0.0, %v1801
    %v1803 = vpop.f32.mrf.mxu0
    %v1804 = vadd.f32 0.0, %v1803
    %1805 = vmatprep.mubr.f32.mxu0 0.0
    %1806 = vmatmul.mubr.f32.gmra.mxu0 %v1104
    %v1807 = vpop.f32.mrf.mxu0
    %v1808 = vadd.f32 0.0, %v1807
    %v1809 = vpop.f32.mrf.mxu0
    %v1810 = vadd.f32 0.0, %v1809
    %1811 = vmatprep.mubr.f32.mxu0 0.0
    %1812 = vmatmul.mubr.f32.gmra.mxu0 %v1107
    %v1813 = vpop.f32.mrf.mxu0
    %v1814 = vadd.f32 0.0, %v1813
    %v1815 = vpop.f32.mrf.mxu0
    %v1816 = vadd.f32 0.0, %v1815
    %1817 = vmatprep.mubr.f32.mxu0 0.0
    %1818 = vmatmul.mubr.f32.gmra.mxu0 %v1110
    %v1819 = vpop.f32.mrf.mxu0
    %v1820 = vadd.f32 0.0, %v1819
    %v1821 = vpop.f32.mrf.mxu0
    %v1822 = vadd.f32 0.0, %v1821
    %1823 = vmatprep.mubr.f32.mxu0 0.0
    %1824 = vmatmul.mubr.f32.gmra.mxu0 %v1113
    %v1825 = vpop.f32.mrf.mxu0
    %v1826 = vadd.f32 0.0, %v1825
    %v1827 = vpop.f32.mrf.mxu0
    %v1828 = vadd.f32 0.0, %v1827
    %1829 = vmatprep.mubr.f32.mxu0 0.0
    %1830 = vmatmul.mubr.f32.gmra.mxu0 %v1116
    %v1831 = vpop.f32.mrf.mxu0
    %v1832 = vadd.f32 0.0, %v1831
    %v1833 = vpop.f32.mrf.mxu0
    %v1834 = vadd.f32 0.0, %v1833
    %1835 = vmatprep.mubr.f32.mxu0 0.0
    %1836 = vmatmul.mubr.f32.gmra.mxu0 %v1119
    %v1837 = vpop.f32.mrf.mxu0
    %v1838 = vadd.f32 0.0, %v1837
    %v1839 = vpop.f32.mrf.mxu0
    %v1840 = vadd.f32 0.0, %v1839
    %1841 = vmatprep.mubr.f32.mxu0 0.0
    %1842 = vmatmul.mubr.f32.gmra.mxu0 %v1122
    %v1843 = vpop.f32.mrf.mxu0
    %v1844 = vadd.f32 0.0, %v1843
    %v1845 = vpop.f32.mrf.mxu0
    %v1846 = vadd.f32 0.0, %v1845
    %1847 = vmatprep.mubr.f32.mxu0 0.0
    %1848 = vmatmul.mubr.f32.gmra.mxu0 %v1125
    %v1849 = vpop.f32.mrf.mxu0
    %v1850 = vadd.f32 0.0, %v1849
    %v1851 = vpop.f32.mrf.mxu0
    %v1852 = vadd.f32 0.0, %v1851
    %1853 = vmatprep.mubr.f32.mxu0 0.0
    %1854 = vmatmul.mubr.f32.gmra.mxu0 %v1361
    %v1855 = vpop.f32.mrf.mxu0
    %v1856 = vadd.f32 0.0, %v1855
    %v1857 = vpop.f32.mrf.mxu0
    %v1858 = vadd.f32 0.0, %v1857
    %1859 = vdwg.mxu0
    %v1860 = vadd.f32 %v1430, %v1694
    %v1861 = vadd.f32 %v1432, %v1696
    %v1862 = vadd.f32 %v1436, %v1700
    %v1863 = vadd.f32 %v1438, %v1702
    %v1864 = vadd.f32 %v1442, %v1706
    %v1865 = vadd.f32 %v1444, %v1708
    %v1866 = vadd.f32 %v1448, %v1712
    %v1867 = vadd.f32 %v1450, %v1714
    %v1868 = vadd.f32 %v1454, %v1718
    %v1869 = vadd.f32 %v1456, %v1720
    %v1870 = vadd.f32 %v1460, %v1724
    %v1871 = vadd.f32 %v1462, %v1726
    %v1872 = vadd.f32 %v1466, %v1730
    %v1873 = vadd.f32 %v1468, %v1732
    %v1874 = vadd.f32 %v1472, %v1736
    %v1875 = vadd.f32 %v1474, %v1738
    %v1876 = vadd.f32 %v1478, %v1742
    %v1877 = vadd.f32 %v1480, %v1744
    %v1878 = vadd.f32 %v1484, %v1748
    %v1879 = vadd.f32 %v1486, %v1750
    %v1880 = vadd.f32 %v1490, %v1754
    %v1881 = vadd.f32 %v1492, %v1756
    %v1882 = vadd.f32 %v1496, %v1760
    %v1883 = vadd.f32 %v1498, %v1762
    %v1884 = vadd.f32 %v1502, %v1766
    %v1885 = vadd.f32 %v1504, %v1768
    %v1886 = vadd.f32 %v1508, %v1772
    %v1887 = vadd.f32 %v1510, %v1774
    %v1888 = vadd.f32 %v1514, %v1778
    %v1889 = vadd.f32 %v1516, %v1780
    %v1890 = vadd.f32 %v1520, %v1784
    %v1891 = vadd.f32 %v1522, %v1786
    %v1892 = vadd.f32 %v1526, %v1790
    %v1893 = vadd.f32 %v1528, %v1792
    %v1894 = vadd.f32 %v1532, %v1796
    %v1895 = vadd.f32 %v1534, %v1798
    %v1896 = vadd.f32 %v1538, %v1802
    %v1897 = vadd.f32 %v1540, %v1804
    %v1898 = vadd.f32 %v1544, %v1808
    %v1899 = vadd.f32 %v1546, %v1810
    %v1900 = vadd.f32 %v1550, %v1814
    %v1901 = vadd.f32 %v1552, %v1816
    %v1902 = vadd.f32 %v1556, %v1820
    %v1903 = vadd.f32 %v1558, %v1822
    %v1904 = vadd.f32 %v1562, %v1826
    %v1905 = vadd.f32 %v1564, %v1828
    %v1906 = vadd.f32 %v1568, %v1832
    %v1907 = vadd.f32 %v1570, %v1834
    %v1908 = vadd.f32 %v1574, %v1838
    %v1909 = vadd.f32 %v1576, %v1840
    %v1910 = vadd.f32 %v1580, %v1844
    %v1911 = vadd.f32 %v1582, %v1846
    %v1912 = vadd.f32 %v1586, %v1850
    %v1913 = vadd.f32 %v1588, %v1852
    %v1914 = vadd.f32 %v1592, %v1856
    %v1915 = vadd.f32 %v1594, %v1858
    %v1916 = vld [vmem:[%s4] ss:$2 sm:$0x3]
    %v1918 = vlaneseq
    %v1919 = vshrl.u32 %v1918, 7
    %v1920 = vsub.s32 0, %v1919
    %v1921 = vrot.slane %v1916, %v1920
    %v1922 = vlaneseq
    %v1923 = vshrl.u32 %v1922, 7
    %v1924 = vsub.s32 1, %v1923
    %v1925 = vrot.slane %v1916, %v1924
    %v1928 = vadd.f32 %v1860, %v1921
    %v1929 = vadd.f32 %v1861, %v1925
    %v1930 = vadd.f32 %v1862, %v1921
    %v1931 = vadd.f32 %v1863, %v1925
    %v1932 = vadd.f32 %v1864, %v1921
    %v1933 = vadd.f32 %v1865, %v1925
    %v1934 = vadd.f32 %v1866, %v1921
    %v1935 = vadd.f32 %v1867, %v1925
    %v1936 = vadd.f32 %v1868, %v1921
    %v1937 = vadd.f32 %v1869, %v1925
    %v1938 = vadd.f32 %v1870, %v1921
    %v1939 = vadd.f32 %v1871, %v1925
    %v1940 = vadd.f32 %v1872, %v1921
    %v1941 = vadd.f32 %v1873, %v1925
    %v1942 = vadd.f32 %v1874, %v1921
    %v1943 = vadd.f32 %v1875, %v1925
    %v1944 = vadd.f32 %v1876, %v1921
    %v1945 = vadd.f32 %v1877, %v1925
    %v1946 = vadd.f32 %v1878, %v1921
    %v1947 = vadd.f32 %v1879, %v1925
    %v1948 = vadd.f32 %v1880, %v1921
    %v1949 = vadd.f32 %v1881, %v1925
    %v1950 = vadd.f32 %v1882, %v1921
    %v1951 = vadd.f32 %v1883, %v1925
    %v1952 = vadd.f32 %v1884, %v1921
    %v1953 = vadd.f32 %v1885, %v1925
    %v1954 = vadd.f32 %v1886, %v1921
    %v1955 = vadd.f32 %v1887, %v1925
    %v1956 = vadd.f32 %v1888, %v1921
    %v1957 = vadd.f32 %v1889, %v1925
    %v1958 = vadd.f32 %v1890, %v1921
    %v1959 = vadd.f32 %v1891, %v1925
    %v1960 = vadd.f32 %v1892, %v1921
    %v1961 = vadd.f32 %v1893, %v1925
    %v1962 = vadd.f32 %v1894, %v1921
    %v1963 = vadd.f32 %v1895, %v1925
    %v1964 = vadd.f32 %v1896, %v1921
    %v1965 = vadd.f32 %v1897, %v1925
    %v1966 = vadd.f32 %v1898, %v1921
    %v1967 = vadd.f32 %v1899, %v1925
    %v1968 = vadd.f32 %v1900, %v1921
    %v1969 = vadd.f32 %v1901, %v1925
    %v1970 = vadd.f32 %v1902, %v1921
    %v1971 = vadd.f32 %v1903, %v1925
    %v1972 = vadd.f32 %v1904, %v1921
    %v1973 = vadd.f32 %v1905, %v1925
    %v1974 = vadd.f32 %v1906, %v1921
    %v1975 = vadd.f32 %v1907, %v1925
    %v1976 = vadd.f32 %v1908, %v1921
    %v1977 = vadd.f32 %v1909, %v1925
    %v1978 = vadd.f32 %v1910, %v1921
    %v1979 = vadd.f32 %v1911, %v1925
    %v1980 = vadd.f32 %v1912, %v1921
    %v1981 = vadd.f32 %v1913, %v1925
    %v1982 = vadd.f32 %v1914, %v1921
    %v1983 = vadd.f32 %v1915, %v1925
    %v1984 = vmax.f32 %v1928, 0.0
    %v1985 = vmax.f32 %v1929, 0.0
    %v1986 = vmax.f32 %v1930, 0.0
    %v1987 = vmax.f32 %v1931, 0.0
    %v1988 = vmax.f32 %v1932, 0.0
    %v1989 = vmax.f32 %v1933, 0.0
    %v1990 = vmax.f32 %v1934, 0.0
    %v1991 = vmax.f32 %v1935, 0.0
    %v1992 = vmax.f32 %v1936, 0.0
    %v1993 = vmax.f32 %v1937, 0.0
    %v1994 = vmax.f32 %v1938, 0.0
    %v1995 = vmax.f32 %v1939, 0.0
    %v1996 = vmax.f32 %v1940, 0.0
    %v1997 = vmax.f32 %v1941, 0.0
    %v1998 = vmax.f32 %v1942, 0.0
    %v1999 = vmax.f32 %v1943, 0.0
    %v2000 = vmax.f32 %v1944, 0.0
    %v2001 = vmax.f32 %v1945, 0.0
    %v2002 = vmax.f32 %v1946, 0.0
    %v2003 = vmax.f32 %v1947, 0.0
    %v2004 = vmax.f32 %v1948, 0.0
    %v2005 = vmax.f32 %v1949, 0.0
    %v2006 = vmax.f32 %v1950, 0.0
    %v2007 = vmax.f32 %v1951, 0.0
    %v2008 = vmax.f32 %v1952, 0.0
    %v2009 = vmax.f32 %v1953, 0.0
    %v2010 = vmax.f32 %v1954, 0.0
    %v2011 = vmax.f32 %v1955, 0.0
    %v2012 = vmax.f32 %v1956, 0.0
    %v2013 = vmax.f32 %v1957, 0.0
    %v2014 = vmax.f32 %v1958, 0.0
    %v2015 = vmax.f32 %v1959, 0.0
    %v2016 = vmax.f32 %v1960, 0.0
    %v2017 = vmax.f32 %v1961, 0.0
    %v2018 = vmax.f32 %v1962, 0.0
    %v2019 = vmax.f32 %v1963, 0.0
    %v2020 = vmax.f32 %v1964, 0.0
    %v2021 = vmax.f32 %v1965, 0.0
    %v2022 = vmax.f32 %v1966, 0.0
    %v2023 = vmax.f32 %v1967, 0.0
    %v2024 = vmax.f32 %v1968, 0.0
    %v2025 = vmax.f32 %v1969, 0.0
    %v2026 = vmax.f32 %v1970, 0.0
    %v2027 = vmax.f32 %v1971, 0.0
    %v2028 = vmax.f32 %v1972, 0.0
    %v2029 = vmax.f32 %v1973, 0.0
    %v2030 = vmax.f32 %v1974, 0.0
    %v2031 = vmax.f32 %v1975, 0.0
    %v2032 = vmax.f32 %v1976, 0.0
    %v2033 = vmax.f32 %v1977, 0.0
    %v2034 = vmax.f32 %v1978, 0.0
    %v2035 = vmax.f32 %v1979, 0.0
    %v2036 = vmax.f32 %v1980, 0.0
    %v2037 = vmax.f32 %v1981, 0.0
    %v2038 = vmax.f32 %v1982, 0.0
    %v2039 = vmax.f32 %v1983, 0.0
    %s2040 = scalar_lea.vmem %s4, 1
    %v2041 = vld [vmem:[%s2040] ss:$2 sm:$0x3]
    %v2043 = vlaneseq
    %v2044 = vshrl.u32 %v2043, 7
    %v2045 = vsub.s32 0, %v2044
    %v2046 = vrot.slane %v2041, %v2045
    %v2047 = vlaneseq
    %v2048 = vshrl.u32 %v2047, 7
    %v2049 = vsub.s32 1, %v2048
    %v2050 = vrot.slane %v2041, %v2049
    %v2053 = vadd.f32 %v1984, %v2046
    %v2054 = vadd.f32 %v1985, %v2050
    %v2055 = vadd.f32 %v1986, %v2046
    %v2056 = vadd.f32 %v1987, %v2050
    %v2057 = vadd.f32 %v1988, %v2046
    %v2058 = vadd.f32 %v1989, %v2050
    %v2059 = vadd.f32 %v1990, %v2046
    %v2060 = vadd.f32 %v1991, %v2050
    %v2061 = vadd.f32 %v1992, %v2046
    %v2062 = vadd.f32 %v1993, %v2050
    %v2063 = vadd.f32 %v1994, %v2046
    %v2064 = vadd.f32 %v1995, %v2050
    %v2065 = vadd.f32 %v1996, %v2046
    %v2066 = vadd.f32 %v1997, %v2050
    %v2067 = vadd.f32 %v1998, %v2046
    %v2068 = vadd.f32 %v1999, %v2050
    %v2069 = vadd.f32 %v2000, %v2046
    %v2070 = vadd.f32 %v2001, %v2050
    %v2071 = vadd.f32 %v2002, %v2046
    %v2072 = vadd.f32 %v2003, %v2050
    %v2073 = vadd.f32 %v2004, %v2046
    %v2074 = vadd.f32 %v2005, %v2050
    %v2075 = vadd.f32 %v2006, %v2046
    %v2076 = vadd.f32 %v2007, %v2050
    %v2077 = vadd.f32 %v2008, %v2046
    %v2078 = vadd.f32 %v2009, %v2050
    %v2079 = vadd.f32 %v2010, %v2046
    %v2080 = vadd.f32 %v2011, %v2050
    %v2081 = vadd.f32 %v2012, %v2046
    %v2082 = vadd.f32 %v2013, %v2050
    %v2083 = vadd.f32 %v2014, %v2046
    %v2084 = vadd.f32 %v2015, %v2050
    %v2085 = vadd.f32 %v2016, %v2046
    %v2086 = vadd.f32 %v2017, %v2050
    %v2087 = vadd.f32 %v2018, %v2046
    %v2088 = vadd.f32 %v2019, %v2050
    %v2089 = vadd.f32 %v2020, %v2046
    %v2090 = vadd.f32 %v2021, %v2050
    %v2091 = vadd.f32 %v2022, %v2046
    %v2092 = vadd.f32 %v2023, %v2050
    %v2093 = vadd.f32 %v2024, %v2046
    %v2094 = vadd.f32 %v2025, %v2050
    %v2095 = vadd.f32 %v2026, %v2046
    %v2096 = vadd.f32 %v2027, %v2050
    %v2097 = vadd.f32 %v2028, %v2046
    %v2098 = vadd.f32 %v2029, %v2050
    %v2099 = vadd.f32 %v2030, %v2046
    %v2100 = vadd.f32 %v2031, %v2050
    %v2101 = vadd.f32 %v2032, %v2046
    %v2102 = vadd.f32 %v2033, %v2050
    %v2103 = vadd.f32 %v2034, %v2046
    %v2104 = vadd.f32 %v2035, %v2050
    %v2105 = vadd.f32 %v2036, %v2046
    %v2106 = vadd.f32 %v2037, %v2050
    %v2107 = vadd.f32 %v2038, %v2046
    %v2108 = vadd.f32 %v2039, %v2050
    %v2109 = vmax.f32 %v2053, %v2055
    %v2110 = vmax.f32 %v2054, %v2056
    %v2111 = vmax.f32 %v2057, %v2059
    %v2112 = vmax.f32 %v2058, %v2060
    %v2113 = vmax.f32 %v2061, %v2063
    %v2114 = vmax.f32 %v2062, %v2064
    %v2115 = vmax.f32 %v2065, %v2067
    %v2116 = vmax.f32 %v2066, %v2068
    %v2117 = vmax.f32 %v2069, %v2071
    %v2118 = vmax.f32 %v2070, %v2072
    %v2119 = vmax.f32 %v2073, %v2075
    %v2120 = vmax.f32 %v2074, %v2076
    %v2121 = vmax.f32 %v2077, %v2079
    %v2122 = vmax.f32 %v2078, %v2080
    %v2123 = vmax.f32 %v2081, %v2083
    %v2124 = vmax.f32 %v2082, %v2084
    %v2125 = vmax.f32 %v2085, %v2087
    %v2126 = vmax.f32 %v2086, %v2088
    %v2127 = vmax.f32 %v2089, %v2091
    %v2128 = vmax.f32 %v2090, %v2092
    %v2129 = vmax.f32 %v2093, %v2095
    %v2130 = vmax.f32 %v2094, %v2096
    %v2131 = vmax.f32 %v2097, %v2099
    %v2132 = vmax.f32 %v2098, %v2100
    %v2133 = vmax.f32 %v2101, %v2103
    %v2134 = vmax.f32 %v2102, %v2104
    %v2135 = vmax.f32 %v2105, %v2107
    %v2136 = vmax.f32 %v2106, %v2108
    %v2137 = vmax.f32 %v2109, %v2110
    %v2138 = vmax.f32 %v2111, %v2112
    %v2139 = vmax.f32 %v2113, %v2114
    %v2140 = vmax.f32 %v2115, %v2116
    %v2141 = vmax.f32 %v2117, %v2118
    %v2142 = vmax.f32 %v2119, %v2120
    %v2143 = vmax.f32 %v2121, %v2122
    %v2144 = vmax.f32 %v2123, %v2124
    %v2145 = vmax.f32 %v2125, %v2126
    %v2146 = vmax.f32 %v2127, %v2128
    %v2147 = vmax.f32 %v2129, %v2130
    %v2148 = vmax.f32 %v2131, %v2132
    %v2149 = vmax.f32 %v2133, %v2134
    %v2150 = vmax.f32 %v2135, %v2136
    %v2151 = vld [vmem:[%s5] sm:$0xff]
    %v2152 = vld [vmem:[%s5 + $0x8] sm:$0xff]
    %v2153 = vld [vmem:[%s5 + $0x10] sm:$0xff]
    %v2154 = vld [vmem:[%s5 + $0x18] sm:$0xff]
    %v2155 = vld [vmem:[%s5 + $0x20] sm:$0xff]
    %v2156 = vld [vmem:[%s5 + $0x28] sm:$0xff]
    %v2157 = vld [vmem:[%s5 + $0x30] sm:$0xff]
    %v2158 = vld [vmem:[%s5 + $0x38] sm:$0xff]
    %v2159 = vld [vmem:[%s5 + $0x40] sm:$0xff]
    %v2160 = vld [vmem:[%s5 + $0x48] sm:$0xff]
    %v2161 = vld [vmem:[%s5 + $0x50] sm:$0xff]
    %v2162 = vld [vmem:[%s5 + $0x58] sm:$0xff]
    %v2163 = vld [vmem:[%s5 + $0x60] sm:$0xff]
    %v2164 = vld [vmem:[%s5 + $0x68] sm:$0xff]
    %v2165 = vld [vmem:[%s5 + $0x70] sm:$0xff]
    %v2166 = vld [vmem:[%s5 + $0x78] sm:$0xff]
    %v2167 = vld [vmem:[%s5 + $0x80] sm:$0xff]
    %v2168 = vld [vmem:[%s5 + $0x88] sm:$0xff]
    %v2169 = vld [vmem:[%s5 + $0x90] sm:$0xff]
    %v2170 = vld [vmem:[%s5 + $0x98] sm:$0xff]
    %v2171 = vld [vmem:[%s5 + $0xa0] sm:$0xff]
    %v2172 = vld [vmem:[%s5 + $0xa8] sm:$0xff]
    %v2173 = vld [vmem:[%s5 + $0xb0] sm:$0xff]
    %v2174 = vld [vmem:[%s5 + $0xb8] sm:$0xff]
    %v2175 = vld [vmem:[%s5 + $0xc0] sm:$0xff]
    %v2176 = vld [vmem:[%s5 + $0xc8] sm:$0xff]
    %v2177 = vld [vmem:[%s5 + $0xd0] sm:$0xff]
    %v2178 = vld [vmem:[%s5 + $0xd8] sm:$0xff]
    %s2179 = scalar_lea.vmem %s5, 224
    %v2180 = vld [vmem:[%s2179] sm:$0xff]
    %v2181 = vld [vmem:[%s2179 + $0x8] sm:$0xff]
    %v2182 = vld [vmem:[%s2179 + $0x10] sm:$0xff]
    %v2183 = vld [vmem:[%s2179 + $0x18] sm:$0xff]
    %v2184 = vld [vmem:[%s2179 + $0x20] sm:$0xff]
    %v2185 = vld [vmem:[%s2179 + $0x28] sm:$0xff]
    %v2186 = vld [vmem:[%s2179 + $0x30] sm:$0xff]
    %v2187 = vld [vmem:[%s2179 + $0x38] sm:$0xff]
    %v2188 = vld [vmem:[%s2179 + $0x40] sm:$0xff]
    %v2189 = vld [vmem:[%s2179 + $0x48] sm:$0xff]
    %v2190 = vld [vmem:[%s2179 + $0x50] sm:$0xff]
    %v2191 = vld [vmem:[%s2179 + $0x58] sm:$0xff]
    %v2192 = vld [vmem:[%s2179 + $0x60] sm:$0xff]
    %v2193 = vld [vmem:[%s2179 + $0x68] sm:$0xff]
    %v2194 = vld [vmem:[%s2179 + $0x70] sm:$0xff]
    %v2195 = vld [vmem:[%s2179 + $0x78] sm:$0xff]
    %v2196 = vld [vmem:[%s2179 + $0x80] sm:$0xff]
    %v2197 = vld [vmem:[%s2179 + $0x88] sm:$0xff]
    %v2198 = vld [vmem:[%s2179 + $0x90] sm:$0xff]
    %v2199 = vld [vmem:[%s2179 + $0x98] sm:$0xff]
    %v2200 = vld [vmem:[%s2179 + $0xa0] sm:$0xff]
    %v2201 = vld [vmem:[%s2179 + $0xa8] sm:$0xff]
    %v2202 = vld [vmem:[%s2179 + $0xb0] sm:$0xff]
    %v2203 = vld [vmem:[%s2179 + $0xb8] sm:$0xff]
    %v2204 = vld [vmem:[%s2179 + $0xc0] sm:$0xff]
    %v2205 = vld [vmem:[%s2179 + $0xc8] sm:$0xff]
    %v2206 = vld [vmem:[%s2179 + $0xd0] sm:$0xff]
    %v2207 = vld [vmem:[%s2179 + $0xd8] sm:$0xff]
    %vm2208 = vcmask 916480
    %v2210 = vsel %vm2208, %v2138, 0
    %v2213 = vsel %vm2208, %v2139, 0
    %v2216 = vsel %vm2208, %v2140, 0
    %v2219 = vsel %vm2208, %v2141, 0
    %v2222 = vsel %vm2208, %v2142, 0
    %v2225 = vsel %vm2208, %v2143, 0
    %v2228 = vsel %vm2208, %v2144, 0
    %v2231 = vsel %vm2208, %v2145, 0
    %v2234 = vsel %vm2208, %v2146, 0
    %v2237 = vsel %vm2208, %v2147, 0
    %v2240 = vsel %vm2208, %v2148, 0
    %v2243 = vsel %vm2208, %v2149, 0
    %2245 = vmatprep.subr.mxu0 0.0
    %2246 = vmatpush1.msra.mxu0 0.0
    %2247 = vmatprep.subr.mxu0 0.0
    %2248 = vmatpush1.msra.mxu0 0.0
    %2249 = vmatprep.subr.mxu0 %v2207
    %2250 = vmatpush1.msra.mxu0 %v2206
    %2251 = vmatprep.subr.mxu0 %v2205
    %2252 = vmatpush1.msra.mxu0 %v2204
    %2253 = vmatprep.subr.mxu0 %v2203
    %2254 = vmatpush1.msra.mxu0 %v2202
    %2255 = vmatprep.subr.mxu0 %v2201
    %2256 = vmatpush1.msra.mxu0 %v2200
    %2257 = vmatprep.subr.mxu0 %v2199
    %2258 = vmatpush1.msra.mxu0 %v2198
    %2259 = vmatprep.subr.mxu0 %v2197
    %2260 = vmatpush1.msra.mxu0 %v2196
    %2261 = vmatprep.subr.mxu0 %v2195
    %2262 = vmatpush1.msra.mxu0 %v2194
    %2263 = vmatprep.subr.mxu0 %v2193
    %2264 = vmatpush1.msra.mxu0 %v2192
    %2265 = vmatprep.subr.mxu0 %v2191
    %2266 = vmatpush1.msra.mxu0 %v2190
    %2267 = vmatprep.subr.mxu0 %v2189
    %2268 = vmatpush1.msra.mxu0 %v2188
    %2269 = vmatprep.subr.mxu0 %v2187
    %2270 = vmatpush1.msra.mxu0 %v2186
    %2271 = vmatprep.subr.mxu0 %v2185
    %2272 = vmatpush1.msra.mxu0 %v2184
    %2273 = vmatprep.subr.mxu0 %v2183
    %2274 = vmatpush1.msra.mxu0 %v2182
    %2275 = vmatprep.subr.mxu0 %v2181
    %2276 = vmatpush1.msra.mxu0 %v2180
    %2277 = vmatprep.subr.mxu0 0.0
    %2278 = vmatpush2.msra.mxu0 0.0
    %2279 = vmatprep.subr.mxu0 0.0
    %2280 = vmatpush2.msra.mxu0 0.0
    %2281 = vmatprep.subr.mxu0 0.0
    %2282 = vmatpush2.msra.mxu0 0.0
    %2283 = vmatprep.subr.mxu0 0.0
    %2284 = vmatpush2.msra.mxu0 0.0
    %2285 = vmatprep.subr.mxu0 0.0
    %2286 = vmatpush2.msra.mxu0 0.0
    %2287 = vmatprep.subr.mxu0 0.0
    %2288 = vmatpush2.msra.mxu0 0.0
    %2289 = vmatprep.subr.mxu0 0.0
    %2290 = vmatpush2.msra.mxu0 0.0
    %2291 = vmatprep.subr.mxu0 0.0
    %2292 = vmatpush2.msra.mxu0 0.0
    %2293 = vmatprep.subr.mxu0 0.0
    %2294 = vmatpush2.msra.mxu0 0.0
    %2295 = vmatprep.subr.mxu0 0.0
    %2296 = vmatpush2.msra.mxu0 0.0
    %2297 = vmatprep.subr.mxu0 0.0
    %2298 = vmatpush2.msra.mxu0 0.0
    %2299 = vmatprep.subr.mxu0 0.0
    %2300 = vmatpush2.msra.mxu0 0.0
    %2301 = vmatprep.subr.mxu0 0.0
    %2302 = vmatpush2.msra.mxu0 0.0
    %2303 = vmatprep.subr.mxu0 0.0
    %2304 = vmatpush2.msra.mxu0 0.0
    %2305 = vmatprep.subr.mxu0 0.0
    %2306 = vmatpush2.msra.mxu0 0.0
    %2307 = vmatprep.subr.mxu0 0.0
    %2308 = vmatpush2.msra.mxu0 0.0
    %2309 = vmatprep.mubr.f32.mxu0 0.0
    %2310 = vmatmul.mubr.f32.gmra.mxu0 %v2210
    %v2311 = vpop.f32.mrf.mxu0
    %v2312 = vadd.f32 0.0, %v2311
    %v2313 = vpop.f32.mrf.mxu0
    %v2314 = vadd.f32 0.0, %v2313
    %2315 = vmatprep.mubr.f32.mxu0 0.0
    %2316 = vmatmul.mubr.f32.gmra.mxu0 %v2213
    %v2317 = vpop.f32.mrf.mxu0
    %v2318 = vadd.f32 0.0, %v2317
    %v2319 = vpop.f32.mrf.mxu0
    %v2320 = vadd.f32 0.0, %v2319
    %2321 = vmatprep.mubr.f32.mxu0 0.0
    %2322 = vmatmul.mubr.f32.gmra.mxu0 %v2216
    %v2323 = vpop.f32.mrf.mxu0
    %v2324 = vadd.f32 0.0, %v2323
    %v2325 = vpop.f32.mrf.mxu0
    %v2326 = vadd.f32 0.0, %v2325
    %2327 = vmatprep.mubr.f32.mxu0 0.0
    %2328 = vmatmul.mubr.f32.gmra.mxu0 %v2219
    %v2329 = vpop.f32.mrf.mxu0
    %v2330 = vadd.f32 0.0, %v2329
    %v2331 = vpop.f32.mrf.mxu0
    %v2332 = vadd.f32 0.0, %v2331
    %2333 = vmatprep.mubr.f32.mxu0 0.0
    %2334 = vmatmul.mubr.f32.gmra.mxu0 %v2222
    %v2335 = vpop.f32.mrf.mxu0
    %v2336 = vadd.f32 0.0, %v2335
    %v2337 = vpop.f32.mrf.mxu0
    %v2338 = vadd.f32 0.0, %v2337
    %2339 = vmatprep.mubr.f32.mxu0 0.0
    %2340 = vmatmul.mubr.f32.gmra.mxu0 %v2225
    %v2341 = vpop.f32.mrf.mxu0
    %v2342 = vadd.f32 0.0, %v2341
    %v2343 = vpop.f32.mrf.mxu0
    %v2344 = vadd.f32 0.0, %v2343
    %2345 = vmatprep.mubr.f32.mxu0 0.0
    %2346 = vmatmul.mubr.f32.gmra.mxu0 %v2228
    %v2347 = vpop.f32.mrf.mxu0
    %v2348 = vadd.f32 0.0, %v2347
    %v2349 = vpop.f32.mrf.mxu0
    %v2350 = vadd.f32 0.0, %v2349
    %2351 = vmatprep.mubr.f32.mxu0 0.0
    %2352 = vmatmul.mubr.f32.gmra.mxu0 %v2231
    %v2353 = vpop.f32.mrf.mxu0
    %v2354 = vadd.f32 0.0, %v2353
    %v2355 = vpop.f32.mrf.mxu0
    %v2356 = vadd.f32 0.0, %v2355
    %2357 = vmatprep.mubr.f32.mxu0 0.0
    %2358 = vmatmul.mubr.f32.gmra.mxu0 %v2234
    %v2359 = vpop.f32.mrf.mxu0
    %v2360 = vadd.f32 0.0, %v2359
    %v2361 = vpop.f32.mrf.mxu0
    %v2362 = vadd.f32 0.0, %v2361
    %2363 = vmatprep.mubr.f32.mxu0 0.0
    %2364 = vmatmul.mubr.f32.gmra.mxu0 %v2237
    %v2365 = vpop.f32.mrf.mxu0
    %v2366 = vadd.f32 0.0, %v2365
    %v2367 = vpop.f32.mrf.mxu0
    %v2368 = vadd.f32 0.0, %v2367
    %2369 = vmatprep.mubr.f32.mxu0 0.0
    %2370 = vmatmul.mubr.f32.gmra.mxu0 %v2240
    %v2371 = vpop.f32.mrf.mxu0
    %v2372 = vadd.f32 0.0, %v2371
    %v2373 = vpop.f32.mrf.mxu0
    %v2374 = vadd.f32 0.0, %v2373
    %2375 = vmatprep.mubr.f32.mxu0 0.0
    %2376 = vmatmul.mubr.f32.gmra.mxu0 %v2243
    %v2377 = vpop.f32.mrf.mxu0
    %v2378 = vadd.f32 0.0, %v2377
    %v2379 = vpop.f32.mrf.mxu0
    %v2380 = vadd.f32 0.0, %v2379
    %2381 = vdwg.mxu0
    %v2383 = vsel %vm2208, %v2137, 0
    %2385 = vmatprep.subr.mxu0 0.0
    %2386 = vmatpush1.msra.mxu0 0.0
    %2387 = vmatprep.subr.mxu0 0.0
    %2388 = vmatpush1.msra.mxu0 0.0
    %2389 = vmatprep.subr.mxu0 %v2178
    %2390 = vmatpush1.msra.mxu0 %v2177
    %2391 = vmatprep.subr.mxu0 %v2176
    %2392 = vmatpush1.msra.mxu0 %v2175
    %2393 = vmatprep.subr.mxu0 %v2174
    %2394 = vmatpush1.msra.mxu0 %v2173
    %2395 = vmatprep.subr.mxu0 %v2172
    %2396 = vmatpush1.msra.mxu0 %v2171
    %2397 = vmatprep.subr.mxu0 %v2170
    %2398 = vmatpush1.msra.mxu0 %v2169
    %2399 = vmatprep.subr.mxu0 %v2168
    %2400 = vmatpush1.msra.mxu0 %v2167
    %2401 = vmatprep.subr.mxu0 %v2166
    %2402 = vmatpush1.msra.mxu0 %v2165
    %2403 = vmatprep.subr.mxu0 %v2164
    %2404 = vmatpush1.msra.mxu0 %v2163
    %2405 = vmatprep.subr.mxu0 %v2162
    %2406 = vmatpush1.msra.mxu0 %v2161
    %2407 = vmatprep.subr.mxu0 %v2160
    %2408 = vmatpush1.msra.mxu0 %v2159
    %2409 = vmatprep.subr.mxu0 %v2158
    %2410 = vmatpush1.msra.mxu0 %v2157
    %2411 = vmatprep.subr.mxu0 %v2156
    %2412 = vmatpush1.msra.mxu0 %v2155
    %2413 = vmatprep.subr.mxu0 %v2154
    %2414 = vmatpush1.msra.mxu0 %v2153
    %2415 = vmatprep.subr.mxu0 %v2152
    %2416 = vmatpush1.msra.mxu0 %v2151
    %2417 = vmatprep.subr.mxu0 0.0
    %2418 = vmatpush2.msra.mxu0 0.0
    %2419 = vmatprep.subr.mxu0 0.0
    %2420 = vmatpush2.msra.mxu0 0.0
    %2421 = vmatprep.subr.mxu0 0.0
    %2422 = vmatpush2.msra.mxu0 0.0
    %2423 = vmatprep.subr.mxu0 0.0
    %2424 = vmatpush2.msra.mxu0 0.0
    %2425 = vmatprep.subr.mxu0 0.0
    %2426 = vmatpush2.msra.mxu0 0.0
    %2427 = vmatprep.subr.mxu0 0.0
    %2428 = vmatpush2.msra.mxu0 0.0
    %2429 = vmatprep.subr.mxu0 0.0
    %2430 = vmatpush2.msra.mxu0 0.0
    %2431 = vmatprep.subr.mxu0 0.0
    %2432 = vmatpush2.msra.mxu0 0.0
    %2433 = vmatprep.subr.mxu0 0.0
    %2434 = vmatpush2.msra.mxu0 0.0
    %2435 = vmatprep.subr.mxu0 0.0
    %2436 = vmatpush2.msra.mxu0 0.0
    %2437 = vmatprep.subr.mxu0 0.0
    %2438 = vmatpush2.msra.mxu0 0.0
    %2439 = vmatprep.subr.mxu0 0.0
    %2440 = vmatpush2.msra.mxu0 0.0
    %2441 = vmatprep.subr.mxu0 0.0
    %2442 = vmatpush2.msra.mxu0 0.0
    %2443 = vmatprep.subr.mxu0 0.0
    %2444 = vmatpush2.msra.mxu0 0.0
    %2445 = vmatprep.subr.mxu0 0.0
    %2446 = vmatpush2.msra.mxu0 0.0
    %2447 = vmatprep.subr.mxu0 0.0
    %2448 = vmatpush2.msra.mxu0 0.0
    %2449 = vmatprep.mubr.f32.mxu0 0.0
    %2450 = vmatmul.mubr.f32.gmra.mxu0 %v2383
    %v2451 = vpop.f32.mrf.mxu0
    %v2452 = vadd.f32 %v2312, %v2451
    %v2453 = vpop.f32.mrf.mxu0
    %v2454 = vadd.f32 %v2314, %v2453
    %2455 = vmatprep.mubr.f32.mxu0 0.0
    %2456 = vmatmul.mubr.f32.gmra.mxu0 %v2210
    %v2457 = vpop.f32.mrf.mxu0
    %v2458 = vadd.f32 %v2318, %v2457
    %v2459 = vpop.f32.mrf.mxu0
    %v2460 = vadd.f32 %v2320, %v2459
    %2461 = vmatprep.mubr.f32.mxu0 0.0
    %2462 = vmatmul.mubr.f32.gmra.mxu0 %v2213
    %v2463 = vpop.f32.mrf.mxu0
    %v2464 = vadd.f32 %v2324, %v2463
    %v2465 = vpop.f32.mrf.mxu0
    %v2466 = vadd.f32 %v2326, %v2465
    %2467 = vmatprep.mubr.f32.mxu0 0.0
    %2468 = vmatmul.mubr.f32.gmra.mxu0 %v2216
    %v2469 = vpop.f32.mrf.mxu0
    %v2470 = vadd.f32 %v2330, %v2469
    %v2471 = vpop.f32.mrf.mxu0
    %v2472 = vadd.f32 %v2332, %v2471
    %2473 = vmatprep.mubr.f32.mxu0 0.0
    %2474 = vmatmul.mubr.f32.gmra.mxu0 %v2219
    %v2475 = vpop.f32.mrf.mxu0
    %v2476 = vadd.f32 %v2336, %v2475
    %v2477 = vpop.f32.mrf.mxu0
    %v2478 = vadd.f32 %v2338, %v2477
    %2479 = vmatprep.mubr.f32.mxu0 0.0
    %2480 = vmatmul.mubr.f32.gmra.mxu0 %v2222
    %v2481 = vpop.f32.mrf.mxu0
    %v2482 = vadd.f32 %v2342, %v2481
    %v2483 = vpop.f32.mrf.mxu0
    %v2484 = vadd.f32 %v2344, %v2483
    %2485 = vmatprep.mubr.f32.mxu0 0.0
    %2486 = vmatmul.mubr.f32.gmra.mxu0 %v2225
    %v2487 = vpop.f32.mrf.mxu0
    %v2488 = vadd.f32 %v2348, %v2487
    %v2489 = vpop.f32.mrf.mxu0
    %v2490 = vadd.f32 %v2350, %v2489
    %2491 = vmatprep.mubr.f32.mxu0 0.0
    %2492 = vmatmul.mubr.f32.gmra.mxu0 %v2228
    %v2493 = vpop.f32.mrf.mxu0
    %v2494 = vadd.f32 %v2354, %v2493
    %v2495 = vpop.f32.mrf.mxu0
    %v2496 = vadd.f32 %v2356, %v2495
    %2497 = vmatprep.mubr.f32.mxu0 0.0
    %2498 = vmatmul.mubr.f32.gmra.mxu0 %v2231
    %v2499 = vpop.f32.mrf.mxu0
    %v2500 = vadd.f32 %v2360, %v2499
    %v2501 = vpop.f32.mrf.mxu0
    %v2502 = vadd.f32 %v2362, %v2501
    %2503 = vmatprep.mubr.f32.mxu0 0.0
    %2504 = vmatmul.mubr.f32.gmra.mxu0 %v2234
    %v2505 = vpop.f32.mrf.mxu0
    %v2506 = vadd.f32 %v2366, %v2505
    %v2507 = vpop.f32.mrf.mxu0
    %v2508 = vadd.f32 %v2368, %v2507
    %2509 = vmatprep.mubr.f32.mxu0 0.0
    %2510 = vmatmul.mubr.f32.gmra.mxu0 %v2237
    %v2511 = vpop.f32.mrf.mxu0
    %v2512 = vadd.f32 %v2372, %v2511
    %v2513 = vpop.f32.mrf.mxu0
    %v2514 = vadd.f32 %v2374, %v2513
    %2515 = vmatprep.mubr.f32.mxu0 0.0
    %2516 = vmatmul.mubr.f32.gmra.mxu0 %v2240
    %v2517 = vpop.f32.mrf.mxu0
    %v2518 = vadd.f32 %v2378, %v2517
    %v2519 = vpop.f32.mrf.mxu0
    %v2520 = vadd.f32 %v2380, %v2519
    %2521 = vdwg.mxu0
    %s2522 = scalar_lea.vmem %s5, 448
    %v2523 = vld [vmem:[%s2522] sm:$0xff]
    %v2524 = vld [vmem:[%s2522 + $0x8] sm:$0xff]
    %v2525 = vld [vmem:[%s2522 + $0x10] sm:$0xff]
    %v2526 = vld [vmem:[%s2522 + $0x18] sm:$0xff]
    %v2527 = vld [vmem:[%s2522 + $0x20] sm:$0xff]
    %v2528 = vld [vmem:[%s2522 + $0x28] sm:$0xff]
    %v2529 = vld [vmem:[%s2522 + $0x30] sm:$0xff]
    %v2530 = vld [vmem:[%s2522 + $0x38] sm:$0xff]
    %v2531 = vld [vmem:[%s2522 + $0x40] sm:$0xff]
    %v2532 = vld [vmem:[%s2522 + $0x48] sm:$0xff]
    %v2533 = vld [vmem:[%s2522 + $0x50] sm:$0xff]
    %v2534 = vld [vmem:[%s2522 + $0x58] sm:$0xff]
    %v2535 = vld [vmem:[%s2522 + $0x60] sm:$0xff]
    %v2536 = vld [vmem:[%s2522 + $0x68] sm:$0xff]
    %v2537 = vld [vmem:[%s2522 + $0x70] sm:$0xff]
    %v2538 = vld [vmem:[%s2522 + $0x78] sm:$0xff]
    %v2539 = vld [vmem:[%s2522 + $0x80] sm:$0xff]
    %v2540 = vld [vmem:[%s2522 + $0x88] sm:$0xff]
    %v2541 = vld [vmem:[%s2522 + $0x90] sm:$0xff]
    %v2542 = vld [vmem:[%s2522 + $0x98] sm:$0xff]
    %v2543 = vld [vmem:[%s2522 + $0xa0] sm:$0xff]
    %v2544 = vld [vmem:[%s2522 + $0xa8] sm:$0xff]
    %v2545 = vld [vmem:[%s2522 + $0xb0] sm:$0xff]
    %v2546 = vld [vmem:[%s2522 + $0xb8] sm:$0xff]
    %v2547 = vld [vmem:[%s2522 + $0xc0] sm:$0xff]
    %v2548 = vld [vmem:[%s2522 + $0xc8] sm:$0xff]
    %v2549 = vld [vmem:[%s2522 + $0xd0] sm:$0xff]
    %v2550 = vld [vmem:[%s2522 + $0xd8] sm:$0xff]
    %v2552 = vsel %vm2208, %v2150, 0
    %2554 = vmatprep.subr.mxu0 0.0
    %2555 = vmatpush1.msra.mxu0 0.0
    %2556 = vmatprep.subr.mxu0 0.0
    %2557 = vmatpush1.msra.mxu0 0.0
    %2558 = vmatprep.subr.mxu0 %v2550
    %2559 = vmatpush1.msra.mxu0 %v2549
    %2560 = vmatprep.subr.mxu0 %v2548
    %2561 = vmatpush1.msra.mxu0 %v2547
    %2562 = vmatprep.subr.mxu0 %v2546
    %2563 = vmatpush1.msra.mxu0 %v2545
    %2564 = vmatprep.subr.mxu0 %v2544
    %2565 = vmatpush1.msra.mxu0 %v2543
    %2566 = vmatprep.subr.mxu0 %v2542
    %2567 = vmatpush1.msra.mxu0 %v2541
    %2568 = vmatprep.subr.mxu0 %v2540
    %2569 = vmatpush1.msra.mxu0 %v2539
    %2570 = vmatprep.subr.mxu0 %v2538
    %2571 = vmatpush1.msra.mxu0 %v2537
    %2572 = vmatprep.subr.mxu0 %v2536
    %2573 = vmatpush1.msra.mxu0 %v2535
    %2574 = vmatprep.subr.mxu0 %v2534
    %2575 = vmatpush1.msra.mxu0 %v2533
    %2576 = vmatprep.subr.mxu0 %v2532
    %2577 = vmatpush1.msra.mxu0 %v2531
    %2578 = vmatprep.subr.mxu0 %v2530
    %2579 = vmatpush1.msra.mxu0 %v2529
    %2580 = vmatprep.subr.mxu0 %v2528
    %2581 = vmatpush1.msra.mxu0 %v2527
    %2582 = vmatprep.subr.mxu0 %v2526
    %2583 = vmatpush1.msra.mxu0 %v2525
    %2584 = vmatprep.subr.mxu0 %v2524
    %2585 = vmatpush1.msra.mxu0 %v2523
    %2586 = vmatprep.subr.mxu0 0.0
    %2587 = vmatpush2.msra.mxu0 0.0
    %2588 = vmatprep.subr.mxu0 0.0
    %2589 = vmatpush2.msra.mxu0 0.0
    %2590 = vmatprep.subr.mxu0 0.0
    %2591 = vmatpush2.msra.mxu0 0.0
    %2592 = vmatprep.subr.mxu0 0.0
    %2593 = vmatpush2.msra.mxu0 0.0
    %2594 = vmatprep.subr.mxu0 0.0
    %2595 = vmatpush2.msra.mxu0 0.0
    %2596 = vmatprep.subr.mxu0 0.0
    %2597 = vmatpush2.msra.mxu0 0.0
    %2598 = vmatprep.subr.mxu0 0.0
    %2599 = vmatpush2.msra.mxu0 0.0
    %2600 = vmatprep.subr.mxu0 0.0
    %2601 = vmatpush2.msra.mxu0 0.0
    %2602 = vmatprep.subr.mxu0 0.0
    %2603 = vmatpush2.msra.mxu0 0.0
    %2604 = vmatprep.subr.mxu0 0.0
    %2605 = vmatpush2.msra.mxu0 0.0
    %2606 = vmatprep.subr.mxu0 0.0
    %2607 = vmatpush2.msra.mxu0 0.0
    %2608 = vmatprep.subr.mxu0 0.0
    %2609 = vmatpush2.msra.mxu0 0.0
    %2610 = vmatprep.subr.mxu0 0.0
    %2611 = vmatpush2.msra.mxu0 0.0
    %2612 = vmatprep.subr.mxu0 0.0
    %2613 = vmatpush2.msra.mxu0 0.0
    %2614 = vmatprep.subr.mxu0 0.0
    %2615 = vmatpush2.msra.mxu0 0.0
    %2616 = vmatprep.subr.mxu0 0.0
    %2617 = vmatpush2.msra.mxu0 0.0
    %2618 = vmatprep.mubr.f32.mxu0 0.0
    %2619 = vmatmul.mubr.f32.gmra.mxu0 %v2213
    %v2620 = vpop.f32.mrf.mxu0
    %v2621 = vadd.f32 0.0, %v2620
    %v2622 = vpop.f32.mrf.mxu0
    %v2623 = vadd.f32 0.0, %v2622
    %2624 = vmatprep.mubr.f32.mxu0 0.0
    %2625 = vmatmul.mubr.f32.gmra.mxu0 %v2216
    %v2626 = vpop.f32.mrf.mxu0
    %v2627 = vadd.f32 0.0, %v2626
    %v2628 = vpop.f32.mrf.mxu0
    %v2629 = vadd.f32 0.0, %v2628
    %2630 = vmatprep.mubr.f32.mxu0 0.0
    %2631 = vmatmul.mubr.f32.gmra.mxu0 %v2219
    %v2632 = vpop.f32.mrf.mxu0
    %v2633 = vadd.f32 0.0, %v2632
    %v2634 = vpop.f32.mrf.mxu0
    %v2635 = vadd.f32 0.0, %v2634
    %2636 = vmatprep.mubr.f32.mxu0 0.0
    %2637 = vmatmul.mubr.f32.gmra.mxu0 %v2222
    %v2638 = vpop.f32.mrf.mxu0
    %v2639 = vadd.f32 0.0, %v2638
    %v2640 = vpop.f32.mrf.mxu0
    %v2641 = vadd.f32 0.0, %v2640
    %2642 = vmatprep.mubr.f32.mxu0 0.0
    %2643 = vmatmul.mubr.f32.gmra.mxu0 %v2225
    %v2644 = vpop.f32.mrf.mxu0
    %v2645 = vadd.f32 0.0, %v2644
    %v2646 = vpop.f32.mrf.mxu0
    %v2647 = vadd.f32 0.0, %v2646
    %2648 = vmatprep.mubr.f32.mxu0 0.0
    %2649 = vmatmul.mubr.f32.gmra.mxu0 %v2228
    %v2650 = vpop.f32.mrf.mxu0
    %v2651 = vadd.f32 0.0, %v2650
    %v2652 = vpop.f32.mrf.mxu0
    %v2653 = vadd.f32 0.0, %v2652
    %2654 = vmatprep.mubr.f32.mxu0 0.0
    %2655 = vmatmul.mubr.f32.gmra.mxu0 %v2231
    %v2656 = vpop.f32.mrf.mxu0
    %v2657 = vadd.f32 0.0, %v2656
    %v2658 = vpop.f32.mrf.mxu0
    %v2659 = vadd.f32 0.0, %v2658
    %2660 = vmatprep.mubr.f32.mxu0 0.0
    %2661 = vmatmul.mubr.f32.gmra.mxu0 %v2234
    %v2662 = vpop.f32.mrf.mxu0
    %v2663 = vadd.f32 0.0, %v2662
    %v2664 = vpop.f32.mrf.mxu0
    %v2665 = vadd.f32 0.0, %v2664
    %2666 = vmatprep.mubr.f32.mxu0 0.0
    %2667 = vmatmul.mubr.f32.gmra.mxu0 %v2237
    %v2668 = vpop.f32.mrf.mxu0
    %v2669 = vadd.f32 0.0, %v2668
    %v2670 = vpop.f32.mrf.mxu0
    %v2671 = vadd.f32 0.0, %v2670
    %2672 = vmatprep.mubr.f32.mxu0 0.0
    %2673 = vmatmul.mubr.f32.gmra.mxu0 %v2240
    %v2674 = vpop.f32.mrf.mxu0
    %v2675 = vadd.f32 0.0, %v2674
    %v2676 = vpop.f32.mrf.mxu0
    %v2677 = vadd.f32 0.0, %v2676
    %2678 = vmatprep.mubr.f32.mxu0 0.0
    %2679 = vmatmul.mubr.f32.gmra.mxu0 %v2243
    %v2680 = vpop.f32.mrf.mxu0
    %v2681 = vadd.f32 0.0, %v2680
    %v2682 = vpop.f32.mrf.mxu0
    %v2683 = vadd.f32 0.0, %v2682
    %2684 = vmatprep.mubr.f32.mxu0 0.0
    %2685 = vmatmul.mubr.f32.gmra.mxu0 %v2552
    %v2686 = vpop.f32.mrf.mxu0
    %v2687 = vadd.f32 0.0, %v2686
    %v2688 = vpop.f32.mrf.mxu0
    %v2689 = vadd.f32 0.0, %v2688
    %2690 = vdwg.mxu0
    %v2691 = vadd.f32 %v2452, %v2621
    %v2692 = vadd.f32 %v2454, %v2623
    %v2693 = vadd.f32 %v2458, %v2627
    %v2694 = vadd.f32 %v2460, %v2629
    %v2695 = vadd.f32 %v2464, %v2633
    %v2696 = vadd.f32 %v2466, %v2635
    %v2697 = vadd.f32 %v2470, %v2639
    %v2698 = vadd.f32 %v2472, %v2641
    %v2699 = vadd.f32 %v2476, %v2645
    %v2700 = vadd.f32 %v2478, %v2647
    %v2701 = vadd.f32 %v2482, %v2651
    %v2702 = vadd.f32 %v2484, %v2653
    %v2703 = vadd.f32 %v2488, %v2657
    %v2704 = vadd.f32 %v2490, %v2659
    %v2705 = vadd.f32 %v2494, %v2663
    %v2706 = vadd.f32 %v2496, %v2665
    %v2707 = vadd.f32 %v2500, %v2669
    %v2708 = vadd.f32 %v2502, %v2671
    %v2709 = vadd.f32 %v2506, %v2675
    %v2710 = vadd.f32 %v2508, %v2677
    %v2711 = vadd.f32 %v2512, %v2681
    %v2712 = vadd.f32 %v2514, %v2683
    %v2713 = vadd.f32 %v2518, %v2687
    %v2714 = vadd.f32 %v2520, %v2689
    %v2715 = vld [vmem:[%s6] ss:$2 sm:$0x3]
    %v2717 = vlaneseq
    %v2718 = vshrl.u32 %v2717, 7
    %v2719 = vsub.s32 0, %v2718
    %v2720 = vrot.slane %v2715, %v2719
    %v2721 = vlaneseq
    %v2722 = vshrl.u32 %v2721, 7
    %v2723 = vsub.s32 1, %v2722
    %v2724 = vrot.slane %v2715, %v2723
    %v2727 = vadd.f32 %v2691, %v2720
    %v2728 = vadd.f32 %v2692, %v2724
    %v2729 = vadd.f32 %v2693, %v2720
    %v2730 = vadd.f32 %v2694, %v2724
    %v2731 = vadd.f32 %v2695, %v2720
    %v2732 = vadd.f32 %v2696, %v2724
    %v2733 = vadd.f32 %v2697, %v2720
    %v2734 = vadd.f32 %v2698, %v2724
    %v2735 = vadd.f32 %v2699, %v2720
    %v2736 = vadd.f32 %v2700, %v2724
    %v2737 = vadd.f32 %v2701, %v2720
    %v2738 = vadd.f32 %v2702, %v2724
    %v2739 = vadd.f32 %v2703, %v2720
    %v2740 = vadd.f32 %v2704, %v2724
    %v2741 = vadd.f32 %v2705, %v2720
    %v2742 = vadd.f32 %v2706, %v2724
    %v2743 = vadd.f32 %v2707, %v2720
    %v2744 = vadd.f32 %v2708, %v2724
    %v2745 = vadd.f32 %v2709, %v2720
    %v2746 = vadd.f32 %v2710, %v2724
    %v2747 = vadd.f32 %v2711, %v2720
    %v2748 = vadd.f32 %v2712, %v2724
    %v2749 = vadd.f32 %v2713, %v2720
    %v2750 = vadd.f32 %v2714, %v2724
    %v2751 = vmax.f32 %v2727, 0.0
    %v2752 = vmax.f32 %v2728, 0.0
    %v2753 = vmax.f32 %v2729, 0.0
    %v2754 = vmax.f32 %v2730, 0.0
    %v2755 = vmax.f32 %v2731, 0.0
    %v2756 = vmax.f32 %v2732, 0.0
    %v2757 = vmax.f32 %v2733, 0.0
    %v2758 = vmax.f32 %v2734, 0.0
    %v2759 = vmax.f32 %v2735, 0.0
    %v2760 = vmax.f32 %v2736, 0.0
    %v2761 = vmax.f32 %v2737, 0.0
    %v2762 = vmax.f32 %v2738, 0.0
    %v2763 = vmax.f32 %v2739, 0.0
    %v2764 = vmax.f32 %v2740, 0.0
    %v2765 = vmax.f32 %v2741, 0.0
    %v2766 = vmax.f32 %v2742, 0.0
    %v2767 = vmax.f32 %v2743, 0.0
    %v2768 = vmax.f32 %v2744, 0.0
    %v2769 = vmax.f32 %v2745, 0.0
    %v2770 = vmax.f32 %v2746, 0.0
    %v2771 = vmax.f32 %v2747, 0.0
    %v2772 = vmax.f32 %v2748, 0.0
    %v2773 = vmax.f32 %v2749, 0.0
    %v2774 = vmax.f32 %v2750, 0.0
    %s2775 = scalar_lea.vmem %s6, 1
    %v2776 = vld [vmem:[%s2775] ss:$2 sm:$0x3]
    %v2778 = vlaneseq
    %v2779 = vshrl.u32 %v2778, 7
    %v2780 = vsub.s32 0, %v2779
    %v2781 = vrot.slane %v2776, %v2780
    %v2782 = vlaneseq
    %v2783 = vshrl.u32 %v2782, 7
    %v2784 = vsub.s32 1, %v2783
    %v2785 = vrot.slane %v2776, %v2784
    %v2788 = vadd.f32 %v2751, %v2781
    %v2789 = vadd.f32 %v2752, %v2785
    %v2790 = vadd.f32 %v2753, %v2781
    %v2791 = vadd.f32 %v2754, %v2785
    %v2792 = vadd.f32 %v2755, %v2781
    %v2793 = vadd.f32 %v2756, %v2785
    %v2794 = vadd.f32 %v2757, %v2781
    %v2795 = vadd.f32 %v2758, %v2785
    %v2796 = vadd.f32 %v2759, %v2781
    %v2797 = vadd.f32 %v2760, %v2785
    %v2798 = vadd.f32 %v2761, %v2781
    %v2799 = vadd.f32 %v2762, %v2785
    %v2800 = vadd.f32 %v2763, %v2781
    %v2801 = vadd.f32 %v2764, %v2785
    %v2802 = vadd.f32 %v2765, %v2781
    %v2803 = vadd.f32 %v2766, %v2785
    %v2804 = vadd.f32 %v2767, %v2781
    %v2805 = vadd.f32 %v2768, %v2785
    %v2806 = vadd.f32 %v2769, %v2781
    %v2807 = vadd.f32 %v2770, %v2785
    %v2808 = vadd.f32 %v2771, %v2781
    %v2809 = vadd.f32 %v2772, %v2785
    %v2810 = vadd.f32 %v2773, %v2781
    %v2811 = vadd.f32 %v2774, %v2785
    %v2812 = vld [vmem:[%s7] sm:$0xff]
    %v2813 = vld [vmem:[%s7 + $0x8] sm:$0xff]
    %v2814 = vld [vmem:[%s7 + $0x10] sm:$0xff]
    %v2815 = vld [vmem:[%s7 + $0x18] sm:$0xff]
    %v2816 = vld [vmem:[%s7 + $0x20] sm:$0xff]
    %v2817 = vld [vmem:[%s7 + $0x28] sm:$0xff]
    %v2818 = vld [vmem:[%s7 + $0x30] sm:$0xff]
    %v2819 = vld [vmem:[%s7 + $0x38] sm:$0xff]
    %v2820 = vld [vmem:[%s7 + $0x40] sm:$0xff]
    %v2821 = vld [vmem:[%s7 + $0x48] sm:$0xff]
    %v2822 = vld [vmem:[%s7 + $0x50] sm:$0xff]
    %v2823 = vld [vmem:[%s7 + $0x58] sm:$0xff]
    %v2824 = vld [vmem:[%s7 + $0x60] sm:$0xff]
    %v2825 = vld [vmem:[%s7 + $0x68] sm:$0xff]
    %v2826 = vld [vmem:[%s7 + $0x70] sm:$0xff]
    %v2827 = vld [vmem:[%s7 + $0x78] sm:$0xff]
    %v2828 = vld [vmem:[%s7 + $0x80] sm:$0xff]
    %v2829 = vld [vmem:[%s7 + $0x88] sm:$0xff]
    %v2830 = vld [vmem:[%s7 + $0x90] sm:$0xff]
    %v2831 = vld [vmem:[%s7 + $0x98] sm:$0xff]
    %v2832 = vld [vmem:[%s7 + $0xa0] sm:$0xff]
    %v2833 = vld [vmem:[%s7 + $0xa8] sm:$0xff]
    %v2834 = vld [vmem:[%s7 + $0xb0] sm:$0xff]
    %v2835 = vld [vmem:[%s7 + $0xb8] sm:$0xff]
    %v2836 = vld [vmem:[%s7 + $0xc0] sm:$0xff]
    %v2837 = vld [vmem:[%s7 + $0xc8] sm:$0xff]
    %v2838 = vld [vmem:[%s7 + $0xd0] sm:$0xff]
    %v2839 = vld [vmem:[%s7 + $0xd8] sm:$0xff]
    %v2840 = vld [vmem:[%s7 + $0xe0] sm:$0xff]
    %v2841 = vld [vmem:[%s7 + $0xe8] sm:$0xff]
    %v2842 = vld [vmem:[%s7 + $0xf0] sm:$0xff]
    %v2843 = vld [vmem:[%s7 + $0xf8] sm:$0xff]
    %v2844 = vld [vmem:[%s7 + $0x100] sm:$0xff]
    %v2845 = vld [vmem:[%s7 + $0x108] sm:$0xff]
    %v2846 = vld [vmem:[%s7 + $0x110] sm:$0xff]
    %v2847 = vld [vmem:[%s7 + $0x118] sm:$0xff]
    %s2848 = scalar_lea.vmem %s7, 288
    %v2849 = vld [vmem:[%s2848] sm:$0xff]
    %v2850 = vld [vmem:[%s2848 + $0x8] sm:$0xff]
    %v2851 = vld [vmem:[%s2848 + $0x10] sm:$0xff]
    %v2852 = vld [vmem:[%s2848 + $0x18] sm:$0xff]
    %v2853 = vld [vmem:[%s2848 + $0x20] sm:$0xff]
    %v2854 = vld [vmem:[%s2848 + $0x28] sm:$0xff]
    %v2855 = vld [vmem:[%s2848 + $0x30] sm:$0xff]
    %v2856 = vld [vmem:[%s2848 + $0x38] sm:$0xff]
    %v2857 = vld [vmem:[%s2848 + $0x40] sm:$0xff]
    %v2858 = vld [vmem:[%s2848 + $0x48] sm:$0xff]
    %v2859 = vld [vmem:[%s2848 + $0x50] sm:$0xff]
    %v2860 = vld [vmem:[%s2848 + $0x58] sm:$0xff]
    %v2861 = vld [vmem:[%s2848 + $0x60] sm:$0xff]
    %v2862 = vld [vmem:[%s2848 + $0x68] sm:$0xff]
    %v2863 = vld [vmem:[%s2848 + $0x70] sm:$0xff]
    %v2864 = vld [vmem:[%s2848 + $0x78] sm:$0xff]
    %v2865 = vld [vmem:[%s2848 + $0x80] sm:$0xff]
    %v2866 = vld [vmem:[%s2848 + $0x88] sm:$0xff]
    %v2867 = vld [vmem:[%s2848 + $0x90] sm:$0xff]
    %v2868 = vld [vmem:[%s2848 + $0x98] sm:$0xff]
    %v2869 = vld [vmem:[%s2848 + $0xa0] sm:$0xff]
    %v2870 = vld [vmem:[%s2848 + $0xa8] sm:$0xff]
    %v2871 = vld [vmem:[%s2848 + $0xb0] sm:$0xff]
    %v2872 = vld [vmem:[%s2848 + $0xb8] sm:$0xff]
    %v2873 = vld [vmem:[%s2848 + $0xc0] sm:$0xff]
    %v2874 = vld [vmem:[%s2848 + $0xc8] sm:$0xff]
    %v2875 = vld [vmem:[%s2848 + $0xd0] sm:$0xff]
    %v2876 = vld [vmem:[%s2848 + $0xd8] sm:$0xff]
    %v2877 = vld [vmem:[%s2848 + $0xe0] sm:$0xff]
    %v2878 = vld [vmem:[%s2848 + $0xe8] sm:$0xff]
    %v2879 = vld [vmem:[%s2848 + $0xf0] sm:$0xff]
    %v2880 = vld [vmem:[%s2848 + $0xf8] sm:$0xff]
    %v2881 = vld [vmem:[%s2848 + $0x100] sm:$0xff]
    %v2882 = vld [vmem:[%s2848 + $0x108] sm:$0xff]
    %v2883 = vld [vmem:[%s2848 + $0x110] sm:$0xff]
    %v2884 = vld [vmem:[%s2848 + $0x118] sm:$0xff]
    %vm2885 = vcmask 130048
    %v2887 = vsel %vm2885, %v2791, 0
    %v2890 = vsel %vm2885, %v2793, 0
    %v2893 = vsel %vm2885, %v2795, 0
    %v2896 = vsel %vm2885, %v2797, 0
    %v2899 = vsel %vm2885, %v2799, 0
    %v2902 = vsel %vm2885, %v2801, 0
    %v2905 = vsel %vm2885, %v2803, 0
    %v2908 = vsel %vm2885, %v2805, 0
    %v2911 = vsel %vm2885, %v2807, 0
    %v2914 = vsel %vm2885, %v2809, 0
    %2916 = vmatprep.subr.mxu0 %v2880
    %2917 = vmatpush1.msra.mxu0 %v2879
    %2918 = vmatprep.subr.mxu0 %v2878
    %2919 = vmatpush1.msra.mxu0 %v2877
    %2920 = vmatprep.subr.mxu0 %v2876
    %2921 = vmatpush1.msra.mxu0 %v2875
    %2922 = vmatprep.subr.mxu0 %v2874
    %2923 = vmatpush1.msra.mxu0 %v2873
    %2924 = vmatprep.subr.mxu0 %v2872
    %2925 = vmatpush1.msra.mxu0 %v2871
    %2926 = vmatprep.subr.mxu0 %v2870
    %2927 = vmatpush1.msra.mxu0 %v2869
    %2928 = vmatprep.subr.mxu0 %v2868
    %2929 = vmatpush1.msra.mxu0 %v2867
    %2930 = vmatprep.subr.mxu0 %v2866
    %2931 = vmatpush1.msra.mxu0 %v2865
    %2932 = vmatprep.subr.mxu0 %v2864
    %2933 = vmatpush1.msra.mxu0 %v2863
    %2934 = vmatprep.subr.mxu0 %v2862
    %2935 = vmatpush1.msra.mxu0 %v2861
    %2936 = vmatprep.subr.mxu0 %v2860
    %2937 = vmatpush1.msra.mxu0 %v2859
    %2938 = vmatprep.subr.mxu0 %v2858
    %2939 = vmatpush1.msra.mxu0 %v2857
    %2940 = vmatprep.subr.mxu0 %v2856
    %2941 = vmatpush1.msra.mxu0 %v2855
    %2942 = vmatprep.subr.mxu0 %v2854
    %2943 = vmatpush1.msra.mxu0 %v2853
    %2944 = vmatprep.subr.mxu0 %v2852
    %2945 = vmatpush1.msra.mxu0 %v2851
    %2946 = vmatprep.subr.mxu0 %v2850
    %2947 = vmatpush1.msra.mxu0 %v2849
    %2948 = vmatprep.subr.mxu0 0.0
    %2949 = vmatpush2.msra.mxu0 0.0
    %2950 = vmatprep.subr.mxu0 0.0
    %2951 = vmatpush2.msra.mxu0 0.0
    %2952 = vmatprep.subr.mxu0 0.0
    %2953 = vmatpush2.msra.mxu0 0.0
    %2954 = vmatprep.subr.mxu0 0.0
    %2955 = vmatpush2.msra.mxu0 0.0
    %2956 = vmatprep.subr.mxu0 0.0
    %2957 = vmatpush2.msra.mxu0 0.0
    %2958 = vmatprep.subr.mxu0 0.0
    %2959 = vmatpush2.msra.mxu0 0.0
    %2960 = vmatprep.subr.mxu0 0.0
    %2961 = vmatpush2.msra.mxu0 0.0
    %2962 = vmatprep.subr.mxu0 0.0
    %2963 = vmatpush2.msra.mxu0 0.0
    %2964 = vmatprep.subr.mxu0 0.0
    %2965 = vmatpush2.msra.mxu0 0.0
    %2966 = vmatprep.subr.mxu0 0.0
    %2967 = vmatpush2.msra.mxu0 0.0
    %2968 = vmatprep.subr.mxu0 0.0
    %2969 = vmatpush2.msra.mxu0 0.0
    %2970 = vmatprep.subr.mxu0 0.0
    %2971 = vmatpush2.msra.mxu0 0.0
    %2972 = vmatprep.subr.mxu0 0.0
    %2973 = vmatpush2.msra.mxu0 0.0
    %2974 = vmatprep.subr.mxu0 0.0
    %2975 = vmatpush2.msra.mxu0 0.0
    %2976 = vmatprep.subr.mxu0 %v2884
    %2977 = vmatpush2.msra.mxu0 %v2883
    %2978 = vmatprep.subr.mxu0 %v2882
    %2979 = vmatpush2.msra.mxu0 %v2881
    %2980 = vmatprep.mubr.f32.mxu0 %v2887
    %2981 = vmatmul.mubr.f32.gmra.mxu0 %v2790
    %v2982 = vpop.f32.mrf.mxu0
    %v2983 = vadd.f32 0.0, %v2982
    %v2984 = vpop.f32.mrf.mxu0
    %v2985 = vadd.f32 0.0, %v2984
    %2986 = vmatprep.mubr.f32.mxu0 %v2890
    %2987 = vmatmul.mubr.f32.gmra.mxu0 %v2792
    %v2988 = vpop.f32.mrf.mxu0
    %v2989 = vadd.f32 0.0, %v2988
    %v2990 = vpop.f32.mrf.mxu0
    %v2991 = vadd.f32 0.0, %v2990
    %2992 = vmatprep.mubr.f32.mxu0 %v2893
    %2993 = vmatmul.mubr.f32.gmra.mxu0 %v2794
    %v2994 = vpop.f32.mrf.mxu0
    %v2995 = vadd.f32 0.0, %v2994
    %v2996 = vpop.f32.mrf.mxu0
    %v2997 = vadd.f32 0.0, %v2996
    %2998 = vmatprep.mubr.f32.mxu0 %v2896
    %2999 = vmatmul.mubr.f32.gmra.mxu0 %v2796
    %v3000 = vpop.f32.mrf.mxu0
    %v3001 = vadd.f32 0.0, %v3000
    %v3002 = vpop.f32.mrf.mxu0
    %v3003 = vadd.f32 0.0, %v3002
    %3004 = vmatprep.mubr.f32.mxu0 %v2899
    %3005 = vmatmul.mubr.f32.gmra.mxu0 %v2798
    %v3006 = vpop.f32.mrf.mxu0
    %v3007 = vadd.f32 0.0, %v3006
    %v3008 = vpop.f32.mrf.mxu0
    %v3009 = vadd.f32 0.0, %v3008
    %3010 = vmatprep.mubr.f32.mxu0 %v2902
    %3011 = vmatmul.mubr.f32.gmra.mxu0 %v2800
    %v3012 = vpop.f32.mrf.mxu0
    %v3013 = vadd.f32 0.0, %v3012
    %v3014 = vpop.f32.mrf.mxu0
    %v3015 = vadd.f32 0.0, %v3014
    %3016 = vmatprep.mubr.f32.mxu0 %v2905
    %3017 = vmatmul.mubr.f32.gmra.mxu0 %v2802
    %v3018 = vpop.f32.mrf.mxu0
    %v3019 = vadd.f32 0.0, %v3018
    %v3020 = vpop.f32.mrf.mxu0
    %v3021 = vadd.f32 0.0, %v3020
    %3022 = vmatprep.mubr.f32.mxu0 %v2908
    %3023 = vmatmul.mubr.f32.gmra.mxu0 %v2804
    %v3024 = vpop.f32.mrf.mxu0
    %v3025 = vadd.f32 0.0, %v3024
    %v3026 = vpop.f32.mrf.mxu0
    %v3027 = vadd.f32 0.0, %v3026
    %3028 = vmatprep.mubr.f32.mxu0 %v2911
    %3029 = vmatmul.mubr.f32.gmra.mxu0 %v2806
    %v3030 = vpop.f32.mrf.mxu0
    %v3031 = vadd.f32 0.0, %v3030
    %v3032 = vpop.f32.mrf.mxu0
    %v3033 = vadd.f32 0.0, %v3032
    %3034 = vmatprep.mubr.f32.mxu0 %v2914
    %3035 = vmatmul.mubr.f32.gmra.mxu0 %v2808
    %v3036 = vpop.f32.mrf.mxu0
    %v3037 = vadd.f32 0.0, %v3036
    %v3038 = vpop.f32.mrf.mxu0
    %v3039 = vadd.f32 0.0, %v3038
    %3040 = vdwg.mxu0
    %v3042 = vsel %vm2885, %v2789, 0
    %3044 = vmatprep.subr.mxu0 %v2843
    %3045 = vmatpush1.msra.mxu0 %v2842
    %3046 = vmatprep.subr.mxu0 %v2841
    %3047 = vmatpush1.msra.mxu0 %v2840
    %3048 = vmatprep.subr.mxu0 %v2839
    %3049 = vmatpush1.msra.mxu0 %v2838
    %3050 = vmatprep.subr.mxu0 %v2837
    %3051 = vmatpush1.msra.mxu0 %v2836
    %3052 = vmatprep.subr.mxu0 %v2835
    %3053 = vmatpush1.msra.mxu0 %v2834
    %3054 = vmatprep.subr.mxu0 %v2833
    %3055 = vmatpush1.msra.mxu0 %v2832
    %3056 = vmatprep.subr.mxu0 %v2831
    %3057 = vmatpush1.msra.mxu0 %v2830
    %3058 = vmatprep.subr.mxu0 %v2829
    %3059 = vmatpush1.msra.mxu0 %v2828
    %3060 = vmatprep.subr.mxu0 %v2827
    %3061 = vmatpush1.msra.mxu0 %v2826
    %3062 = vmatprep.subr.mxu0 %v2825
    %3063 = vmatpush1.msra.mxu0 %v2824
    %3064 = vmatprep.subr.mxu0 %v2823
    %3065 = vmatpush1.msra.mxu0 %v2822
    %3066 = vmatprep.subr.mxu0 %v2821
    %3067 = vmatpush1.msra.mxu0 %v2820
    %3068 = vmatprep.subr.mxu0 %v2819
    %3069 = vmatpush1.msra.mxu0 %v2818
    %3070 = vmatprep.subr.mxu0 %v2817
    %3071 = vmatpush1.msra.mxu0 %v2816
    %3072 = vmatprep.subr.mxu0 %v2815
    %3073 = vmatpush1.msra.mxu0 %v2814
    %3074 = vmatprep.subr.mxu0 %v2813
    %3075 = vmatpush1.msra.mxu0 %v2812
    %3076 = vmatprep.subr.mxu0 0.0
    %3077 = vmatpush2.msra.mxu0 0.0
    %3078 = vmatprep.subr.mxu0 0.0
    %3079 = vmatpush2.msra.mxu0 0.0
    %3080 = vmatprep.subr.mxu0 0.0
    %3081 = vmatpush2.msra.mxu0 0.0
    %3082 = vmatprep.subr.mxu0 0.0
    %3083 = vmatpush2.msra.mxu0 0.0
    %3084 = vmatprep.subr.mxu0 0.0
    %3085 = vmatpush2.msra.mxu0 0.0
    %3086 = vmatprep.subr.mxu0 0.0
    %3087 = vmatpush2.msra.mxu0 0.0
    %3088 = vmatprep.subr.mxu0 0.0
    %3089 = vmatpush2.msra.mxu0 0.0
    %3090 = vmatprep.subr.mxu0 0.0
    %3091 = vmatpush2.msra.mxu0 0.0
    %3092 = vmatprep.subr.mxu0 0.0
    %3093 = vmatpush2.msra.mxu0 0.0
    %3094 = vmatprep.subr.mxu0 0.0
    %3095 = vmatpush2.msra.mxu0 0.0
    %3096 = vmatprep.subr.mxu0 0.0
    %3097 = vmatpush2.msra.mxu0 0.0
    %3098 = vmatprep.subr.mxu0 0.0
    %3099 = vmatpush2.msra.mxu0 0.0
    %3100 = vmatprep.subr.mxu0 0.0
    %3101 = vmatpush2.msra.mxu0 0.0
    %3102 = vmatprep.subr.mxu0 0.0
    %3103 = vmatpush2.msra.mxu0 0.0
    %3104 = vmatprep.subr.mxu0 %v2847
    %3105 = vmatpush2.msra.mxu0 %v2846
    %3106 = vmatprep.subr.mxu0 %v2845
    %3107 = vmatpush2.msra.mxu0 %v2844
    %3108 = vmatprep.mubr.f32.mxu0 %v3042
    %3109 = vmatmul.mubr.f32.gmra.mxu0 %v2788
    %v3110 = vpop.f32.mrf.mxu0
    %v3111 = vadd.f32 %v2983, %v3110
    %v3112 = vpop.f32.mrf.mxu0
    %v3113 = vadd.f32 %v2985, %v3112
    %3114 = vmatprep.mubr.f32.mxu0 %v2887
    %3115 = vmatmul.mubr.f32.gmra.mxu0 %v2790
    %v3116 = vpop.f32.mrf.mxu0
    %v3117 = vadd.f32 %v2989, %v3116
    %v3118 = vpop.f32.mrf.mxu0
    %v3119 = vadd.f32 %v2991, %v3118
    %3120 = vmatprep.mubr.f32.mxu0 %v2890
    %3121 = vmatmul.mubr.f32.gmra.mxu0 %v2792
    %v3122 = vpop.f32.mrf.mxu0
    %v3123 = vadd.f32 %v2995, %v3122
    %v3124 = vpop.f32.mrf.mxu0
    %v3125 = vadd.f32 %v2997, %v3124
    %3126 = vmatprep.mubr.f32.mxu0 %v2893
    %3127 = vmatmul.mubr.f32.gmra.mxu0 %v2794
    %v3128 = vpop.f32.mrf.mxu0
    %v3129 = vadd.f32 %v3001, %v3128
    %v3130 = vpop.f32.mrf.mxu0
    %v3131 = vadd.f32 %v3003, %v3130
    %3132 = vmatprep.mubr.f32.mxu0 %v2896
    %3133 = vmatmul.mubr.f32.gmra.mxu0 %v2796
    %v3134 = vpop.f32.mrf.mxu0
    %v3135 = vadd.f32 %v3007, %v3134
    %v3136 = vpop.f32.mrf.mxu0
    %v3137 = vadd.f32 %v3009, %v3136
    %3138 = vmatprep.mubr.f32.mxu0 %v2899
    %3139 = vmatmul.mubr.f32.gmra.mxu0 %v2798
    %v3140 = vpop.f32.mrf.mxu0
    %v3141 = vadd.f32 %v3013, %v3140
    %v3142 = vpop.f32.mrf.mxu0
    %v3143 = vadd.f32 %v3015, %v3142
    %3144 = vmatprep.mubr.f32.mxu0 %v2902
    %3145 = vmatmul.mubr.f32.gmra.mxu0 %v2800
    %v3146 = vpop.f32.mrf.mxu0
    %v3147 = vadd.f32 %v3019, %v3146
    %v3148 = vpop.f32.mrf.mxu0
    %v3149 = vadd.f32 %v3021, %v3148
    %3150 = vmatprep.mubr.f32.mxu0 %v2905
    %3151 = vmatmul.mubr.f32.gmra.mxu0 %v2802
    %v3152 = vpop.f32.mrf.mxu0
    %v3153 = vadd.f32 %v3025, %v3152
    %v3154 = vpop.f32.mrf.mxu0
    %v3155 = vadd.f32 %v3027, %v3154
    %3156 = vmatprep.mubr.f32.mxu0 %v2908
    %3157 = vmatmul.mubr.f32.gmra.mxu0 %v2804
    %v3158 = vpop.f32.mrf.mxu0
    %v3159 = vadd.f32 %v3031, %v3158
    %v3160 = vpop.f32.mrf.mxu0
    %v3161 = vadd.f32 %v3033, %v3160
    %3162 = vmatprep.mubr.f32.mxu0 %v2911
    %3163 = vmatmul.mubr.f32.gmra.mxu0 %v2806
    %v3164 = vpop.f32.mrf.mxu0
    %v3165 = vadd.f32 %v3037, %v3164
    %v3166 = vpop.f32.mrf.mxu0
    %v3167 = vadd.f32 %v3039, %v3166
    %3168 = vdwg.mxu0
    %s3169 = scalar_lea.vmem %s7, 576
    %v3170 = vld [vmem:[%s3169] sm:$0xff]
    %v3171 = vld [vmem:[%s3169 + $0x8] sm:$0xff]
    %v3172 = vld [vmem:[%s3169 + $0x10] sm:$0xff]
    %v3173 = vld [vmem:[%s3169 + $0x18] sm:$0xff]
    %v3174 = vld [vmem:[%s3169 + $0x20] sm:$0xff]
    %v3175 = vld [vmem:[%s3169 + $0x28] sm:$0xff]
    %v3176 = vld [vmem:[%s3169 + $0x30] sm:$0xff]
    %v3177 = vld [vmem:[%s3169 + $0x38] sm:$0xff]
    %v3178 = vld [vmem:[%s3169 + $0x40] sm:$0xff]
    %v3179 = vld [vmem:[%s3169 + $0x48] sm:$0xff]
    %v3180 = vld [vmem:[%s3169 + $0x50] sm:$0xff]
    %v3181 = vld [vmem:[%s3169 + $0x58] sm:$0xff]
    %v3182 = vld [vmem:[%s3169 + $0x60] sm:$0xff]
    %v3183 = vld [vmem:[%s3169 + $0x68] sm:$0xff]
    %v3184 = vld [vmem:[%s3169 + $0x70] sm:$0xff]
    %v3185 = vld [vmem:[%s3169 + $0x78] sm:$0xff]
    %v3186 = vld [vmem:[%s3169 + $0x80] sm:$0xff]
    %v3187 = vld [vmem:[%s3169 + $0x88] sm:$0xff]
    %v3188 = vld [vmem:[%s3169 + $0x90] sm:$0xff]
    %v3189 = vld [vmem:[%s3169 + $0x98] sm:$0xff]
    %v3190 = vld [vmem:[%s3169 + $0xa0] sm:$0xff]
    %v3191 = vld [vmem:[%s3169 + $0xa8] sm:$0xff]
    %v3192 = vld [vmem:[%s3169 + $0xb0] sm:$0xff]
    %v3193 = vld [vmem:[%s3169 + $0xb8] sm:$0xff]
    %v3194 = vld [vmem:[%s3169 + $0xc0] sm:$0xff]
    %v3195 = vld [vmem:[%s3169 + $0xc8] sm:$0xff]
    %v3196 = vld [vmem:[%s3169 + $0xd0] sm:$0xff]
    %v3197 = vld [vmem:[%s3169 + $0xd8] sm:$0xff]
    %v3198 = vld [vmem:[%s3169 + $0xe0] sm:$0xff]
    %v3199 = vld [vmem:[%s3169 + $0xe8] sm:$0xff]
    %v3200 = vld [vmem:[%s3169 + $0xf0] sm:$0xff]
    %v3201 = vld [vmem:[%s3169 + $0xf8] sm:$0xff]
    %v3202 = vld [vmem:[%s3169 + $0x100] sm:$0xff]
    %v3203 = vld [vmem:[%s3169 + $0x108] sm:$0xff]
    %v3204 = vld [vmem:[%s3169 + $0x110] sm:$0xff]
    %v3205 = vld [vmem:[%s3169 + $0x118] sm:$0xff]
    %v3207 = vsel %vm2885, %v2811, 0
    %3209 = vmatprep.subr.mxu0 %v3201
    %3210 = vmatpush1.msra.mxu0 %v3200
    %3211 = vmatprep.subr.mxu0 %v3199
    %3212 = vmatpush1.msra.mxu0 %v3198
    %3213 = vmatprep.subr.mxu0 %v3197
    %3214 = vmatpush1.msra.mxu0 %v3196
    %3215 = vmatprep.subr.mxu0 %v3195
    %3216 = vmatpush1.msra.mxu0 %v3194
    %3217 = vmatprep.subr.mxu0 %v3193
    %3218 = vmatpush1.msra.mxu0 %v3192
    %3219 = vmatprep.subr.mxu0 %v3191
    %3220 = vmatpush1.msra.mxu0 %v3190
    %3221 = vmatprep.subr.mxu0 %v3189
    %3222 = vmatpush1.msra.mxu0 %v3188
    %3223 = vmatprep.subr.mxu0 %v3187
    %3224 = vmatpush1.msra.mxu0 %v3186
    %3225 = vmatprep.subr.mxu0 %v3185
    %3226 = vmatpush1.msra.mxu0 %v3184
    %3227 = vmatprep.subr.mxu0 %v3183
    %3228 = vmatpush1.msra.mxu0 %v3182
    %3229 = vmatprep.subr.mxu0 %v3181
    %3230 = vmatpush1.msra.mxu0 %v3180
    %3231 = vmatprep.subr.mxu0 %v3179
    %3232 = vmatpush1.msra.mxu0 %v3178
    %3233 = vmatprep.subr.mxu0 %v3177
    %3234 = vmatpush1.msra.mxu0 %v3176
    %3235 = vmatprep.subr.mxu0 %v3175
    %3236 = vmatpush1.msra.mxu0 %v3174
    %3237 = vmatprep.subr.mxu0 %v3173
    %3238 = vmatpush1.msra.mxu0 %v3172
    %3239 = vmatprep.subr.mxu0 %v3171
    %3240 = vmatpush1.msra.mxu0 %v3170
    %3241 = vmatprep.subr.mxu0 0.0
    %3242 = vmatpush2.msra.mxu0 0.0
    %3243 = vmatprep.subr.mxu0 0.0
    %3244 = vmatpush2.msra.mxu0 0.0
    %3245 = vmatprep.subr.mxu0 0.0
    %3246 = vmatpush2.msra.mxu0 0.0
    %3247 = vmatprep.subr.mxu0 0.0
    %3248 = vmatpush2.msra.mxu0 0.0
    %3249 = vmatprep.subr.mxu0 0.0
    %3250 = vmatpush2.msra.mxu0 0.0
    %3251 = vmatprep.subr.mxu0 0.0
    %3252 = vmatpush2.msra.mxu0 0.0
    %3253 = vmatprep.subr.mxu0 0.0
    %3254 = vmatpush2.msra.mxu0 0.0
    %3255 = vmatprep.subr.mxu0 0.0
    %3256 = vmatpush2.msra.mxu0 0.0
    %3257 = vmatprep.subr.mxu0 0.0
    %3258 = vmatpush2.msra.mxu0 0.0
    %3259 = vmatprep.subr.mxu0 0.0
    %3260 = vmatpush2.msra.mxu0 0.0
    %3261 = vmatprep.subr.mxu0 0.0
    %3262 = vmatpush2.msra.mxu0 0.0
    %3263 = vmatprep.subr.mxu0 0.0
    %3264 = vmatpush2.msra.mxu0 0.0
    %3265 = vmatprep.subr.mxu0 0.0
    %3266 = vmatpush2.msra.mxu0 0.0
    %3267 = vmatprep.subr.mxu0 0.0
    %3268 = vmatpush2.msra.mxu0 0.0
    %3269 = vmatprep.subr.mxu0 %v3205
    %3270 = vmatpush2.msra.mxu0 %v3204
    %3271 = vmatprep.subr.mxu0 %v3203
    %3272 = vmatpush2.msra.mxu0 %v3202
    %3273 = vmatprep.mubr.f32.mxu0 %v2890
    %3274 = vmatmul.mubr.f32.gmra.mxu0 %v2792
    %v3275 = vpop.f32.mrf.mxu0
    %v3276 = vadd.f32 0.0, %v3275
    %v3277 = vpop.f32.mrf.mxu0
    %v3278 = vadd.f32 0.0, %v3277
    %3279 = vmatprep.mubr.f32.mxu0 %v2893
    %3280 = vmatmul.mubr.f32.gmra.mxu0 %v2794
    %v3281 = vpop.f32.mrf.mxu0
    %v3282 = vadd.f32 0.0, %v3281
    %v3283 = vpop.f32.mrf.mxu0
    %v3284 = vadd.f32 0.0, %v3283
    %3285 = vmatprep.mubr.f32.mxu0 %v2896
    %3286 = vmatmul.mubr.f32.gmra.mxu0 %v2796
    %v3287 = vpop.f32.mrf.mxu0
    %v3288 = vadd.f32 0.0, %v3287
    %v3289 = vpop.f32.mrf.mxu0
    %v3290 = vadd.f32 0.0, %v3289
    %3291 = vmatprep.mubr.f32.mxu0 %v2899
    %3292 = vmatmul.mubr.f32.gmra.mxu0 %v2798
    %v3293 = vpop.f32.mrf.mxu0
    %v3294 = vadd.f32 0.0, %v3293
    %v3295 = vpop.f32.mrf.mxu0
    %v3296 = vadd.f32 0.0, %v3295
    %3297 = vmatprep.mubr.f32.mxu0 %v2902
    %3298 = vmatmul.mubr.f32.gmra.mxu0 %v2800
    %v3299 = vpop.f32.mrf.mxu0
    %v3300 = vadd.f32 0.0, %v3299
    %v3301 = vpop.f32.mrf.mxu0
    %v3302 = vadd.f32 0.0, %v3301
    %3303 = vmatprep.mubr.f32.mxu0 %v2905
    %3304 = vmatmul.mubr.f32.gmra.mxu0 %v2802
    %v3305 = vpop.f32.mrf.mxu0
    %v3306 = vadd.f32 0.0, %v3305
    %v3307 = vpop.f32.mrf.mxu0
    %v3308 = vadd.f32 0.0, %v3307
    %3309 = vmatprep.mubr.f32.mxu0 %v2908
    %3310 = vmatmul.mubr.f32.gmra.mxu0 %v2804
    %v3311 = vpop.f32.mrf.mxu0
    %v3312 = vadd.f32 0.0, %v3311
    %v3313 = vpop.f32.mrf.mxu0
    %v3314 = vadd.f32 0.0, %v3313
    %3315 = vmatprep.mubr.f32.mxu0 %v2911
    %3316 = vmatmul.mubr.f32.gmra.mxu0 %v2806
    %v3317 = vpop.f32.mrf.mxu0
    %v3318 = vadd.f32 0.0, %v3317
    %v3319 = vpop.f32.mrf.mxu0
    %v3320 = vadd.f32 0.0, %v3319
    %3321 = vmatprep.mubr.f32.mxu0 %v2914
    %3322 = vmatmul.mubr.f32.gmra.mxu0 %v2808
    %v3323 = vpop.f32.mrf.mxu0
    %v3324 = vadd.f32 0.0, %v3323
    %v3325 = vpop.f32.mrf.mxu0
    %v3326 = vadd.f32 0.0, %v3325
    %3327 = vmatprep.mubr.f32.mxu0 %v3207
    %3328 = vmatmul.mubr.f32.gmra.mxu0 %v2810
    %v3329 = vpop.f32.mrf.mxu0
    %v3330 = vadd.f32 0.0, %v3329
    %v3331 = vpop.f32.mrf.mxu0
    %v3332 = vadd.f32 0.0, %v3331
    %3333 = vdwg.mxu0
    %v3334 = vadd.f32 %v3111, %v3276
    %v3335 = vadd.f32 %v3113, %v3278
    %v3336 = vadd.f32 %v3117, %v3282
    %v3337 = vadd.f32 %v3119, %v3284
    %v3338 = vadd.f32 %v3123, %v3288
    %v3339 = vadd.f32 %v3125, %v3290
    %v3340 = vadd.f32 %v3129, %v3294
    %v3341 = vadd.f32 %v3131, %v3296
    %v3342 = vadd.f32 %v3135, %v3300
    %v3343 = vadd.f32 %v3137, %v3302
    %v3344 = vadd.f32 %v3141, %v3306
    %v3345 = vadd.f32 %v3143, %v3308
    %v3346 = vadd.f32 %v3147, %v3312
    %v3347 = vadd.f32 %v3149, %v3314
    %v3348 = vadd.f32 %v3153, %v3318
    %v3349 = vadd.f32 %v3155, %v3320
    %v3350 = vadd.f32 %v3159, %v3324
    %v3351 = vadd.f32 %v3161, %v3326
    %v3352 = vadd.f32 %v3165, %v3330
    %v3353 = vadd.f32 %v3167, %v3332
    %v3354 = vld [vmem:[#allocation6] ss:$2 sm:$0x3]
    %v3356 = vlaneseq
    %v3357 = vshrl.u32 %v3356, 7
    %v3358 = vsub.s32 0, %v3357
    %v3359 = vrot.slane %v3354, %v3358
    %v3360 = vlaneseq
    %v3361 = vshrl.u32 %v3360, 7
    %v3362 = vsub.s32 1, %v3361
    %v3363 = vrot.slane %v3354, %v3362
    %v3366 = vadd.f32 %v3334, %v3359
    %v3367 = vadd.f32 %v3335, %v3363
    %v3368 = vadd.f32 %v3336, %v3359
    %v3369 = vadd.f32 %v3337, %v3363
    %v3370 = vadd.f32 %v3338, %v3359
    %v3371 = vadd.f32 %v3339, %v3363
    %v3372 = vadd.f32 %v3340, %v3359
    %v3373 = vadd.f32 %v3341, %v3363
    %v3374 = vadd.f32 %v3342, %v3359
    %v3375 = vadd.f32 %v3343, %v3363
    %v3376 = vadd.f32 %v3344, %v3359
    %v3377 = vadd.f32 %v3345, %v3363
    %v3378 = vadd.f32 %v3346, %v3359
    %v3379 = vadd.f32 %v3347, %v3363
    %v3380 = vadd.f32 %v3348, %v3359
    %v3381 = vadd.f32 %v3349, %v3363
    %v3382 = vadd.f32 %v3350, %v3359
    %v3383 = vadd.f32 %v3351, %v3363
    %v3384 = vadd.f32 %v3352, %v3359
    %v3385 = vadd.f32 %v3353, %v3363
    %v3386 = vmax.f32 %v3366, 0.0
    %v3387 = vmax.f32 %v3367, 0.0
    %v3388 = vmax.f32 %v3368, 0.0
    %v3389 = vmax.f32 %v3369, 0.0
    %v3390 = vmax.f32 %v3370, 0.0
    %v3391 = vmax.f32 %v3371, 0.0
    %v3392 = vmax.f32 %v3372, 0.0
    %v3393 = vmax.f32 %v3373, 0.0
    %v3394 = vmax.f32 %v3374, 0.0
    %v3395 = vmax.f32 %v3375, 0.0
    %v3396 = vmax.f32 %v3376, 0.0
    %v3397 = vmax.f32 %v3377, 0.0
    %v3398 = vmax.f32 %v3378, 0.0
    %v3399 = vmax.f32 %v3379, 0.0
    %v3400 = vmax.f32 %v3380, 0.0
    %v3401 = vmax.f32 %v3381, 0.0
    %v3402 = vmax.f32 %v3382, 0.0
    %v3403 = vmax.f32 %v3383, 0.0
    %v3404 = vmax.f32 %v3384, 0.0
    %v3405 = vmax.f32 %v3385, 0.0
    %s3406 = scalar_lea.vmem [#allocation6], 1
    %v3407 = vld [vmem:[%s3406] ss:$2 sm:$0x3]
    %v3409 = vlaneseq
    %v3410 = vshrl.u32 %v3409, 7
    %v3411 = vsub.s32 0, %v3410
    %v3412 = vrot.slane %v3407, %v3411
    %v3413 = vlaneseq
    %v3414 = vshrl.u32 %v3413, 7
    %v3415 = vsub.s32 1, %v3414
    %v3416 = vrot.slane %v3407, %v3415
    %v3419 = vadd.f32 %v3386, %v3412
    %v3420 = vadd.f32 %v3387, %v3416
    %v3421 = vadd.f32 %v3388, %v3412
    %v3422 = vadd.f32 %v3389, %v3416
    %v3423 = vadd.f32 %v3390, %v3412
    %v3424 = vadd.f32 %v3391, %v3416
    %v3425 = vadd.f32 %v3392, %v3412
    %v3426 = vadd.f32 %v3393, %v3416
    %v3427 = vadd.f32 %v3394, %v3412
    %v3428 = vadd.f32 %v3395, %v3416
    %v3429 = vadd.f32 %v3396, %v3412
    %v3430 = vadd.f32 %v3397, %v3416
    %v3431 = vadd.f32 %v3398, %v3412
    %v3432 = vadd.f32 %v3399, %v3416
    %v3433 = vadd.f32 %v3400, %v3412
    %v3434 = vadd.f32 %v3401, %v3416
    %v3435 = vadd.f32 %v3402, %v3412
    %v3436 = vadd.f32 %v3403, %v3416
    %v3437 = vadd.f32 %v3404, %v3412
    %v3438 = vadd.f32 %v3405, %v3416
    %v3439 = vmax.f32 %v3419, %v3421
    %v3440 = vmax.f32 %v3420, %v3422
    %v3441 = vmax.f32 %v3423, %v3425
    %v3442 = vmax.f32 %v3424, %v3426
    %v3443 = vmax.f32 %v3427, %v3429
    %v3444 = vmax.f32 %v3428, %v3430
    %v3445 = vmax.f32 %v3431, %v3433
    %v3446 = vmax.f32 %v3432, %v3434
    %v3447 = vmax.f32 %v3435, %v3437
    %v3448 = vmax.f32 %v3436, %v3438
    %v3449 = vmax.f32 %v3439, %v3440
    %v3450 = vmax.f32 %v3441, %v3442
    %v3451 = vmax.f32 %v3443, %v3444
    %v3452 = vmax.f32 %v3445, %v3446
    %v3453 = vmax.f32 %v3447, %v3448
    %v3454 = vld [vmem:[%s9] sm:$0xff]
    %v3455 = vld [vmem:[%s9 + $0x8] sm:$0xff]
    %v3456 = vld [vmem:[%s9 + $0x10] sm:$0xff]
    %v3457 = vld [vmem:[%s9 + $0x18] sm:$0xff]
    %v3458 = vld [vmem:[%s9 + $0x20] sm:$0xff]
    %v3459 = vld [vmem:[%s9 + $0x28] sm:$0xff]
    %v3460 = vld [vmem:[%s9 + $0x30] sm:$0xff]
    %v3461 = vld [vmem:[%s9 + $0x38] sm:$0xf]
    %s3462 = scalar_lea.vmem %s9, 64
    %v3463 = vld [vmem:[%s3462] sm:$0xff]
    %v3464 = vld [vmem:[%s3462 + $0x8] sm:$0xff]
    %v3465 = vld [vmem:[%s3462 + $0x10] sm:$0xff]
    %v3466 = vld [vmem:[%s3462 + $0x18] sm:$0xff]
    %v3467 = vld [vmem:[%s3462 + $0x20] sm:$0xff]
    %v3468 = vld [vmem:[%s3462 + $0x28] sm:$0xff]
    %v3469 = vld [vmem:[%s3462 + $0x30] sm:$0xff]
    %v3470 = vld [vmem:[%s3462 + $0x38] sm:$0xf]
    %vm3471 = vcmask 490496
    %v3473 = vsel %vm3471, %v3450, 0
    %v3476 = vsel %vm3471, %v3451, 0
    %v3479 = vsel %vm3471, %v3452, 0
    %vm3481 = vcmask 1043456
    %v3483 = vsel %vm3481, %v3470, 0
    %3485 = vmatprep.subr.mxu0 0.0
    %3486 = vmatpush1.msra.mxu0 0.0
    %3487 = vmatprep.subr.mxu0 0.0
    %3488 = vmatpush1.msra.mxu0 0.0
    %3489 = vmatprep.subr.mxu0 0.0
    %3490 = vmatpush1.msra.mxu0 0.0
    %3491 = vmatprep.subr.mxu0 0.0
    %3492 = vmatpush1.msra.mxu0 0.0
    %3493 = vmatprep.subr.mxu0 0.0
    %3494 = vmatpush1.msra.mxu0 0.0
    %3495 = vmatprep.subr.mxu0 0.0
    %3496 = vmatpush1.msra.mxu0 0.0
    %3497 = vmatprep.subr.mxu0 0.0
    %3498 = vmatpush1.msra.mxu0 0.0
    %3499 = vmatprep.subr.mxu0 0.0
    %3500 = vmatpush1.msra.mxu0 0.0
    %3501 = vmatprep.subr.mxu0 0.0
    %3502 = vmatpush1.msra.mxu0 %v3483
    %3503 = vmatprep.subr.mxu0 0.0
    %3504 = vmatpush1.msra.mxu0 %v3469
    %3505 = vmatprep.subr.mxu0 0.0
    %3506 = vmatpush1.msra.mxu0 %v3468
    %3507 = vmatprep.subr.mxu0 0.0
    %3508 = vmatpush1.msra.mxu0 %v3467
    %3509 = vmatprep.subr.mxu0 0.0
    %3510 = vmatpush1.msra.mxu0 %v3466
    %3511 = vmatprep.subr.mxu0 0.0
    %3512 = vmatpush1.msra.mxu0 %v3465
    %3513 = vmatprep.subr.mxu0 0.0
    %3514 = vmatpush1.msra.mxu0 %v3464
    %3515 = vmatprep.subr.mxu0 0.0
    %3516 = vmatpush1.msra.mxu0 %v3463
    %3517 = vmatprep.subr.mxu0 0.0
    %3518 = vmatpush2.msra.mxu0 0.0
    %3519 = vmatprep.subr.mxu0 0.0
    %3520 = vmatpush2.msra.mxu0 0.0
    %3521 = vmatprep.subr.mxu0 0.0
    %3522 = vmatpush2.msra.mxu0 0.0
    %3523 = vmatprep.subr.mxu0 0.0
    %3524 = vmatpush2.msra.mxu0 0.0
    %3525 = vmatprep.subr.mxu0 0.0
    %3526 = vmatpush2.msra.mxu0 0.0
    %3527 = vmatprep.subr.mxu0 0.0
    %3528 = vmatpush2.msra.mxu0 0.0
    %3529 = vmatprep.subr.mxu0 0.0
    %3530 = vmatpush2.msra.mxu0 0.0
    %3531 = vmatprep.subr.mxu0 0.0
    %3532 = vmatpush2.msra.mxu0 0.0
    %3533 = vmatprep.subr.mxu0 0.0
    %3534 = vmatpush2.msra.mxu0 0.0
    %3535 = vmatprep.subr.mxu0 0.0
    %3536 = vmatpush2.msra.mxu0 0.0
    %3537 = vmatprep.subr.mxu0 0.0
    %3538 = vmatpush2.msra.mxu0 0.0
    %3539 = vmatprep.subr.mxu0 0.0
    %3540 = vmatpush2.msra.mxu0 0.0
    %3541 = vmatprep.subr.mxu0 0.0
    %3542 = vmatpush2.msra.mxu0 0.0
    %3543 = vmatprep.subr.mxu0 0.0
    %3544 = vmatpush2.msra.mxu0 0.0
    %3545 = vmatprep.subr.mxu0 0.0
    %3546 = vmatpush2.msra.mxu0 0.0
    %3547 = vmatprep.subr.mxu0 0.0
    %3548 = vmatpush2.msra.mxu0 0.0
    %3549 = vmatprep.mubr.f32.mxu0 0.0
    %3550 = vmatmul.mubr.f32.gmra.mxu0 %v3473
    %v3551 = vpop.f32.mrf.mxu0
    %v3552 = vadd.f32 0.0, %v3551
    %v3553 = vpop.f32.mrf.mxu0
    %3554 = vmatprep.mubr.f32.mxu0 0.0
    %3555 = vmatmul.mubr.f32.gmra.mxu0 %v3476
    %v3556 = vpop.f32.mrf.mxu0
    %v3557 = vadd.f32 0.0, %v3556
    %v3558 = vpop.f32.mrf.mxu0
    %3559 = vmatprep.mubr.f32.mxu0 0.0
    %3560 = vmatmul.mubr.f32.gmra.mxu0 %v3479
    %v3561 = vpop.f32.mrf.mxu0
    %v3562 = vadd.f32 0.0, %v3561
    %v3563 = vpop.f32.mrf.mxu0
    %3564 = vdwg.mxu0
    %v3566 = vsel %vm3471, %v3449, 0
    %v3569 = vsel %vm3481, %v3461, 0
    %3571 = vmatprep.subr.mxu0 0.0
    %3572 = vmatpush1.msra.mxu0 0.0
    %3573 = vmatprep.subr.mxu0 0.0
    %3574 = vmatpush1.msra.mxu0 0.0
    %3575 = vmatprep.subr.mxu0 0.0
    %3576 = vmatpush1.msra.mxu0 0.0
    %3577 = vmatprep.subr.mxu0 0.0
    %3578 = vmatpush1.msra.mxu0 0.0
    %3579 = vmatprep.subr.mxu0 0.0
    %3580 = vmatpush1.msra.mxu0 0.0
    %3581 = vmatprep.subr.mxu0 0.0
    %3582 = vmatpush1.msra.mxu0 0.0
    %3583 = vmatprep.subr.mxu0 0.0
    %3584 = vmatpush1.msra.mxu0 0.0
    %3585 = vmatprep.subr.mxu0 0.0
    %3586 = vmatpush1.msra.mxu0 0.0
    %3587 = vmatprep.subr.mxu0 0.0
    %3588 = vmatpush1.msra.mxu0 %v3569
    %3589 = vmatprep.subr.mxu0 0.0
    %3590 = vmatpush1.msra.mxu0 %v3460
    %3591 = vmatprep.subr.mxu0 0.0
    %3592 = vmatpush1.msra.mxu0 %v3459
    %3593 = vmatprep.subr.mxu0 0.0
    %3594 = vmatpush1.msra.mxu0 %v3458
    %3595 = vmatprep.subr.mxu0 0.0
    %3596 = vmatpush1.msra.mxu0 %v3457
    %3597 = vmatprep.subr.mxu0 0.0
    %3598 = vmatpush1.msra.mxu0 %v3456
    %3599 = vmatprep.subr.mxu0 0.0
    %3600 = vmatpush1.msra.mxu0 %v3455
    %3601 = vmatprep.subr.mxu0 0.0
    %3602 = vmatpush1.msra.mxu0 %v3454
    %3603 = vmatprep.subr.mxu0 0.0
    %3604 = vmatpush2.msra.mxu0 0.0
    %3605 = vmatprep.subr.mxu0 0.0
    %3606 = vmatpush2.msra.mxu0 0.0
    %3607 = vmatprep.subr.mxu0 0.0
    %3608 = vmatpush2.msra.mxu0 0.0
    %3609 = vmatprep.subr.mxu0 0.0
    %3610 = vmatpush2.msra.mxu0 0.0
    %3611 = vmatprep.subr.mxu0 0.0
    %3612 = vmatpush2.msra.mxu0 0.0
    %3613 = vmatprep.subr.mxu0 0.0
    %3614 = vmatpush2.msra.mxu0 0.0
    %3615 = vmatprep.subr.mxu0 0.0
    %3616 = vmatpush2.msra.mxu0 0.0
    %3617 = vmatprep.subr.mxu0 0.0
    %3618 = vmatpush2.msra.mxu0 0.0
    %3619 = vmatprep.subr.mxu0 0.0
    %3620 = vmatpush2.msra.mxu0 0.0
    %3621 = vmatprep.subr.mxu0 0.0
    %3622 = vmatpush2.msra.mxu0 0.0
    %3623 = vmatprep.subr.mxu0 0.0
    %3624 = vmatpush2.msra.mxu0 0.0
    %3625 = vmatprep.subr.mxu0 0.0
    %3626 = vmatpush2.msra.mxu0 0.0
    %3627 = vmatprep.subr.mxu0 0.0
    %3628 = vmatpush2.msra.mxu0 0.0
    %3629 = vmatprep.subr.mxu0 0.0
    %3630 = vmatpush2.msra.mxu0 0.0
    %3631 = vmatprep.subr.mxu0 0.0
    %3632 = vmatpush2.msra.mxu0 0.0
    %3633 = vmatprep.subr.mxu0 0.0
    %3634 = vmatpush2.msra.mxu0 0.0
    %3635 = vmatprep.mubr.f32.mxu0 0.0
    %3636 = vmatmul.mubr.f32.gmra.mxu0 %v3566
    %v3637 = vpop.f32.mrf.mxu0
    %v3638 = vadd.f32 %v3552, %v3637
    %v3639 = vpop.f32.mrf.mxu0
    %3640 = vmatprep.mubr.f32.mxu0 0.0
    %3641 = vmatmul.mubr.f32.gmra.mxu0 %v3473
    %v3642 = vpop.f32.mrf.mxu0
    %v3643 = vadd.f32 %v3557, %v3642
    %v3644 = vpop.f32.mrf.mxu0
    %3645 = vmatprep.mubr.f32.mxu0 0.0
    %3646 = vmatmul.mubr.f32.gmra.mxu0 %v3476
    %v3647 = vpop.f32.mrf.mxu0
    %v3648 = vadd.f32 %v3562, %v3647
    %v3649 = vpop.f32.mrf.mxu0
    %3650 = vdwg.mxu0
    %s3651 = scalar_lea.vmem %s9, 128
    %v3652 = vld [vmem:[%s3651] sm:$0xff]
    %v3653 = vld [vmem:[%s3651 + $0x8] sm:$0xff]
    %v3654 = vld [vmem:[%s3651 + $0x10] sm:$0xff]
    %v3655 = vld [vmem:[%s3651 + $0x18] sm:$0xff]
    %v3656 = vld [vmem:[%s3651 + $0x20] sm:$0xff]
    %v3657 = vld [vmem:[%s3651 + $0x28] sm:$0xff]
    %v3658 = vld [vmem:[%s3651 + $0x30] sm:$0xff]
    %v3659 = vld [vmem:[%s3651 + $0x38] sm:$0xf]
    %v3661 = vsel %vm3471, %v3453, 0
    %v3664 = vsel %vm3481, %v3659, 0
    %3666 = vmatprep.subr.mxu0 0.0
    %3667 = vmatpush1.msra.mxu0 0.0
    %3668 = vmatprep.subr.mxu0 0.0
    %3669 = vmatpush1.msra.mxu0 0.0
    %3670 = vmatprep.subr.mxu0 0.0
    %3671 = vmatpush1.msra.mxu0 0.0
    %3672 = vmatprep.subr.mxu0 0.0
    %3673 = vmatpush1.msra.mxu0 0.0
    %3674 = vmatprep.subr.mxu0 0.0
    %3675 = vmatpush1.msra.mxu0 0.0
    %3676 = vmatprep.subr.mxu0 0.0
    %3677 = vmatpush1.msra.mxu0 0.0
    %3678 = vmatprep.subr.mxu0 0.0
    %3679 = vmatpush1.msra.mxu0 0.0
    %3680 = vmatprep.subr.mxu0 0.0
    %3681 = vmatpush1.msra.mxu0 0.0
    %3682 = vmatprep.subr.mxu0 0.0
    %3683 = vmatpush1.msra.mxu0 %v3664
    %3684 = vmatprep.subr.mxu0 0.0
    %3685 = vmatpush1.msra.mxu0 %v3658
    %3686 = vmatprep.subr.mxu0 0.0
    %3687 = vmatpush1.msra.mxu0 %v3657
    %3688 = vmatprep.subr.mxu0 0.0
    %3689 = vmatpush1.msra.mxu0 %v3656
    %3690 = vmatprep.subr.mxu0 0.0
    %3691 = vmatpush1.msra.mxu0 %v3655
    %3692 = vmatprep.subr.mxu0 0.0
    %3693 = vmatpush1.msra.mxu0 %v3654
    %3694 = vmatprep.subr.mxu0 0.0
    %3695 = vmatpush1.msra.mxu0 %v3653
    %3696 = vmatprep.subr.mxu0 0.0
    %3697 = vmatpush1.msra.mxu0 %v3652
    %3698 = vmatprep.subr.mxu0 0.0
    %3699 = vmatpush2.msra.mxu0 0.0
    %3700 = vmatprep.subr.mxu0 0.0
    %3701 = vmatpush2.msra.mxu0 0.0
    %3702 = vmatprep.subr.mxu0 0.0
    %3703 = vmatpush2.msra.mxu0 0.0
    %3704 = vmatprep.subr.mxu0 0.0
    %3705 = vmatpush2.msra.mxu0 0.0
    %3706 = vmatprep.subr.mxu0 0.0
    %3707 = vmatpush2.msra.mxu0 0.0
    %3708 = vmatprep.subr.mxu0 0.0
    %3709 = vmatpush2.msra.mxu0 0.0
    %3710 = vmatprep.subr.mxu0 0.0
    %3711 = vmatpush2.msra.mxu0 0.0
    %3712 = vmatprep.subr.mxu0 0.0
    %3713 = vmatpush2.msra.mxu0 0.0
    %3714 = vmatprep.subr.mxu0 0.0
    %3715 = vmatpush2.msra.mxu0 0.0
    %3716 = vmatprep.subr.mxu0 0.0
    %3717 = vmatpush2.msra.mxu0 0.0
    %3718 = vmatprep.subr.mxu0 0.0
    %3719 = vmatpush2.msra.mxu0 0.0
    %3720 = vmatprep.subr.mxu0 0.0
    %3721 = vmatpush2.msra.mxu0 0.0
    %3722 = vmatprep.subr.mxu0 0.0
    %3723 = vmatpush2.msra.mxu0 0.0
    %3724 = vmatprep.subr.mxu0 0.0
    %3725 = vmatpush2.msra.mxu0 0.0
    %3726 = vmatprep.subr.mxu0 0.0
    %3727 = vmatpush2.msra.mxu0 0.0
    %3728 = vmatprep.subr.mxu0 0.0
    %3729 = vmatpush2.msra.mxu0 0.0
    %3730 = vmatprep.mubr.f32.mxu0 0.0
    %3731 = vmatmul.mubr.f32.gmra.mxu0 %v3476
    %v3732 = vpop.f32.mrf.mxu0
    %v3733 = vadd.f32 0.0, %v3732
    %v3734 = vpop.f32.mrf.mxu0
    %3735 = vmatprep.mubr.f32.mxu0 0.0
    %3736 = vmatmul.mubr.f32.gmra.mxu0 %v3479
    %v3737 = vpop.f32.mrf.mxu0
    %v3738 = vadd.f32 0.0, %v3737
    %v3739 = vpop.f32.mrf.mxu0
    %3740 = vmatprep.mubr.f32.mxu0 0.0
    %3741 = vmatmul.mubr.f32.gmra.mxu0 %v3661
    %v3742 = vpop.f32.mrf.mxu0
    %v3743 = vadd.f32 0.0, %v3742
    %v3744 = vpop.f32.mrf.mxu0
    %3745 = vdwg.mxu0
    %v3746 = vadd.f32 %v3638, %v3733
    %v3747 = vadd.f32 %v3643, %v3738
    %v3748 = vadd.f32 %v3648, %v3743
    %v3749 = vld [vmem:[#allocation7] sm:$0x1]
    %v3750 = vlaneseq
    %v3751 = vshrl.u32 %v3750, 7
    %v3752 = vsub.s32 0, %v3751
    %v3753 = vrot.slane %v3749, %v3752
    %v3754 = vadd.f32 %v3746, %v3753
    %v3755 = vadd.f32 %v3747, %v3753
    %v3756 = vadd.f32 %v3748, %v3753
    %v3757 = vmax.f32 %v3754, 0.0
    %v3758 = vmax.f32 %v3755, 0.0
    %v3759 = vmax.f32 %v3756, 0.0
    %v3760 = vld [vmem:[#allocation7 + $0x1] sm:$0x1]
    %v3761 = vlaneseq
    %v3762 = vshrl.u32 %v3761, 7
    %v3763 = vsub.s32 0, %v3762
    %v3764 = vrot.slane %v3760, %v3763
    %v3765 = vadd.f32 %v3757, %v3764
    %v3766 = vadd.f32 %v3758, %v3764
    %v3767 = vadd.f32 %v3759, %v3764
    %v3768 = vld [vmem:[%s11] sm:$0xff]
    %v3769 = vld [vmem:[%s11 + $0x8] sm:$0xff]
    %v3770 = vld [vmem:[%s11 + $0x10] sm:$0xff]
    %v3771 = vld [vmem:[%s11 + $0x18] sm:$0xff]
    %v3772 = vld [vmem:[%s11 + $0x20] sm:$0xff]
    %v3773 = vld [vmem:[%s11 + $0x28] sm:$0xff]
    %s3774 = scalar_lea.vmem %s11, 48
    %v3775 = vld [vmem:[%s3774] sm:$0xff]
    %v3776 = vld [vmem:[%s3774 + $0x8] sm:$0xff]
    %v3777 = vld [vmem:[%s3774 + $0x10] sm:$0xff]
    %v3778 = vld [vmem:[%s3774 + $0x18] sm:$0xff]
    %v3779 = vld [vmem:[%s3774 + $0x20] sm:$0xff]
    %v3780 = vld [vmem:[%s3774 + $0x28] sm:$0xff]
    %vm3781 = vcmask 392192
    %v3783 = vsel %vm3781, %v3766, 0
    %3785 = vmatprep.subr.mxu0 0.0
    %3786 = vmatpush1.msra.mxu0 0.0
    %3787 = vmatprep.subr.mxu0 0.0
    %3788 = vmatpush1.msra.mxu0 0.0
    %3789 = vmatprep.subr.mxu0 0.0
    %3790 = vmatpush1.msra.mxu0 0.0
    %3791 = vmatprep.subr.mxu0 0.0
    %3792 = vmatpush1.msra.mxu0 0.0
    %3793 = vmatprep.subr.mxu0 0.0
    %3794 = vmatpush1.msra.mxu0 0.0
    %3795 = vmatprep.subr.mxu0 0.0
    %3796 = vmatpush1.msra.mxu0 0.0
    %3797 = vmatprep.subr.mxu0 0.0
    %3798 = vmatpush1.msra.mxu0 0.0
    %3799 = vmatprep.subr.mxu0 0.0
    %3800 = vmatpush1.msra.mxu0 0.0
    %3801 = vmatprep.subr.mxu0 0.0
    %3802 = vmatpush1.msra.mxu0 0.0
    %3803 = vmatprep.subr.mxu0 0.0
    %3804 = vmatpush1.msra.mxu0 0.0
    %3805 = vmatprep.subr.mxu0 0.0
    %3806 = vmatpush1.msra.mxu0 %v3780
    %3807 = vmatprep.subr.mxu0 0.0
    %3808 = vmatpush1.msra.mxu0 %v3779
    %3809 = vmatprep.subr.mxu0 0.0
    %3810 = vmatpush1.msra.mxu0 %v3778
    %3811 = vmatprep.subr.mxu0 0.0
    %3812 = vmatpush1.msra.mxu0 %v3777
    %3813 = vmatprep.subr.mxu0 0.0
    %3814 = vmatpush1.msra.mxu0 %v3776
    %3815 = vmatprep.subr.mxu0 0.0
    %3816 = vmatpush1.msra.mxu0 %v3775
    %3817 = vmatprep.subr.mxu0 0.0
    %3818 = vmatpush2.msra.mxu0 0.0
    %3819 = vmatprep.subr.mxu0 0.0
    %3820 = vmatpush2.msra.mxu0 0.0
    %3821 = vmatprep.subr.mxu0 0.0
    %3822 = vmatpush2.msra.mxu0 0.0
    %3823 = vmatprep.subr.mxu0 0.0
    %3824 = vmatpush2.msra.mxu0 0.0
    %3825 = vmatprep.subr.mxu0 0.0
    %3826 = vmatpush2.msra.mxu0 0.0
    %3827 = vmatprep.subr.mxu0 0.0
    %3828 = vmatpush2.msra.mxu0 0.0
    %3829 = vmatprep.subr.mxu0 0.0
    %3830 = vmatpush2.msra.mxu0 0.0
    %3831 = vmatprep.subr.mxu0 0.0
    %3832 = vmatpush2.msra.mxu0 0.0
    %3833 = vmatprep.subr.mxu0 0.0
    %3834 = vmatpush2.msra.mxu0 0.0
    %3835 = vmatprep.subr.mxu0 0.0
    %3836 = vmatpush2.msra.mxu0 0.0
    %3837 = vmatprep.subr.mxu0 0.0
    %3838 = vmatpush2.msra.mxu0 0.0
    %3839 = vmatprep.subr.mxu0 0.0
    %3840 = vmatpush2.msra.mxu0 0.0
    %3841 = vmatprep.subr.mxu0 0.0
    %3842 = vmatpush2.msra.mxu0 0.0
    %3843 = vmatprep.subr.mxu0 0.0
    %3844 = vmatpush2.msra.mxu0 0.0
    %3845 = vmatprep.subr.mxu0 0.0
    %3846 = vmatpush2.msra.mxu0 0.0
    %3847 = vmatprep.subr.mxu0 0.0
    %3848 = vmatpush2.msra.mxu0 0.0
    %3849 = vmatprep.mubr.f32.mxu0 0.0
    %3850 = vmatmul.mubr.f32.gmra.mxu0 %v3783
    %v3851 = vpop.f32.mrf.mxu0
    %v3852 = vadd.f32 0.0, %v3851
    %v3853 = vpop.f32.mrf.mxu0
    %3854 = vdwg.mxu0
    %v3856 = vsel %vm3781, %v3765, 0
    %3858 = vmatprep.subr.mxu0 0.0
    %3859 = vmatpush1.msra.mxu0 0.0
    %3860 = vmatprep.subr.mxu0 0.0
    %3861 = vmatpush1.msra.mxu0 0.0
    %3862 = vmatprep.subr.mxu0 0.0
    %3863 = vmatpush1.msra.mxu0 0.0
    %3864 = vmatprep.subr.mxu0 0.0
    %3865 = vmatpush1.msra.mxu0 0.0
    %3866 = vmatprep.subr.mxu0 0.0
    %3867 = vmatpush1.msra.mxu0 0.0
    %3868 = vmatprep.subr.mxu0 0.0
    %3869 = vmatpush1.msra.mxu0 0.0
    %3870 = vmatprep.subr.mxu0 0.0
    %3871 = vmatpush1.msra.mxu0 0.0
    %3872 = vmatprep.subr.mxu0 0.0
    %3873 = vmatpush1.msra.mxu0 0.0
    %3874 = vmatprep.subr.mxu0 0.0
    %3875 = vmatpush1.msra.mxu0 0.0
    %3876 = vmatprep.subr.mxu0 0.0
    %3877 = vmatpush1.msra.mxu0 0.0
    %3878 = vmatprep.subr.mxu0 0.0
    %3879 = vmatpush1.msra.mxu0 %v3773
    %3880 = vmatprep.subr.mxu0 0.0
    %3881 = vmatpush1.msra.mxu0 %v3772
    %3882 = vmatprep.subr.mxu0 0.0
    %3883 = vmatpush1.msra.mxu0 %v3771
    %3884 = vmatprep.subr.mxu0 0.0
    %3885 = vmatpush1.msra.mxu0 %v3770
    %3886 = vmatprep.subr.mxu0 0.0
    %3887 = vmatpush1.msra.mxu0 %v3769
    %3888 = vmatprep.subr.mxu0 0.0
    %3889 = vmatpush1.msra.mxu0 %v3768
    %3890 = vmatprep.subr.mxu0 0.0
    %3891 = vmatpush2.msra.mxu0 0.0
    %3892 = vmatprep.subr.mxu0 0.0
    %3893 = vmatpush2.msra.mxu0 0.0
    %3894 = vmatprep.subr.mxu0 0.0
    %3895 = vmatpush2.msra.mxu0 0.0
    %3896 = vmatprep.subr.mxu0 0.0
    %3897 = vmatpush2.msra.mxu0 0.0
    %3898 = vmatprep.subr.mxu0 0.0
    %3899 = vmatpush2.msra.mxu0 0.0
    %3900 = vmatprep.subr.mxu0 0.0
    %3901 = vmatpush2.msra.mxu0 0.0
    %3902 = vmatprep.subr.mxu0 0.0
    %3903 = vmatpush2.msra.mxu0 0.0
    %3904 = vmatprep.subr.mxu0 0.0
    %3905 = vmatpush2.msra.mxu0 0.0
    %3906 = vmatprep.subr.mxu0 0.0
    %3907 = vmatpush2.msra.mxu0 0.0
    %3908 = vmatprep.subr.mxu0 0.0
    %3909 = vmatpush2.msra.mxu0 0.0
    %3910 = vmatprep.subr.mxu0 0.0
    %3911 = vmatpush2.msra.mxu0 0.0
    %3912 = vmatprep.subr.mxu0 0.0
    %3913 = vmatpush2.msra.mxu0 0.0
    %3914 = vmatprep.subr.mxu0 0.0
    %3915 = vmatpush2.msra.mxu0 0.0
    %3916 = vmatprep.subr.mxu0 0.0
    %3917 = vmatpush2.msra.mxu0 0.0
    %3918 = vmatprep.subr.mxu0 0.0
    %3919 = vmatpush2.msra.mxu0 0.0
    %3920 = vmatprep.subr.mxu0 0.0
    %3921 = vmatpush2.msra.mxu0 0.0
    %3922 = vmatprep.mubr.f32.mxu0 0.0
    %3923 = vmatmul.mubr.f32.gmra.mxu0 %v3856
    %v3924 = vpop.f32.mrf.mxu0
    %v3925 = vadd.f32 %v3852, %v3924
    %v3926 = vpop.f32.mrf.mxu0
    %3927 = vdwg.mxu0
    %s3928 = scalar_lea.vmem %s11, 96
    %v3929 = vld [vmem:[%s3928] sm:$0xff]
    %v3930 = vld [vmem:[%s3928 + $0x8] sm:$0xff]
    %v3931 = vld [vmem:[%s3928 + $0x10] sm:$0xff]
    %v3932 = vld [vmem:[%s3928 + $0x18] sm:$0xff]
    %v3933 = vld [vmem:[%s3928 + $0x20] sm:$0xff]
    %v3934 = vld [vmem:[%s3928 + $0x28] sm:$0xff]
    %v3936 = vsel %vm3781, %v3767, 0
    %3938 = vmatprep.subr.mxu0 0.0
    %3939 = vmatpush1.msra.mxu0 0.0
    %3940 = vmatprep.subr.mxu0 0.0
    %3941 = vmatpush1.msra.mxu0 0.0
    %3942 = vmatprep.subr.mxu0 0.0
    %3943 = vmatpush1.msra.mxu0 0.0
    %3944 = vmatprep.subr.mxu0 0.0
    %3945 = vmatpush1.msra.mxu0 0.0
    %3946 = vmatprep.subr.mxu0 0.0
    %3947 = vmatpush1.msra.mxu0 0.0
    %3948 = vmatprep.subr.mxu0 0.0
    %3949 = vmatpush1.msra.mxu0 0.0
    %3950 = vmatprep.subr.mxu0 0.0
    %3951 = vmatpush1.msra.mxu0 0.0
    %3952 = vmatprep.subr.mxu0 0.0
    %3953 = vmatpush1.msra.mxu0 0.0
    %3954 = vmatprep.subr.mxu0 0.0
    %3955 = vmatpush1.msra.mxu0 0.0
    %3956 = vmatprep.subr.mxu0 0.0
    %3957 = vmatpush1.msra.mxu0 0.0
    %3958 = vmatprep.subr.mxu0 0.0
    %3959 = vmatpush1.msra.mxu0 %v3934
    %3960 = vmatprep.subr.mxu0 0.0
    %3961 = vmatpush1.msra.mxu0 %v3933
    %3962 = vmatprep.subr.mxu0 0.0
    %3963 = vmatpush1.msra.mxu0 %v3932
    %3964 = vmatprep.subr.mxu0 0.0
    %3965 = vmatpush1.msra.mxu0 %v3931
    %3966 = vmatprep.subr.mxu0 0.0
    %3967 = vmatpush1.msra.mxu0 %v3930
    %3968 = vmatprep.subr.mxu0 0.0
    %3969 = vmatpush1.msra.mxu0 %v3929
    %3970 = vmatprep.subr.mxu0 0.0
    %3971 = vmatpush2.msra.mxu0 0.0
    %3972 = vmatprep.subr.mxu0 0.0
    %3973 = vmatpush2.msra.mxu0 0.0
    %3974 = vmatprep.subr.mxu0 0.0
    %3975 = vmatpush2.msra.mxu0 0.0
    %3976 = vmatprep.subr.mxu0 0.0
    %3977 = vmatpush2.msra.mxu0 0.0
    %3978 = vmatprep.subr.mxu0 0.0
    %3979 = vmatpush2.msra.mxu0 0.0
    %3980 = vmatprep.subr.mxu0 0.0
    %3981 = vmatpush2.msra.mxu0 0.0
    %3982 = vmatprep.subr.mxu0 0.0
    %3983 = vmatpush2.msra.mxu0 0.0
    %3984 = vmatprep.subr.mxu0 0.0
    %3985 = vmatpush2.msra.mxu0 0.0
    %3986 = vmatprep.subr.mxu0 0.0
    %3987 = vmatpush2.msra.mxu0 0.0
    %3988 = vmatprep.subr.mxu0 0.0
    %3989 = vmatpush2.msra.mxu0 0.0
    %3990 = vmatprep.subr.mxu0 0.0
    %3991 = vmatpush2.msra.mxu0 0.0
    %3992 = vmatprep.subr.mxu0 0.0
    %3993 = vmatpush2.msra.mxu0 0.0
    %3994 = vmatprep.subr.mxu0 0.0
    %3995 = vmatpush2.msra.mxu0 0.0
    %3996 = vmatprep.subr.mxu0 0.0
    %3997 = vmatpush2.msra.mxu0 0.0
    %3998 = vmatprep.subr.mxu0 0.0
    %3999 = vmatpush2.msra.mxu0 0.0
    %4000 = vmatprep.subr.mxu0 0.0
    %4001 = vmatpush2.msra.mxu0 0.0
    %4002 = vmatprep.mubr.f32.mxu0 0.0
    %4003 = vmatmul.mubr.f32.gmra.mxu0 %v3936
    %v4004 = vpop.f32.mrf.mxu0
    %v4005 = vadd.f32 0.0, %v4004
    %v4006 = vpop.f32.mrf.mxu0
    %4007 = vdwg.mxu0
    %v4008 = vadd.f32 %v3925, %v4005
    %v4009 = vld [vmem:[%s12] sm:$0x1]
    %v4010 = vlaneseq
    %v4011 = vshrl.u32 %v4010, 7
    %v4012 = vsub.s32 0, %v4011
    %v4013 = vrot.slane %v4009, %v4012
    %v4014 = vadd.f32 %v4008, %v4013
    %v4015 = vmax.f32 %v4014, 0.0
    %v4016 = vld [vmem:[%s12 + $0x1] sm:$0x1]
    %v4017 = vlaneseq
    %v4018 = vshrl.u32 %v4017, 7
    %v4019 = vsub.s32 0, %v4018
    %v4020 = vrot.slane %v4016, %v4019
    %v4021 = vadd.f32 %v4015, %v4020
    %v4022 = vld [vmem:[%s13] sm:$0xff]
    %v4023 = vld [vmem:[%s13 + $0x8] sm:$0xff]
    %v4024 = vld [vmem:[%s14] sm:$0x1]
    %v4026 = vlaneseq
    %v4027 = vshrl.u32 %v4026, 7
    %v4028 = vsub.s32 0, %v4027
    %v4029 = vrot.slane %v4024, %v4028
    %v4032 = vsel %vm2885, %v4021, 0
    %4034 = vmatprep.subr.mxu0 0.0
    %4035 = vmatpush1.msra.mxu0 0.0
    %4036 = vmatprep.subr.mxu0 0.0
    %4037 = vmatpush1.msra.mxu0 0.0
    %4038 = vmatprep.subr.mxu0 0.0
    %4039 = vmatpush1.msra.mxu0 0.0
    %4040 = vmatprep.subr.mxu0 0.0
    %4041 = vmatpush1.msra.mxu0 0.0
    %4042 = vmatprep.subr.mxu0 0.0
    %4043 = vmatpush1.msra.mxu0 0.0
    %4044 = vmatprep.subr.mxu0 0.0
    %4045 = vmatpush1.msra.mxu0 0.0
    %4046 = vmatprep.subr.mxu0 0.0
    %4047 = vmatpush1.msra.mxu0 0.0
    %4048 = vmatprep.subr.mxu0 0.0
    %4049 = vmatpush1.msra.mxu0 0.0
    %4050 = vmatprep.subr.mxu0 0.0
    %4051 = vmatpush1.msra.mxu0 0.0
    %4052 = vmatprep.subr.mxu0 0.0
    %4053 = vmatpush1.msra.mxu0 0.0
    %4054 = vmatprep.subr.mxu0 0.0
    %4055 = vmatpush1.msra.mxu0 0.0
    %4056 = vmatprep.subr.mxu0 0.0
    %4057 = vmatpush1.msra.mxu0 0.0
    %4058 = vmatprep.subr.mxu0 0.0
    %4059 = vmatpush1.msra.mxu0 0.0
    %4060 = vmatprep.subr.mxu0 0.0
    %4061 = vmatpush1.msra.mxu0 0.0
    %4062 = vmatprep.subr.mxu0 0.0
    %4063 = vmatpush1.msra.mxu0 %v4023
    %4064 = vmatprep.subr.mxu0 0.0
    %4065 = vmatpush1.msra.mxu0 %v4022
    %4066 = vmatprep.subr.mxu0 0.0
    %4067 = vmatpush2.msra.mxu0 0.0
    %4068 = vmatprep.subr.mxu0 0.0
    %4069 = vmatpush2.msra.mxu0 0.0
    %4070 = vmatprep.subr.mxu0 0.0
    %4071 = vmatpush2.msra.mxu0 0.0
    %4072 = vmatprep.subr.mxu0 0.0
    %4073 = vmatpush2.msra.mxu0 0.0
    %4074 = vmatprep.subr.mxu0 0.0
    %4075 = vmatpush2.msra.mxu0 0.0
    %4076 = vmatprep.subr.mxu0 0.0
    %4077 = vmatpush2.msra.mxu0 0.0
    %4078 = vmatprep.subr.mxu0 0.0
    %4079 = vmatpush2.msra.mxu0 0.0
    %4080 = vmatprep.subr.mxu0 0.0
    %4081 = vmatpush2.msra.mxu0 0.0
    %4082 = vmatprep.subr.mxu0 0.0
    %4083 = vmatpush2.msra.mxu0 0.0
    %4084 = vmatprep.subr.mxu0 0.0
    %4085 = vmatpush2.msra.mxu0 0.0
    %4086 = vmatprep.subr.mxu0 0.0
    %4087 = vmatpush2.msra.mxu0 0.0
    %4088 = vmatprep.subr.mxu0 0.0
    %4089 = vmatpush2.msra.mxu0 0.0
    %4090 = vmatprep.subr.mxu0 0.0
    %4091 = vmatpush2.msra.mxu0 0.0
    %4092 = vmatprep.subr.mxu0 0.0
    %4093 = vmatpush2.msra.mxu0 0.0
    %4094 = vmatprep.subr.mxu0 0.0
    %4095 = vmatpush2.msra.mxu0 0.0
    %4096 = vmatprep.subr.mxu0 0.0
    %4097 = vmatpush2.msra.mxu0 0.0
    %4098 = vmatprep.mubr.f32.mxu0 0.0
    %4099 = vmatmul.mubr.f32.gmra.mxu0 %v4032
    %v4100 = vpop.f32.mrf.mxu0
    %v4101 = vadd.f32 %v4029, %v4100
    %v4102 = vpop.f32.mrf.mxu0
    %4103 = vdwg.mxu0
    %vm4104 = vcmask 80896
    %v4105 = vsel %vm4104, %v4101, -inf
    %4106 = vmax.xlane.f32.xlu0 %v4105
    %v4107 = vpop.xlane.xlu0 %4106
    %v4108 = vsub.f32 %v4101, %v4107
    %v4109 = vmul.f32 %v4108, 1.442695
    %v4110 = vpow.pop %v4109
    %v4111 = vsel %vm4104, %v4110, 0.0
    %4112 = vadd.xlane.f32.xlu0 %v4111
    %v4113 = vpop.xlane.xlu0 %4112
    %v4114 = vlog2.pop %v4113
    %v4115 = vmul.f32 %v4114, 0.6931472
    %v4116 = vsub.f32 %v4108, %v4115
    %4117 = vst.msk [vmem:[%s15] sm:$0xff] %vm4104, %v4116
    // Predicated region
    $region78: #{_forward.1} parent=1 // pred_check
      _
    $region79: #{_forward.1} parent=1 // pred_check_branch
      %4119 = sbr.rel (0) target = $region81
    $region80: #{_forward.1} parent=1 // pred_region
      _
    $region81: #{_forward.1} parent=1 // pred_fallthru
      _
    // Predicated region
    $region82: #{_forward.1} parent=1 // pred_check
      _
    $region83: #{_forward.1} parent=1 // pred_check_branch
      %4121 = sbr.rel (0) target = $region85
    $region84: #{_forward.1} parent=1 // pred_region
      _
    $region85: #{_forward.1} parent=1 // pred_fallthru
      _
    %4122 = vsyncpa [#allocation3], 1
    %4123 = vsyncpa [#allocation5], 1
    %4124 = vsyncpa [#allocation8], 1

</llo_original>
